<compile_context>
chip_gen: v5e
topology: v5e:2x2
jax: 0.10.0
libtpu: 0.0.40
codegen_flags: <defaults>
</compile_context>

<pallas_src>
import functools

import jax
import jax.numpy as jnp
from jax.experimental import pallas as pl
from jax.experimental.pallas import tpu as pltpu

LRELU_SLOPE = 0.1
TM_DEFAULT = 512                      # M-tile (lane dim)
_VMEM_LIMIT = 32 * 1024 * 1024        # explicit scoped-VMEM budget (v7x-safe)


def _round_up(x, m):
    return (x + m - 1) // m * m


def _cdiv(a, b):
    return -(-a // b)


# ----------------------------- Pallas kernels -----------------------------

def _res_id(bounds):
    """Resolution id of the current M-tile from static tile-start offsets."""
    i = pl.program_id(0)
    rid = jnp.int32(0)
    for b in bounds:                       # bounds: starts of segments 1..R-1
        rid = rid + (i >= b).astype(jnp.int32)
    return rid


def _mm_bias_act_kernel(w_ref, b_ref, x_ref, o_ref, *, slope, bounds):
    # w: (R, N, K) f32 resident, b: (R, N, 1) f32, x: (K, TM) bf16 -> o: (N, TM)
    rid = _res_id(bounds)
    w = w_ref[rid]                                          # (N, K) f32
    x = x_ref[...].astype(jnp.float32)                      # (K, TM) f32
    acc = jnp.dot(w, x, preferred_element_type=jnp.float32)
    acc = acc + b_ref[rid]                                  # broadcast (N,1)
    if slope is not None:
        acc = jnp.where(acc >= 0.0, acc, acc * slope)
    o_ref[...] = acc.astype(o_ref.dtype)


def _stft_mag_kernel(basis_ref, f_ref, o_ref, *, nb, bounds):
    # basis: (R, 2*NB, NF) f32 (rows [0,nbins)=cos, [NB,NB+nbins)=-sin),
    # f: (NF, TM) f32 -> o: (NB, TM) f32
    rid = _res_id(bounds)
    basis = basis_ref[rid]                                  # (2*NB, NF)
    acc = jnp.dot(basis, f_ref[...], preferred_element_type=jnp.float32)
    re = acc[:nb]
    im = acc[nb:]
    o_ref[...] = jnp.sqrt(re * re + im * im)


# ------------------------- batched pallas wrappers -------------------------

def _segment_layout(m_list, tm):
    n_tiles = [_cdiv(m, tm) for m in m_list]
    starts, acc = [], 0
    for n in n_tiles:
        starts.append(acc)
        acc += n
    return n_tiles, starts, acc


def batched_matmul_bias_act(slabs, weights, biases, *, slope, out_dtype,
                            tm=TM_DEFAULT):
    """One fused conv matmul for ALL resolutions of a layer.

    slabs:   list of (K, M_r) im2col slabs (any float dtype; stored bf16)
    weights: list of (N, K) f32
    biases:  list of (N,) f32
    returns: list of (N, M_r) arrays of dtype out_dtype
    """
    R = len(slabs)
    K = slabs[0].shape[0]
    N = weights[0].shape[0]
    assert all(s.shape[0] == K for s in slabs)
    assert all(w.shape == (N, K) for w in weights)

    K_pad = _round_up(K, 16)
    N_pad = max(_round_up(N, 8), 8)
    m_list = [int(s.shape[1]) for s in slabs]
    tm = min(tm, _round_up(max(m_list), 128))
    n_tiles, starts, total_tiles = _segment_layout(m_list, tm)

    slab_parts = [
        jnp.pad(s, ((0, K_pad - K), (0, n * tm - m))).astype(jnp.bfloat16)
        for s, m, n in zip(slabs, m_list, n_tiles)
    ]
    x_all = jnp.concatenate(slab_parts, axis=1)             # (K_pad, tiles*tm)
    w_stack = jnp.stack(
        [jnp.pad(w, ((0, N_pad - N), (0, K_pad - K))) for w in weights]
    ).astype(jnp.float32)                                   # (R, N_pad, K_pad)
    b_stack = jnp.stack(
        [jnp.pad(b, (0, N_pad - N)) for b in biases]
    ).astype(jnp.float32).reshape(R, N_pad, 1)

    kernel = functools.partial(_mm_bias_act_kernel, slope=slope,
                               bounds=tuple(starts[1:]))
    out = pl.pallas_call(
        kernel,
        grid=(total_tiles,),
        in_specs=[
            pl.BlockSpec((R, N_pad, K_pad), lambda i: (0, 0, 0)),
            pl.BlockSpec((R, N_pad, 1), lambda i: (0, 0, 0)),
            pl.BlockSpec((K_pad, tm), lambda i: (0, i)),
        ],
        out_specs=pl.BlockSpec((N_pad, tm), lambda i: (0, i)),
        out_shape=jax.ShapeDtypeStruct((N_pad, total_tiles * tm), out_dtype),
        compiler_params=pltpu.CompilerParams(
            dimension_semantics=("parallel",),
            vmem_limit_bytes=_VMEM_LIMIT),
    )(w_stack, b_stack, x_all)

    return [out[:N, s * tm: s * tm + m] for s, m in zip(starts, m_list)]


def batched_stft_mag(frames_list, basis_stack, nb_pad, nbins_list,
                     tm=TM_DEFAULT):
    """frames_list: list of (NF, M_r) f32 (already zero-padded along NF).
    basis_stack: (R, 2*nb_pad, NF) f32.  Returns list of (nbins_r, M_r) f32."""
    R, two_nb, NF = basis_stack.shape
    m_list = [int(f.shape[1]) for f in frames_list]
    tm = min(tm, _round_up(max(m_list), 128))
    n_tiles, starts, total_tiles = _segment_layout(m_list, tm)

    parts = [jnp.pad(f, ((0, 0), (0, n * tm - m))).astype(jnp.float32)
             for f, m, n in zip(frames_list, m_list, n_tiles)]
    f_all = jnp.concatenate(parts, axis=1)                  # (NF, tiles*tm)

    kernel = functools.partial(_stft_mag_kernel, nb=nb_pad,
                               bounds=tuple(starts[1:]))
    out = pl.pallas_call(
        kernel,
        grid=(total_tiles,),
        in_specs=[
            pl.BlockSpec((R, two_nb, NF), lambda i: (0, 0, 0)),
            pl.BlockSpec((NF, tm), lambda i: (0, i)),
        ],
        out_specs=pl.BlockSpec((nb_pad, tm), lambda i: (0, i)),
        out_shape=jax.ShapeDtypeStruct((nb_pad, total_tiles * tm),
                                       jnp.float32),
        compiler_params=pltpu.CompilerParams(
            dimension_semantics=("parallel",),
            vmem_limit_bytes=_VMEM_LIMIT),
    )(basis_stack, f_all)

    return [out[:nb, s * tm: s * tm + m]
            for nb, s, m in zip(nbins_list, starts, m_list)]


# ------------------------------- JAX glue ---------------------------------

def dft_bases(n_fft):
    """Real (onesided) DFT bases, rows = bins: (cos, -sin), each (nbins, n_fft)."""
    nbins = n_fft // 2 + 1
    n = jnp.arange(n_fft, dtype=jnp.float32)[None, :]
    f = jnp.arange(nbins, dtype=jnp.float32)[:, None]
    ang = 2.0 * jnp.pi * f * n / float(n_fft)
    return jnp.cos(ang), -jnp.sin(ang)


def im2col_slab(x, KH, KW, stride, padding):
    """x: (Cin, B, H, W) -> slab (KH*KW*Cin, B*Ho*Wo) bf16 and (B, Ho, Wo).
    Hop-strided static slices only (no gather); fused under jit by XLA."""
    Cin, B, H, W = x.shape
    sh, sw = stride
    ph, pw = padding
    xp = jnp.pad(x, ((0, 0), (0, 0), (ph, ph), (pw, pw)))
    Ho = (H + 2 * ph - KH) // sh + 1
    Wo = (W + 2 * pw - KW) // sw + 1
    taps = [xp[:, :, kh:kh + (Ho - 1) * sh + 1:sh,
                    kw:kw + (Wo - 1) * sw + 1:sw]
            for kh in range(KH) for kw in range(KW)]
    # (KH*KW, Cin, B, Ho, Wo) -> (K, M); K order (kh, kw, cin) matches
    # w.reshape(KH*KW*Cin, Cout).
    slab = jnp.stack(taps, axis=0).reshape(KH * KW * Cin, B * Ho * Wo)
    return slab.astype(jnp.bfloat16), (B, Ho, Wo)


# --------------------------- Discriminator logic ---------------------------

def build_mrd_forward(resolutions):
    R = len(resolutions)
    nffts = [r[0] for r in resolutions]
    hops = [r[1] for r in resolutions]
    for n_fft, _, win in resolutions:
        assert win == n_fft, "cfg uses win_length == n_fft (rectangular window)"
    nbins_list = [n // 2 + 1 for n in nffts]
    NF = max(nffts)                       # common (zero-padded) contraction dim
    NB = _round_up(max(nbins_list), 8)    # common padded bin count

    # Hoisted stacked [cos; -sin] bases (f32, resident): (R, 2*NB, NF).
    stacked = []
    for n_fft, nbins in zip(nffts, nbins_list):
        cos, msin = dft_bases(n_fft)
        basis = jnp.zeros((2 * NB, NF), jnp.float32)
        basis = basis.at[:nbins, :n_fft].set(cos)
        basis = basis.at[NB:NB + nbins, :n_fft].set(msin)
        stacked.append(basis)
    basis_stack = jnp.stack(stacked)

    def forward(params_list, y, y_hat):
        B = y.shape[0]
        x = jnp.concatenate([y, y_hat], axis=0)             # (2B, 1, L)
        xs = x[:, 0, :]
        B2 = 2 * B

        # --- framing (strided slices) + one batched STFT magnitude call ---
        frames_list, Ts = [], []
        for n_fft, hop in zip(nffts, hops):
            pad = (n_fft - hop) // 2
            xp = jnp.pad(xs, ((0, 0), (pad, pad)), mode="reflect")
            Lp = xp.shape[1]
            T = 1 + (Lp - n_fft) // hop
            cols = [xp[:, n:n + (T - 1) * hop + 1:hop] for n in range(n_fft)]
            fr = jnp.stack(cols, axis=0).reshape(n_fft, B2 * T)  # (n_fft, M)
            frames_list.append(jnp.pad(fr, ((0, NF - n_fft), (0, 0))))
            Ts.append(T)
        mags = batched_stft_mag(frames_list, basis_stack, NB, nbins_list)

        # activations kept in (Cin, B2, H=F, W=T) layout between layers
        h_list = []
        for mag, T, nbins in zip(mags, Ts, nbins_list):
            m = mag.reshape(nbins, B2, T)
            h_list.append(jnp.transpose(m, (1, 0, 2))[None])     # (1,B2,F,T)

        fmap_rs = [[] for _ in range(R)]
        fmap_gs = [[] for _ in range(R)]

        n_layers = len(params_list[0]["convs"])
        for li in range(n_layers):
            stride = (1, 2) if li in (1, 2, 3) else (1, 1)
            slabs, shapes, w_list, b_list = [], [], [], []
            for r in range(R):
                w, b = params_list[r]["convs"][li]
                KH, KW = int(w.shape[0]), int(w.shape[1])
                slab, oshape = im2col_slab(h_list[r], KH, KW, stride,
                                           (KH // 2, KW // 2))
                slabs.append(slab)
                shapes.append(oshape)
                w_list.append(w.reshape(-1, w.shape[-1]).T)      # (Cout, K)
                b_list.append(b)
            # bf16 handoff between layers; fused bias + leaky_relu epilogue
            outs = batched_matmul_bias_act(slabs, w_list, b_list,
                                           slope=LRELU_SLOPE,
                                           out_dtype=jnp.bfloat16)
            new_h = []
            for r, (o, (_, Ho, Wo)) in enumerate(zip(outs, shapes)):
                Cout = w_list[r].shape[0]
                hcb = o.reshape(Cout, B2, Ho, Wo)
                new_h.append(hcb)
                # slice y / y_hat BEFORE the NCHW transpose
                fmap_rs[r].append(jnp.transpose(hcb[:, :B], (1, 0, 2, 3)))
                fmap_gs[r].append(jnp.transpose(hcb[:, B:], (1, 0, 2, 3)))
            h_list = new_h

        # conv_post (no activation), f32 output
        slabs, shapes, w_list, b_list = [], [], [], []
        for r in range(R):
            w, b = params_list[r]["conv_post"]
            slab, oshape = im2col_slab(h_list[r], 3, 3, (1, 1), (1, 1))
            slabs.append(slab)
            shapes.append(oshape)
            w_list.append(w.reshape(-1, w.shape[-1]).T)
            b_list.append(b)
        outs = batched_matmul_bias_act(slabs, w_list, b_list, slope=None,
                                       out_dtype=jnp.float32)

        y_d_rs, y_d_gs = [], []
        for r, (o, (_, Ho, Wo)) in enumerate(zip(outs, shapes)):
            hcb = o.reshape(1, B2, Ho, Wo)
            post_r = jnp.transpose(hcb[:, :B], (1, 0, 2, 3))     # (B,1,F',T')
            post_g = jnp.transpose(hcb[:, B:], (1, 0, 2, 3))
            fmap_rs[r].append(post_r)
            fmap_gs[r].append(post_g)
            y_d_rs.append(post_r.reshape(B, -1))                 # flatten(1,-1)
            y_d_gs.append(post_g.reshape(B, -1))
        return y_d_rs, y_d_gs, fmap_rs, fmap_gs

    return jax.jit(forward)


def init_discriminator_params(key, channels):
    # Conv2d weights stored as (KH, KW, Cin, Cout); bias (Cout,).
    # TODO(synk): when loading real PyTorch weights (Cout, Cin, KH, KW),
    # permute to (KH, KW, Cin, Cout) at load time to match the tap order.
    shapes = [
        (3, 9, 1, channels),
        (3, 9, channels, channels),
        (3, 9, channels, channels),
        (3, 9, channels, channels),
        (3, 3, channels, channels),
    ]
    convs = []
    for s in shapes:
        key, kw_, kb_ = jax.random.split(key, 3)
        w = 0.1 * jax.random.normal(kw_, s, dtype=jnp.float32)
        b = 0.1 * jax.random.normal(kb_, (s[-1],), dtype=jnp.float32)
        convs.append((w, b))
    key, kw_, kb_ = jax.random.split(key, 3)
    wp = 0.1 * jax.random.normal(kw_, (3, 3, channels, 1), dtype=jnp.float32)
    bp = 0.1 * jax.random.normal(kb_, (1,), dtype=jnp.float32)
    return {"convs": convs, "conv_post": (wp, bp)}


if __name__ == "__main__":
    # Synthetic cfg: resolutions (n_fft, hop, win), discriminator_channel_mult = 0.25
    resolutions = [[32, 8, 32], [64, 16, 64], [128, 32, 128]]
    channels = int(32 * 0.25)   # = 8

    key = jax.random.PRNGKey(0)
    k_y, k_g, k_p = jax.random.split(key, 3)
    B, L = 2, 128
    y = jax.random.normal(k_y, (B, 1, L), dtype=jnp.float32)
    y_hat = jax.random.normal(k_g, (B, 1, L), dtype=jnp.float32)

    params_list = [
        init_discriminator_params(jax.random.fold_in(k_p, i), channels)
        for i in range(len(resolutions))
    ]

    mrd_forward = build_mrd_forward(resolutions)
    outs = mrd_forward(params_list, y, y_hat)
    jax.block_until_ready(outs)
    print("KERNEL_OK")
</pallas_src>

<mosaic_0001>
module attributes {stable_mosaic.version = 11 : i64} {
  func.func @_stft_mag_kernel(%arg0: i32, %arg1: memref<3x144x128xf32, #tpu.memory_space<vmem>>, %arg2: memref<128x128xf32, #tpu.memory_space<vmem>>, %arg3: memref<72x128xf32, #tpu.memory_space<vmem>>) attributes {dimension_semantics = [#tpu.dimension_semantics<parallel>], iteration_bounds = array<i64: 3>, scalar_prefetch = 0 : i64, scratch_operands = 0 : i64, tpu.core_type = #tpu.core_type<tc>, window_params = [{pipeline_mode = #tpu.pipeline_mode<synchronous>, transform_indices = @transform_0, window_bounds = array<i64: 3, 144, 128>}, {transform_indices = @transform_1, window_bounds = array<i64: 128, 128>}, {transform_indices = @transform_2, window_bounds = array<i64: 72, 128>}]} {
    %c1_i32 = arith.constant 1 : i32
    %0 = arith.cmpi sge, %arg0, %c1_i32 : i32
    %1 = arith.extui %0 : i1 to i32
    %c0_i32 = arith.constant 0 : i32
    %2 = arith.addi %c0_i32, %1 : i32
    %c2_i32 = arith.constant 2 : i32
    %3 = arith.cmpi sge, %arg0, %c2_i32 : i32
    %4 = arith.extui %3 : i1 to i32
    %5 = arith.addi %2, %4 : i32
    %6 = arith.index_cast %5 : i32 to index
    %c0 = arith.constant 0 : index
    %c0_0 = arith.constant 0 : index
    %7 = vector.load %arg1[%6, %c0, %c0_0] : memref<3x144x128xf32, #tpu.memory_space<vmem>>, vector<1x144x128xf32>
    %8 = vector.shape_cast %7 : vector<1x144x128xf32> to vector<144x128xf32>
    %c0_1 = arith.constant 0 : index
    %c0_2 = arith.constant 0 : index
    %9 = vector.load %arg2[%c0_1, %c0_2] : memref<128x128xf32, #tpu.memory_space<vmem>>, vector<128x128xf32>
    %cst = arith.constant dense<0.000000e+00> : vector<144x128xf32>
    %10 = tpu.matmul %8, %9, %cst {dimension_numbers = #tpu.dot_dimension_numbers<[1], [0], [0], [1], [0, 0, 1, 1], [], []>} : vector<144x128xf32>, vector<128x128xf32>, vector<144x128xf32> -> vector<144x128xf32>
    %11 = vector.extract_strided_slice %10 {offsets = [0, 0], sizes = [72, 128], strides = [1, 1]} : vector<144x128xf32> to vector<72x128xf32>
    %12 = vector.extract_strided_slice %10 {offsets = [72, 0], sizes = [72, 128], strides = [1, 1]} : vector<144x128xf32> to vector<72x128xf32>
    %13 = arith.mulf %11, %11 : vector<72x128xf32>
    %14 = arith.mulf %12, %12 : vector<72x128xf32>
    %15 = arith.addf %13, %14 : vector<72x128xf32>
    %16 = math.sqrt %15 : vector<72x128xf32>
    %c0_3 = arith.constant 0 : index
    %c0_4 = arith.constant 0 : index
    %17 = vector.load %arg3[%c0_3, %c0_4] : memref<72x128xf32, #tpu.memory_space<vmem>>, vector<72x128xf32>
    tpu.vector_store %arg3[%c0_3, %c0_4], %16 {strides = array<i32>} : memref<72x128xf32, #tpu.memory_space<vmem>>, vector<72x128xf32>,
    return
  }
  func.func @transform_0(%arg0: i32) -> (i32, i32, i32) {
    %c0_i32 = arith.constant 0 : i32
    %c0_i32_0 = arith.constant 0 : i32
    %c0_i32_1 = arith.constant 0 : i32
    %c0_i32_2 = arith.constant 0 : i32
    return %c0_i32, %c0_i32_0, %c0_i32_1 : i32, i32, i32
  }
  func.func @transform_1(%arg0: i32) -> (i32, i32) {
    %c0_i32 = arith.constant 0 : i32
    %c0_i32_0 = arith.constant 0 : i32
    return %c0_i32, %arg0 : i32, i32
  }
  func.func @transform_2(%arg0: i32) -> (i32, i32) {
    %c0_i32 = arith.constant 0 : i32
    %c0_i32_0 = arith.constant 0 : i32
    return %c0_i32, %arg0 : i32, i32
  }
}

module attributes {stable_mosaic.version = 11 : i64} {
  func.func @_mm_bias_act_kernel(%arg0: i32, %arg1: memref<3x8x32xf32, #tpu.memory_space<vmem>>, %arg2: memref<3x8x1xf32, #tpu.memory_space<vmem>>, %arg3: memref<32x512xbf16, #tpu.memory_space<vmem>>, %arg4: memref<8x512xbf16, #tpu.memory_space<vmem>>) attributes {dimension_semantics = [#tpu.dimension_semantics<parallel>], iteration_bounds = array<i64: 9>, scalar_prefetch = 0 : i64, scratch_operands = 0 : i64, tpu.core_type = #tpu.core_type<tc>, window_params = [{pipeline_mode = #tpu.pipeline_mode<synchronous>, transform_indices = @transform_0, window_bounds = array<i64: 3, 8, 32>}, {pipeline_mode = #tpu.pipeline_mode<synchronous>, transform_indices = @transform_1, window_bounds = array<i64: 3, 8, 1>}, {transform_indices = @transform_2, window_bounds = array<i64: 32, 512>}, {transform_indices = @transform_3, window_bounds = array<i64: 8, 512>}]} {
    %c3_i32 = arith.constant 3 : i32
    %0 = arith.cmpi sge, %arg0, %c3_i32 : i32
    %1 = arith.extui %0 : i1 to i32
    %c0_i32 = arith.constant 0 : i32
    %2 = arith.addi %c0_i32, %1 : i32
    %c6_i32 = arith.constant 6 : i32
    %3 = arith.cmpi sge, %arg0, %c6_i32 : i32
    %4 = arith.extui %3 : i1 to i32
    %5 = arith.addi %2, %4 : i32
    %6 = arith.index_cast %5 : i32 to index
    %c0 = arith.constant 0 : index
    %c0_0 = arith.constant 0 : index
    %7 = vector.load %arg1[%6, %c0, %c0_0] : memref<3x8x32xf32, #tpu.memory_space<vmem>>, vector<1x8x32xf32>
    %8 = vector.shape_cast %7 : vector<1x8x32xf32> to vector<8x32xf32>
    %c0_1 = arith.constant 0 : index
    %c0_2 = arith.constant 0 : index
    %9 = vector.load %arg3[%c0_1, %c0_2] : memref<32x512xbf16, #tpu.memory_space<vmem>>, vector<32x512xbf16>
    %10 = arith.extf %9 : vector<32x512xbf16> to vector<32x512xf32>
    %cst = arith.constant dense<0.000000e+00> : vector<8x512xf32>
    %11 = tpu.matmul %8, %10, %cst {dimension_numbers = #tpu.dot_dimension_numbers<[1], [0], [0], [1], [0, 0, 1, 1], [], []>} : vector<8x32xf32>, vector<32x512xf32>, vector<8x512xf32> -> vector<8x512xf32>
    %12 = arith.index_cast %5 : i32 to index
    %c0_3 = arith.constant 0 : index
    %c0_4 = arith.constant 0 : index
    %13 = vector.load %arg2[%12, %c0_3, %c0_4] : memref<3x8x1xf32, #tpu.memory_space<vmem>>, vector<1x8x1xf32>
    %14 = vector.shape_cast %13 : vector<1x8x1xf32> to vector<8x1xf32>
    %15 = vector.broadcast %14 : vector<8x1xf32> to vector<8x512xf32>
    %16 = arith.addf %11, %15 : vector<8x512xf32>
    %cst_5 = arith.constant 0.000000e+00 : f32
    %17 = vector.broadcast %cst_5 : f32 to vector<8x512xf32>
    %18 = arith.cmpf oge, %16, %17 : vector<8x512xf32>
    %cst_6 = arith.constant 1.000000e-01 : f32
    %19 = vector.broadcast %cst_6 : f32 to vector<8x512xf32>
    %20 = arith.mulf %16, %19 : vector<8x512xf32>
    %21 = arith.select %18, %16, %20 : vector<8x512xi1>, vector<8x512xf32>
    %22 = arith.truncf %21 : vector<8x512xf32> to vector<8x512xbf16>
    %c0_7 = arith.constant 0 : index
    %c0_8 = arith.constant 0 : index
    %23 = vector.load %arg4[%c0_7, %c0_8] : memref<8x512xbf16, #tpu.memory_space<vmem>>, vector<8x512xbf16>
    tpu.vector_store %arg4[%c0_7, %c0_8], %22 {strides = array<i32>} : memref<8x512xbf16, #tpu.memory_space<vmem>>, vector<8x512xbf16>,
    return
  }
  func.func @transform_0(%arg0: i32) -> (i32, i32, i32) {
    %c0_i32 = arith.constant 0 : i32
    %c0_i32_0 = arith.constant 0 : i32
    %c0_i32_1 = arith.constant 0 : i32
    %c0_i32_2 = arith.constant 0 : i32
    return %c0_i32, %c0_i32_0, %c0_i32_1 : i32, i32, i32
  }
  func.func @transform_1(%arg0: i32) -> (i32, i32, i32) {
    %c0_i32 = arith.constant 0 : i32
    %c0_i32_0 = arith.constant 0 : i32
    %c0_i32_1 = arith.constant 0 : i32
    %c0_i32_2 = arith.constant 0 : i32
    return %c0_i32, %c0_i32_0, %c0_i32_1 : i32, i32, i32
  }
  func.func @transform_2(%arg0: i32) -> (i32, i32) {
    %c0_i32 = arith.constant 0 : i32
    %c0_i32_0 = arith.constant 0 : i32
    return %c0_i32, %arg0 : i32, i32
  }
  func.func @transform_3(%arg0: i32) -> (i32, i32) {
    %c0_i32 = arith.constant 0 : i32
    %c0_i32_0 = arith.constant 0 : i32
    return %c0_i32, %arg0 : i32, i32
  }
}

module attributes {stable_mosaic.version = 11 : i64} {
  func.func @_mm_bias_act_kernel(%arg0: i32, %arg1: memref<3x8x224xf32, #tpu.memory_space<vmem>>, %arg2: memref<3x8x1xf32, #tpu.memory_space<vmem>>, %arg3: memref<224x512xbf16, #tpu.memory_space<vmem>>, %arg4: memref<8x512xbf16, #tpu.memory_space<vmem>>) attributes {dimension_semantics = [#tpu.dimension_semantics<parallel>], iteration_bounds = array<i64: 6>, scalar_prefetch = 0 : i64, scratch_operands = 0 : i64, tpu.core_type = #tpu.core_type<tc>, window_params = [{pipeline_mode = #tpu.pipeline_mode<synchronous>, transform_indices = @transform_0, window_bounds = array<i64: 3, 8, 224>}, {pipeline_mode = #tpu.pipeline_mode<synchronous>, transform_indices = @transform_1, window_bounds = array<i64: 3, 8, 1>}, {transform_indices = @transform_2, window_bounds = array<i64: 224, 512>}, {transform_indices = @transform_3, window_bounds = array<i64: 8, 512>}]} {
    %c2_i32 = arith.constant 2 : i32
    %0 = arith.cmpi sge, %arg0, %c2_i32 : i32
    %1 = arith.extui %0 : i1 to i32
    %c0_i32 = arith.constant 0 : i32
    %2 = arith.addi %c0_i32, %1 : i32
    %c4_i32 = arith.constant 4 : i32
    %3 = arith.cmpi sge, %arg0, %c4_i32 : i32
    %4 = arith.extui %3 : i1 to i32
    %5 = arith.addi %2, %4 : i32
    %6 = arith.index_cast %5 : i32 to index
    %c0 = arith.constant 0 : index
    %c0_0 = arith.constant 0 : index
    %7 = vector.load %arg1[%6, %c0, %c0_0] : memref<3x8x224xf32, #tpu.memory_space<vmem>>, vector<1x8x224xf32>
    %8 = vector.shape_cast %7 : vector<1x8x224xf32> to vector<8x224xf32>
    %c0_1 = arith.constant 0 : index
    %c0_2 = arith.constant 0 : index
    %9 = vector.load %arg3[%c0_1, %c0_2] : memref<224x512xbf16, #tpu.memory_space<vmem>>, vector<224x512xbf16>
    %10 = arith.extf %9 : vector<224x512xbf16> to vector<224x512xf32>
    %cst = arith.constant dense<0.000000e+00> : vector<8x512xf32>
    %11 = tpu.matmul %8, %10, %cst {dimension_numbers = #tpu.dot_dimension_numbers<[1], [0], [0], [1], [0, 0, 1, 1], [], []>} : vector<8x224xf32>, vector<224x512xf32>, vector<8x512xf32> -> vector<8x512xf32>
    %12 = arith.index_cast %5 : i32 to index
    %c0_3 = arith.constant 0 : index
    %c0_4 = arith.constant 0 : index
    %13 = vector.load %arg2[%12, %c0_3, %c0_4] : memref<3x8x1xf32, #tpu.memory_space<vmem>>, vector<1x8x1xf32>
    %14 = vector.shape_cast %13 : vector<1x8x1xf32> to vector<8x1xf32>
    %15 = vector.broadcast %14 : vector<8x1xf32> to vector<8x512xf32>
    %16 = arith.addf %11, %15 : vector<8x512xf32>
    %cst_5 = arith.constant 0.000000e+00 : f32
    %17 = vector.broadcast %cst_5 : f32 to vector<8x512xf32>
    %18 = arith.cmpf oge, %16, %17 : vector<8x512xf32>
    %cst_6 = arith.constant 1.000000e-01 : f32
    %19 = vector.broadcast %cst_6 : f32 to vector<8x512xf32>
    %20 = arith.mulf %16, %19 : vector<8x512xf32>
    %21 = arith.select %18, %16, %20 : vector<8x512xi1>, vector<8x512xf32>
    %22 = arith.truncf %21 : vector<8x512xf32> to vector<8x512xbf16>
    %c0_7 = arith.constant 0 : index
    %c0_8 = arith.constant 0 : index
    %23 = vector.load %arg4[%c0_7, %c0_8] : memref<8x512xbf16, #tpu.memory_space<vmem>>, vector<8x512xbf16>
    tpu.vector_store %arg4[%c0_7, %c0_8], %22 {strides = array<i32>} : memref<8x512xbf16, #tpu.memory_space<vmem>>, vector<8x512xbf16>,
    return
  }
  func.func @transform_0(%arg0: i32) -> (i32, i32, i32) {
    %c0_i32 = arith.constant 0 : i32
    %c0_i32_0 = arith.constant 0 : i32
    %c0_i32_1 = arith.constant 0 : i32
    %c0_i32_2 = arith.constant 0 : i32
    return %c0_i32, %c0_i32_0, %c0_i32_1 : i32, i32, i32
  }
  func.func @transform_1(%arg0: i32) -> (i32, i32, i32) {
    %c0_i32 = arith.constant 0 : i32
    %c0_i32_0 = arith.constant 0 : i32
    %c0_i32_1 = arith.constant 0 : i32
    %c0_i32_2 = arith.constant 0 : i32
    return %c0_i32, %c0_i32_0, %c0_i32_1 : i32, i32, i32
  }
  func.func @transform_2(%arg0: i32) -> (i32, i32) {
    %c0_i32 = arith.constant 0 : i32
    %c0_i32_0 = arith.constant 0 : i32
    return %c0_i32, %arg0 : i32, i32
  }
  func.func @transform_3(%arg0: i32) -> (i32, i32) {
    %c0_i32 = arith.constant 0 : i32
    %c0_i32_0 = arith.constant 0 : i32
    return %c0_i32, %arg0 : i32, i32
  }
}

module attributes {stable_mosaic.version = 11 : i64} {
  func.func @_mm_bias_act_kernel(%arg0: i32, %arg1: memref<3x8x224xf32, #tpu.memory_space<vmem>>, %arg2: memref<3x8x1xf32, #tpu.memory_space<vmem>>, %arg3: memref<224x384xbf16, #tpu.memory_space<vmem>>, %arg4: memref<8x384xbf16, #tpu.memory_space<vmem>>) attributes {dimension_semantics = [#tpu.dimension_semantics<parallel>], iteration_bounds = array<i64: 3>, scalar_prefetch = 0 : i64, scratch_operands = 0 : i64, tpu.core_type = #tpu.core_type<tc>, window_params = [{pipeline_mode = #tpu.pipeline_mode<synchronous>, transform_indices = @transform_0, window_bounds = array<i64: 3, 8, 224>}, {pipeline_mode = #tpu.pipeline_mode<synchronous>, transform_indices = @transform_1, window_bounds = array<i64: 3, 8, 1>}, {transform_indices = @transform_2, window_bounds = array<i64: 224, 384>}, {transform_indices = @transform_3, window_bounds = array<i64: 8, 384>}]} {
    %c1_i32 = arith.constant 1 : i32
    %0 = arith.cmpi sge, %arg0, %c1_i32 : i32
    %1 = arith.extui %0 : i1 to i32
    %c0_i32 = arith.constant 0 : i32
    %2 = arith.addi %c0_i32, %1 : i32
    %c2_i32 = arith.constant 2 : i32
    %3 = arith.cmpi sge, %arg0, %c2_i32 : i32
    %4 = arith.extui %3 : i1 to i32
    %5 = arith.addi %2, %4 : i32
    %6 = arith.index_cast %5 : i32 to index
    %c0 = arith.constant 0 : index
    %c0_0 = arith.constant 0 : index
    %7 = vector.load %arg1[%6, %c0, %c0_0] : memref<3x8x224xf32, #tpu.memory_space<vmem>>, vector<1x8x224xf32>
    %8 = vector.shape_cast %7 : vector<1x8x224xf32> to vector<8x224xf32>
    %c0_1 = arith.constant 0 : index
    %c0_2 = arith.constant 0 : index
    %9 = vector.load %arg3[%c0_1, %c0_2] : memref<224x384xbf16, #tpu.memory_space<vmem>>, vector<224x384xbf16>
    %10 = arith.extf %9 : vector<224x384xbf16> to vector<224x384xf32>
    %cst = arith.constant dense<0.000000e+00> : vector<8x384xf32>
    %11 = tpu.matmul %8, %10, %cst {dimension_numbers = #tpu.dot_dimension_numbers<[1], [0], [0], [1], [0, 0, 1, 1], [], []>} : vector<8x224xf32>, vector<224x384xf32>, vector<8x384xf32> -> vector<8x384xf32>
    %12 = arith.index_cast %5 : i32 to index
    %c0_3 = arith.constant 0 : index
    %c0_4 = arith.constant 0 : index
    %13 = vector.load %arg2[%12, %c0_3, %c0_4] : memref<3x8x1xf32, #tpu.memory_space<vmem>>, vector<1x8x1xf32>
    %14 = vector.shape_cast %13 : vector<1x8x1xf32> to vector<8x1xf32>
    %15 = vector.broadcast %14 : vector<8x1xf32> to vector<8x384xf32>
    %16 = arith.addf %11, %15 : vector<8x384xf32>
    %cst_5 = arith.constant 0.000000e+00 : f32
    %17 = vector.broadcast %cst_5 : f32 to vector<8x384xf32>
    %18 = arith.cmpf oge, %16, %17 : vector<8x384xf32>
    %cst_6 = arith.constant 1.000000e-01 : f32
    %19 = vector.broadcast %cst_6 : f32 to vector<8x384xf32>
    %20 = arith.mulf %16, %19 : vector<8x384xf32>
    %21 = arith.select %18, %16, %20 : vector<8x384xi1>, vector<8x384xf32>
    %22 = arith.truncf %21 : vector<8x384xf32> to vector<8x384xbf16>
    %c0_7 = arith.constant 0 : index
    %c0_8 = arith.constant 0 : index
    %23 = vector.load %arg4[%c0_7, %c0_8] : memref<8x384xbf16, #tpu.memory_space<vmem>>, vector<8x384xbf16>
    tpu.vector_store %arg4[%c0_7, %c0_8], %22 {strides = array<i32>} : memref<8x384xbf16, #tpu.memory_space<vmem>>, vector<8x384xbf16>,
    return
  }
  func.func @transform_0(%arg0: i32) -> (i32, i32, i32) {
    %c0_i32 = arith.constant 0 : i32
    %c0_i32_0 = arith.constant 0 : i32
    %c0_i32_1 = arith.constant 0 : i32
    %c0_i32_2 = arith.constant 0 : i32
    return %c0_i32, %c0_i32_0, %c0_i32_1 : i32, i32, i32
  }
  func.func @transform_1(%arg0: i32) -> (i32, i32, i32) {
    %c0_i32 = arith.constant 0 : i32
    %c0_i32_0 = arith.constant 0 : i32
    %c0_i32_1 = arith.constant 0 : i32
    %c0_i32_2 = arith.constant 0 : i32
    return %c0_i32, %c0_i32_0, %c0_i32_1 : i32, i32, i32
  }
  func.func @transform_2(%arg0: i32) -> (i32, i32) {
    %c0_i32 = arith.constant 0 : i32
    %c0_i32_0 = arith.constant 0 : i32
    return %c0_i32, %arg0 : i32, i32
  }
  func.func @transform_3(%arg0: i32) -> (i32, i32) {
    %c0_i32 = arith.constant 0 : i32
    %c0_i32_0 = arith.constant 0 : i32
    return %c0_i32, %arg0 : i32, i32
  }
}

module attributes {stable_mosaic.version = 11 : i64} {
  func.func @_mm_bias_act_kernel(%arg0: i32, %arg1: memref<3x8x80xf32, #tpu.memory_space<vmem>>, %arg2: memref<3x8x1xf32, #tpu.memory_space<vmem>>, %arg3: memref<80x384xbf16, #tpu.memory_space<vmem>>, %arg4: memref<8x384xbf16, #tpu.memory_space<vmem>>) attributes {dimension_semantics = [#tpu.dimension_semantics<parallel>], iteration_bounds = array<i64: 3>, scalar_prefetch = 0 : i64, scratch_operands = 0 : i64, tpu.core_type = #tpu.core_type<tc>, window_params = [{pipeline_mode = #tpu.pipeline_mode<synchronous>, transform_indices = @transform_0, window_bounds = array<i64: 3, 8, 80>}, {pipeline_mode = #tpu.pipeline_mode<synchronous>, transform_indices = @transform_1, window_bounds = array<i64: 3, 8, 1>}, {transform_indices = @transform_2, window_bounds = array<i64: 80, 384>}, {transform_indices = @transform_3, window_bounds = array<i64: 8, 384>}]} {
    %c1_i32 = arith.constant 1 : i32
    %0 = arith.cmpi sge, %arg0, %c1_i32 : i32
    %1 = arith.extui %0 : i1 to i32
    %c0_i32 = arith.constant 0 : i32
    %2 = arith.addi %c0_i32, %1 : i32
    %c2_i32 = arith.constant 2 : i32
    %3 = arith.cmpi sge, %arg0, %c2_i32 : i32
    %4 = arith.extui %3 : i1 to i32
    %5 = arith.addi %2, %4 : i32
    %6 = arith.index_cast %5 : i32 to index
    %c0 = arith.constant 0 : index
    %c0_0 = arith.constant 0 : index
    %7 = vector.load %arg1[%6, %c0, %c0_0] : memref<3x8x80xf32, #tpu.memory_space<vmem>>, vector<1x8x80xf32>
    %8 = vector.shape_cast %7 : vector<1x8x80xf32> to vector<8x80xf32>
    %c0_1 = arith.constant 0 : index
    %c0_2 = arith.constant 0 : index
    %9 = vector.load %arg3[%c0_1, %c0_2] : memref<80x384xbf16, #tpu.memory_space<vmem>>, vector<80x384xbf16>
    %10 = arith.extf %9 : vector<80x384xbf16> to vector<80x384xf32>
    %cst = arith.constant dense<0.000000e+00> : vector<8x384xf32>
    %11 = tpu.matmul %8, %10, %cst {dimension_numbers = #tpu.dot_dimension_numbers<[1], [0], [0], [1], [0, 0, 1, 1], [], []>} : vector<8x80xf32>, vector<80x384xf32>, vector<8x384xf32> -> vector<8x384xf32>
    %12 = arith.index_cast %5 : i32 to index
    %c0_3 = arith.constant 0 : index
    %c0_4 = arith.constant 0 : index
    %13 = vector.load %arg2[%12, %c0_3, %c0_4] : memref<3x8x1xf32, #tpu.memory_space<vmem>>, vector<1x8x1xf32>
    %14 = vector.shape_cast %13 : vector<1x8x1xf32> to vector<8x1xf32>
    %15 = vector.broadcast %14 : vector<8x1xf32> to vector<8x384xf32>
    %16 = arith.addf %11, %15 : vector<8x384xf32>
    %cst_5 = arith.constant 0.000000e+00 : f32
    %17 = vector.broadcast %cst_5 : f32 to vector<8x384xf32>
    %18 = arith.cmpf oge, %16, %17 : vector<8x384xf32>
    %cst_6 = arith.constant 1.000000e-01 : f32
    %19 = vector.broadcast %cst_6 : f32 to vector<8x384xf32>
    %20 = arith.mulf %16, %19 : vector<8x384xf32>
    %21 = arith.select %18, %16, %20 : vector<8x384xi1>, vector<8x384xf32>
    %22 = arith.truncf %21 : vector<8x384xf32> to vector<8x384xbf16>
    %c0_7 = arith.constant 0 : index
    %c0_8 = arith.constant 0 : index
    %23 = vector.load %arg4[%c0_7, %c0_8] : memref<8x384xbf16, #tpu.memory_space<vmem>>, vector<8x384xbf16>
    tpu.vector_store %arg4[%c0_7, %c0_8], %22 {strides = array<i32>} : memref<8x384xbf16, #tpu.memory_space<vmem>>, vector<8x384xbf16>,
    return
  }
  func.func @transform_0(%arg0: i32) -> (i32, i32, i32) {
    %c0_i32 = arith.constant 0 : i32
    %c0_i32_0 = arith.constant 0 : i32
    %c0_i32_1 = arith.constant 0 : i32
    %c0_i32_2 = arith.constant 0 : i32
    return %c0_i32, %c0_i32_0, %c0_i32_1 : i32, i32, i32
  }
  func.func @transform_1(%arg0: i32) -> (i32, i32, i32) {
    %c0_i32 = arith.constant 0 : i32
    %c0_i32_0 = arith.constant 0 : i32
    %c0_i32_1 = arith.constant 0 : i32
    %c0_i32_2 = arith.constant 0 : i32
    return %c0_i32, %c0_i32_0, %c0_i32_1 : i32, i32, i32
  }
  func.func @transform_2(%arg0: i32) -> (i32, i32) {
    %c0_i32 = arith.constant 0 : i32
    %c0_i32_0 = arith.constant 0 : i32
    return %c0_i32, %arg0 : i32, i32
  }
  func.func @transform_3(%arg0: i32) -> (i32, i32) {
    %c0_i32 = arith.constant 0 : i32
    %c0_i32_0 = arith.constant 0 : i32
    return %c0_i32, %arg0 : i32, i32
  }
}

module attributes {stable_mosaic.version = 11 : i64} {
  func.func @_mm_bias_act_kernel(%arg0: i32, %arg1: memref<3x8x80xf32, #tpu.memory_space<vmem>>, %arg2: memref<3x8x1xf32, #tpu.memory_space<vmem>>, %arg3: memref<80x384xbf16, #tpu.memory_space<vmem>>, %arg4: memref<8x384xf32, #tpu.memory_space<vmem>>) attributes {dimension_semantics = [#tpu.dimension_semantics<parallel>], iteration_bounds = array<i64: 3>, scalar_prefetch = 0 : i64, scratch_operands = 0 : i64, tpu.core_type = #tpu.core_type<tc>, window_params = [{pipeline_mode = #tpu.pipeline_mode<synchronous>, transform_indices = @transform_0, window_bounds = array<i64: 3, 8, 80>}, {pipeline_mode = #tpu.pipeline_mode<synchronous>, transform_indices = @transform_1, window_bounds = array<i64: 3, 8, 1>}, {transform_indices = @transform_2, window_bounds = array<i64: 80, 384>}, {transform_indices = @transform_3, window_bounds = array<i64: 8, 384>}]} {
    %c1_i32 = arith.constant 1 : i32
    %0 = arith.cmpi sge, %arg0, %c1_i32 : i32
    %1 = arith.extui %0 : i1 to i32
    %c0_i32 = arith.constant 0 : i32
    %2 = arith.addi %c0_i32, %1 : i32
    %c2_i32 = arith.constant 2 : i32
    %3 = arith.cmpi sge, %arg0, %c2_i32 : i32
    %4 = arith.extui %3 : i1 to i32
    %5 = arith.addi %2, %4 : i32
    %6 = arith.index_cast %5 : i32 to index
    %c0 = arith.constant 0 : index
    %c0_0 = arith.constant 0 : index
    %7 = vector.load %arg1[%6, %c0, %c0_0] : memref<3x8x80xf32, #tpu.memory_space<vmem>>, vector<1x8x80xf32>
    %8 = vector.shape_cast %7 : vector<1x8x80xf32> to vector<8x80xf32>
    %c0_1 = arith.constant 0 : index
    %c0_2 = arith.constant 0 : index
    %9 = vector.load %arg3[%c0_1, %c0_2] : memref<80x384xbf16, #tpu.memory_space<vmem>>, vector<80x384xbf16>
    %10 = arith.extf %9 : vector<80x384xbf16> to vector<80x384xf32>
    %cst = arith.constant dense<0.000000e+00> : vector<8x384xf32>
    %11 = tpu.matmul %8, %10, %cst {dimension_numbers = #tpu.dot_dimension_numbers<[1], [0], [0], [1], [0, 0, 1, 1], [], []>} : vector<8x80xf32>, vector<80x384xf32>, vector<8x384xf32> -> vector<8x384xf32>
    %12 = arith.index_cast %5 : i32 to index
    %c0_3 = arith.constant 0 : index
    %c0_4 = arith.constant 0 : index
    %13 = vector.load %arg2[%12, %c0_3, %c0_4] : memref<3x8x1xf32, #tpu.memory_space<vmem>>, vector<1x8x1xf32>
    %14 = vector.shape_cast %13 : vector<1x8x1xf32> to vector<8x1xf32>
    %15 = vector.broadcast %14 : vector<8x1xf32> to vector<8x384xf32>
    %16 = arith.addf %11, %15 : vector<8x384xf32>
    %c0_5 = arith.constant 0 : index
    %c0_6 = arith.constant 0 : index
    %17 = vector.load %arg4[%c0_5, %c0_6] : memref<8x384xf32, #tpu.memory_space<vmem>>, vector<8x384xf32>
    tpu.vector_store %arg4[%c0_5, %c0_6], %16 {strides = array<i32>} : memref<8x384xf32, #tpu.memory_space<vmem>>, vector<8x384xf32>,
    return
  }
  func.func @transform_0(%arg0: i32) -> (i32, i32, i32) {
    %c0_i32 = arith.constant 0 : i32
    %c0_i32_0 = arith.constant 0 : i32
    %c0_i32_1 = arith.constant 0 : i32
    %c0_i32_2 = arith.constant 0 : i32
    return %c0_i32, %c0_i32_0, %c0_i32_1 : i32, i32, i32
  }
  func.func @transform_1(%arg0: i32) -> (i32, i32, i32) {
    %c0_i32 = arith.constant 0 : i32
    %c0_i32_0 = arith.constant 0 : i32
    %c0_i32_1 = arith.constant 0 : i32
    %c0_i32_2 = arith.constant 0 : i32
    return %c0_i32, %c0_i32_0, %c0_i32_1 : i32, i32, i32
  }
  func.func @transform_2(%arg0: i32) -> (i32, i32) {
    %c0_i32 = arith.constant 0 : i32
    %c0_i32_0 = arith.constant 0 : i32
    return %c0_i32, %arg0 : i32, i32
  }
  func.func @transform_3(%arg0: i32) -> (i32, i32) {
    %c0_i32 = arith.constant 0 : i32
    %c0_i32_0 = arith.constant 0 : i32
    return %c0_i32, %arg0 : i32, i32
  }
}

</mosaic_0001>

<llo_original>
// kernel: forward.7
$region0: #{forward.7}
  #allocation0 [shape = 'u32[]', space=smem, size = 0x4, offset = 0x4, fixed_abs, tag = 'smem constant byte address 0x4 - core index']
  #allocation1 [shape = 'u32[72,128]{1,0:T(1,128)}', space=vmem, size = 0x9000, scoped, tag = 'internal scratch']
  %s0 = inlined_call_operand.hbm [shape: f32[3,144,128], index: 0, kind: input, shape index: {}]
  %s1 = inlined_call_operand.vmem [shape: f32[128,384], index: 1, kind: input, shape index: {}]
  %s2 = inlined_call_operand.vmem [shape: f32[72,384], index: 2, kind: output, shape index: {}]
  %s3 = sld [smem:[#allocation0]]
  $region117: #{forward.7} parent=0
    _
  %s5 = ssub.s32 1, %s3
  %s6 = scalar_select 0, %s5, %s3
  $region1: #{forward.7} parent=0
    #allocation2 [shape = 'u8[221184]{0}', space=vmem, size = 0x36000, scoped, tag = 'input window, operand 0, single buffered']
    #allocation3 [shape = 's32[2]{0}', space=sflag, size = 0x8, scoped, tag = 'scoped memory for forward.7']
    #allocation4 [shape = 'u8[131072]{0}', space=vmem, size = 0x20000, scoped, tag = 'input window, operand 1']
    #allocation5 [shape = 'u8[73728]{0}', space=vmem, size = 0x12000, scoped, tag = 'output window, operand 0']
    %7 = vsyncpa [#allocation3], 0
    loop: start=0, step=1, limit=5
    $region2: #{forward.7} parent=1 // loop_pre_header
      _
    $region3: #{forward.7} parent=1 // loop_header
      %s9 = sphi 0, %s13
      %p10 = scmp.ge.s32.totalorder %s9, 5
      %s17 = sphi 0, %s17
      %s19 = sphi 0, %s17
      %s20 = sphi 0, %s19
      %s34 = sphi 0, %s20
      %s40 = sphi 0, %s42
      %s43 = sphi 0, %s40
      %s44 = sphi 0, %s43
      %s60 = sphi 0, %s44
      %s66 = sphi 0, %s68
      %s69 = sphi 0, %s66
      %s70 = sphi 0, %s69
      %s86 = sphi 0, %s70
    $region4: #{forward.7} parent=1 // loop_header_branch
      %12 = sbr.rel (%p10) target = $region8
    $region5: #{forward.7} parent=1 // loop_body
      %s14 = ssub.s32 %s9, 1
      %s15 = ssub.s32 %s9, 2
      %s16 = sadd.s32 %s9, 1
      %s18 = sadd.s32 %s17, 1
      %p21 = scmp.eq.s32.totalorder %s9, 2
      %p22 = scmp.ne.s32.totalorder %s17, %s19
      %p23 = scmp.eq.s32.totalorder %s9, 0
      %p24 = por %p22, %p23
      %p25 = scmp.ne.s32.totalorder %s17, %s19
      %p26 = scmp.eq.s32.totalorder %s14, 2
      %p27 = por %p25, %p26
      %p28 = scmp.ne.s32.totalorder %s19, %s20
      %p29 = scmp.eq.s32.totalorder %s14, 0
      %p30 = por %p28, %p29
      %p31 = scmp.ne.s32.totalorder %s19, %s20
      %p32 = scmp.eq.s32.totalorder %s15, 2
      %p33 = por %p31, %p32
      %p35 = scmp.ne.s32.totalorder %s20, %s34
      %p36 = scmp.eq.s32.totalorder %s15, 0
      %p37 = por %p35, %p36
      %s38 = ssub.s32 %s9, %s16
      %p39 = scmp.eq.s32.totalorder %s38, 0
      %s41 = sadd.s32 %s40, 1
      %s42 = scalar_select %p39, %s40, %s41
      %p45 = pneg %p39
      %p46 = scmp.eq.s32.totalorder %s9, 2
      %p47 = por %p45, %p46
      %p48 = scmp.ne.s32.totalorder %s40, %s43
      %p49 = scmp.eq.s32.totalorder %s9, 0
      %p50 = por %p48, %p49
      %p51 = scmp.ne.s32.totalorder %s40, %s43
      %p52 = scmp.eq.s32.totalorder %s14, 2
      %p53 = por %p51, %p52
      %p54 = scmp.ne.s32.totalorder %s43, %s44
      %p55 = scmp.eq.s32.totalorder %s14, 0
      %p56 = por %p54, %p55
      %p57 = scmp.ne.s32.totalorder %s43, %s44
      %p58 = scmp.eq.s32.totalorder %s15, 2
      %p59 = por %p57, %p58
      %p61 = scmp.ne.s32.totalorder %s44, %s60
      %p62 = scmp.eq.s32.totalorder %s15, 0
      %p63 = por %p61, %p62
      %s64 = ssub.s32 %s9, %s16
      %p65 = scmp.eq.s32.totalorder %s64, 0
      %s67 = sadd.s32 %s66, 1
      %s68 = scalar_select %p65, %s66, %s67
      %p71 = pneg %p65
      %p72 = scmp.eq.s32.totalorder %s9, 2
      %p73 = por %p71, %p72
      %p74 = scmp.ne.s32.totalorder %s66, %s69
      %p75 = scmp.eq.s32.totalorder %s9, 0
      %p76 = por %p74, %p75
      %p77 = scmp.ne.s32.totalorder %s66, %s69
      %p78 = scmp.eq.s32.totalorder %s14, 2
      %p79 = por %p77, %p78
      %p80 = scmp.ne.s32.totalorder %s69, %s70
      %p81 = scmp.eq.s32.totalorder %s14, 0
      %p82 = por %p80, %p81
      %p83 = scmp.ne.s32.totalorder %s69, %s70
      %p84 = scmp.eq.s32.totalorder %s15, 2
      %p85 = por %p83, %p84
      %p87 = scmp.ne.s32.totalorder %s70, %s86
      %p88 = scmp.eq.s32.totalorder %s15, 0
      %p89 = por %p87, %p88
      %p90 = scmp.le.s32.totalorder 1, %s9
      %p91 = scmp.lt.s32.totalorder %s9, 4
      %p92 = pnand %p90, %p91
      %p93 = pneg %p92
      // Predicated region
      $region9: #{forward.7} parent=5 // pred_check
        _
      $region10: #{forward.7} parent=5 // pred_check_branch
        %95 = sbr.rel (%p92) target = $region12
      $region11: #{forward.7} parent=5 // pred_region
        %s96 = ssub.s32 %s9, 1
        // Predicated region
        $region13: #{forward.7} parent=11 // pred_check
          %p97 = pneg %p30
        $region14: #{forward.7} parent=11 // pred_check_branch
          %99 = sbr.rel (%p97) target = $region16
        $region15: #{forward.7} parent=11 // pred_region
          %101 = vsyncadd [#allocation3], 0
          %s102 = sshll.u32 %s0, 4
          %s103 = int_to_ptr.hbm [resolvable:$true] %s102
          %s104 = sshll.u32 [#allocation2], 4
          %s105 = int_to_ptr.vmem [resolvable:$true] %s104
          %110 = dma.hbm_to_vmem [thread:$0]  %s103, 6912, %s105, [#allocation3], 128, 128, 8
        $region16: #{forward.7} parent=11 // pred_fallthru
          _
      $region12: #{forward.7} parent=5 // pred_fallthru
        _
      %p111 = scmp.lt.s32.totalorder %s9, 3
      // Predicated region
      $region17: #{forward.7} parent=5 // pred_check
        %p112 = pneg %p111
      $region18: #{forward.7} parent=5 // pred_check_branch
        %114 = sbr.rel (%p112) target = $region20
      $region19: #{forward.7} parent=5 // pred_region
        // Predicated region
        $region21: #{forward.7} parent=19 // pred_check
          %p115 = pneg %p50
        $region22: #{forward.7} parent=19 // pred_check_branch
          %117 = sbr.rel (%p115) target = $region24
        $region23: #{forward.7} parent=19 // pred_region
          %s118 = sand.u32 %s40, 1
          %s119 = sand.u32 %s40, 1
          %s120 = smul.addr %s119, 128
          %s121 = scalar_lea.vmem [#allocation4], %s120
          %s122 = smul.addr %s9, 8
          %s123 = scalar_lea.vmem %s1, %s122
          // Predicated region
          $region25: #{forward.7} parent=23 // pred_check
            _
          $region26: #{forward.7} parent=23 // pred_check_branch
            %125 = sbr.rel (0) target = $region28
          $region27: #{forward.7} parent=23 // pred_region
            // Predicated region
            $region29: #{forward.7} parent=27 // pred_check
              _
            $region30: #{forward.7} parent=27 // pred_check_branch
              %127 = sbr.rel (0) target = $region32
            $region31: #{forward.7} parent=27 // pred_region
              // Predicated region
              $region44: #{forward.7} parent=31 // pred_check
                _
              $region45: #{forward.7} parent=31 // pred_check_branch
                %173 = sbr.rel (0) target = $region47
              $region46: #{forward.7} parent=31 // pred_region
                loop: start=0, step=1, limit=1
                $region48: #{forward.7} parent=46 // loop_pre_header
                  _
                $region49: #{forward.7} parent=46 // loop_header
                  %s175 = sphi 0, %s179
                  %p176 = scmp.ge.s32.totalorder %s175, 1
                  %s180 = sphi %s123, %s123
                  %s181 = sphi %s121, %s121
                $region50: #{forward.7} parent=46 // loop_header_branch
                  %178 = sbr.rel (%p176) target = $region54
                $region51: #{forward.7} parent=46 // loop_body
                  %v182 = vld [vmem:[%s180] sm:$0xff]
                  %183 = vst [vmem:[%s181] sm:$0xff] %v182
                  %v184 = vld [vmem:[%s180 + $0x18] sm:$0xff]
                  %185 = vst [vmem:[%s181 + $0x8] sm:$0xff] %v184
                  %v186 = vld [vmem:[%s180 + $0x30] sm:$0xff]
                  %187 = vst [vmem:[%s181 + $0x10] sm:$0xff] %v186
                  %v188 = vld [vmem:[%s180 + $0x48] sm:$0xff]
                  %189 = vst [vmem:[%s181 + $0x18] sm:$0xff] %v188
                  %v190 = vld [vmem:[%s180 + $0x60] sm:$0xff]
                  %191 = vst [vmem:[%s181 + $0x20] sm:$0xff] %v190
                  %v192 = vld [vmem:[%s180 + $0x78] sm:$0xff]
                  %193 = vst [vmem:[%s181 + $0x28] sm:$0xff] %v192
                  %v194 = vld [vmem:[%s180 + $0x90] sm:$0xff]
                  %195 = vst [vmem:[%s181 + $0x30] sm:$0xff] %v194
                  %v196 = vld [vmem:[%s180 + $0xa8] sm:$0xff]
                  %197 = vst [vmem:[%s181 + $0x38] sm:$0xff] %v196
                  %v198 = vld [vmem:[%s180 + $0xc0] sm:$0xff]
                  %199 = vst [vmem:[%s181 + $0x40] sm:$0xff] %v198
                  %v200 = vld [vmem:[%s180 + $0xd8] sm:$0xff]
                  %201 = vst [vmem:[%s181 + $0x48] sm:$0xff] %v200
                  %v202 = vld [vmem:[%s180 + $0xf0] sm:$0xff]
                  %203 = vst [vmem:[%s181 + $0x50] sm:$0xff] %v202
                  %v204 = vld [vmem:[%s180 + $0x108] sm:$0xff]
                  %205 = vst [vmem:[%s181 + $0x58] sm:$0xff] %v204
                  %v206 = vld [vmem:[%s180 + $0x120] sm:$0xff]
                  %207 = vst [vmem:[%s181 + $0x60] sm:$0xff] %v206
                  %v208 = vld [vmem:[%s180 + $0x138] sm:$0xff]
                  %209 = vst [vmem:[%s181 + $0x68] sm:$0xff] %v208
                  %v210 = vld [vmem:[%s180 + $0x150] sm:$0xff]
                  %211 = vst [vmem:[%s181 + $0x70] sm:$0xff] %v210
                  %v212 = vld [vmem:[%s180 + $0x168] sm:$0xff]
                  %213 = vst [vmem:[%s181 + $0x78] sm:$0xff] %v212
                $region52: #{forward.7} parent=46 // loop_footer
                  %s179 = sadd.s32 1, %s175
                $region53: #{forward.7} parent=46 // loop_footer_branch
                  %174 = sbr.rel target = $region49
                $region54: #{forward.7} parent=46 // loop_exit
                  _
              $region47: #{forward.7} parent=31 // pred_fallthru
                _
              // Predicated region
              $region55: #{forward.7} parent=31 // pred_check
                _
              $region56: #{forward.7} parent=31 // pred_check_branch
                %215 = sbr.rel target = $region58
              $region57: #{forward.7} parent=31 // pred_region
                _
              $region58: #{forward.7} parent=31 // pred_fallthru
                _
            $region32: #{forward.7} parent=27 // pred_fallthru
              _
            // Predicated region
            $region33: #{forward.7} parent=27 // pred_check
              _
            $region34: #{forward.7} parent=27 // pred_check_branch
              %129 = sbr.rel target = $region36
            $region35: #{forward.7} parent=27 // pred_region
              %s131 = ssub.s32 256, 1
              loop: start=0, step=1, limit=1
              $region37: #{forward.7} parent=35 // loop_pre_header
                _
              $region38: #{forward.7} parent=35 // loop_header
                %s133 = sphi 0, %s137
                %p134 = scmp.ge.s32.totalorder %s133, 1
                %s138 = sphi %s123, %s123
                %s139 = sphi %s121, %s121
              $region39: #{forward.7} parent=35 // loop_header_branch
                %136 = sbr.rel (%p134) target = $region43
              $region40: #{forward.7} parent=35 // loop_body
                %v140 = vld [vmem:[%s138] sm:%s131]
                %141 = vst [vmem:[%s139] sm:%s131] %v140
                %v142 = vld [vmem:[%s138 + $0x18] sm:%s131]
                %143 = vst [vmem:[%s139 + $0x8] sm:%s131] %v142
                %v144 = vld [vmem:[%s138 + $0x30] sm:%s131]
                %145 = vst [vmem:[%s139 + $0x10] sm:%s131] %v144
                %v146 = vld [vmem:[%s138 + $0x48] sm:%s131]
                %147 = vst [vmem:[%s139 + $0x18] sm:%s131] %v146
                %v148 = vld [vmem:[%s138 + $0x60] sm:%s131]
                %149 = vst [vmem:[%s139 + $0x20] sm:%s131] %v148
                %v150 = vld [vmem:[%s138 + $0x78] sm:%s131]
                %151 = vst [vmem:[%s139 + $0x28] sm:%s131] %v150
                %v152 = vld [vmem:[%s138 + $0x90] sm:%s131]
                %153 = vst [vmem:[%s139 + $0x30] sm:%s131] %v152
                %v154 = vld [vmem:[%s138 + $0xa8] sm:%s131]
                %155 = vst [vmem:[%s139 + $0x38] sm:%s131] %v154
                %v156 = vld [vmem:[%s138 + $0xc0] sm:%s131]
                %157 = vst [vmem:[%s139 + $0x40] sm:%s131] %v156
                %v158 = vld [vmem:[%s138 + $0xd8] sm:%s131]
                %159 = vst [vmem:[%s139 + $0x48] sm:%s131] %v158
                %v160 = vld [vmem:[%s138 + $0xf0] sm:%s131]
                %161 = vst [vmem:[%s139 + $0x50] sm:%s131] %v160
                %v162 = vld [vmem:[%s138 + $0x108] sm:%s131]
                %163 = vst [vmem:[%s139 + $0x58] sm:%s131] %v162
                %v164 = vld [vmem:[%s138 + $0x120] sm:%s131]
                %165 = vst [vmem:[%s139 + $0x60] sm:%s131] %v164
                %v166 = vld [vmem:[%s138 + $0x138] sm:%s131]
                %167 = vst [vmem:[%s139 + $0x68] sm:%s131] %v166
                %v168 = vld [vmem:[%s138 + $0x150] sm:%s131]
                %169 = vst [vmem:[%s139 + $0x70] sm:%s131] %v168
                %v170 = vld [vmem:[%s138 + $0x168] sm:%s131]
                %171 = vst [vmem:[%s139 + $0x78] sm:%s131] %v170
              $region41: #{forward.7} parent=35 // loop_footer
                %s137 = sadd.s32 1, %s133
              $region42: #{forward.7} parent=35 // loop_footer_branch
                %132 = sbr.rel target = $region38
              $region43: #{forward.7} parent=35 // loop_exit
                _
            $region36: #{forward.7} parent=27 // pred_fallthru
              _
          $region28: #{forward.7} parent=23 // pred_fallthru
            _
          %216 = vnop
        $region24: #{forward.7} parent=19 // pred_fallthru
          _
      $region20: #{forward.7} parent=5 // pred_fallthru
        _
      %p217 = scmp.le.s32.totalorder 1, %s9
      %p218 = scmp.lt.s32.totalorder %s9, 4
      %p219 = pnand %p217, %p218
      %p220 = pneg %p219
      // Predicated region
      $region59: #{forward.7} parent=5 // pred_check
        _
      $region60: #{forward.7} parent=5 // pred_check_branch
        %222 = sbr.rel (%p219) target = $region62
      $region61: #{forward.7} parent=5 // pred_region
        %s223 = ssub.s32 %s9, 1
        // Predicated region
        $region63: #{forward.7} parent=61 // pred_check
          %p224 = pneg %p30
        $region64: #{forward.7} parent=61 // pred_check_branch
          %226 = sbr.rel (%p224) target = $region66
        $region65: #{forward.7} parent=61 // pred_region
          %228 = dma.done [#allocation3], 6912
        $region66: #{forward.7} parent=61 // pred_fallthru
          _
        %s229 = sand.u32 %s43, 1
        %s230 = sand.u32 %s43, 1
        %s231 = smul.addr %s230, 128
        %s232 = scalar_lea.vmem [#allocation4], %s231
        // Predicated region
        $region67: #{forward.7} parent=61 // pred_check
          %p233 = pneg %p56
        $region68: #{forward.7} parent=61 // pred_check_branch
          %235 = sbr.rel (%p233) target = $region70
        $region69: #{forward.7} parent=61 // pred_region
          _
        $region70: #{forward.7} parent=61 // pred_fallthru
          _
        %p236 = pneg %p30
        %p237 = pneg %p27
        %s238 = sand.u32 %s43, 1
        %s239 = sand.u32 %s43, 1
        %s240 = smul.addr %s239, 128
        %s241 = scalar_lea.vmem [#allocation4], %s240
        %p242 = pneg %p56
        %p243 = pneg %p53
        %p244 = pneg %p82
        %p245 = pneg %p79
        %s246 = sand.u32 %s69, 1
        %s247 = sand.u32 %s69, 1
        %s248 = smul.addr %s247, 72
        %s249 = scalar_lea.vmem [#allocation5], %s248
        %p250 = scmp.ge.s32.totalorder %s14, 1
        %s251 = scalar_select %p250, 1, 0
        %p252 = scmp.ge.s32.totalorder %s14, 2
        %s253 = scalar_select %p252, 1, 0
        %s254 = sadd.s32 %s251, %s253
        %s255 = smul.u32 %s254, 144
        %s256 = scalar_lea.vmem [#allocation2], %s255
        %v257 = vld [vmem:[%s256] sm:$0xff]
        %v258 = vld [vmem:[%s256 + $0x8] sm:$0xff]
        %v259 = vld [vmem:[%s256 + $0x10] sm:$0xff]
        %v260 = vld [vmem:[%s256 + $0x18] sm:$0xff]
        %v261 = vld [vmem:[%s256 + $0x20] sm:$0xff]
        %v262 = vld [vmem:[%s256 + $0x28] sm:$0xff]
        %v263 = vld [vmem:[%s256 + $0x30] sm:$0xff]
        %v264 = vld [vmem:[%s256 + $0x38] sm:$0xff]
        %v265 = vld [vmem:[%s256 + $0x40] sm:$0xff]
        %v266 = vld [vmem:[%s256 + $0x48] sm:$0xff]
        %v267 = vld [vmem:[%s256 + $0x50] sm:$0xff]
        %v268 = vld [vmem:[%s256 + $0x58] sm:$0xff]
        %v269 = vld [vmem:[%s256 + $0x60] sm:$0xff]
        %v270 = vld [vmem:[%s256 + $0x68] sm:$0xff]
        %v271 = vld [vmem:[%s256 + $0x70] sm:$0xff]
        %v272 = vld [vmem:[%s256 + $0x78] sm:$0xff]
        %v273 = vld [vmem:[%s256 + $0x80] sm:$0xff]
        %v274 = vld [vmem:[%s256 + $0x88] sm:$0xff]
        %v275 = vld [vmem:[%s232] sm:$0xff]
        %v276 = vld [vmem:[%s232 + $0x8] sm:$0xff]
        %v277 = vld [vmem:[%s232 + $0x10] sm:$0xff]
        %v278 = vld [vmem:[%s232 + $0x18] sm:$0xff]
        %v279 = vld [vmem:[%s232 + $0x20] sm:$0xff]
        %v280 = vld [vmem:[%s232 + $0x28] sm:$0xff]
        %v281 = vld [vmem:[%s232 + $0x30] sm:$0xff]
        %v282 = vld [vmem:[%s232 + $0x38] sm:$0xff]
        %v283 = vld [vmem:[%s232 + $0x40] sm:$0xff]
        %v284 = vld [vmem:[%s232 + $0x48] sm:$0xff]
        %v285 = vld [vmem:[%s232 + $0x50] sm:$0xff]
        %v286 = vld [vmem:[%s232 + $0x58] sm:$0xff]
        %v287 = vld [vmem:[%s232 + $0x60] sm:$0xff]
        %v288 = vld [vmem:[%s232 + $0x68] sm:$0xff]
        %v289 = vld [vmem:[%s232 + $0x70] sm:$0xff]
        %v290 = vld [vmem:[%s232 + $0x78] sm:$0xff]
        %291 = vmatpush.msra.mxu0 %v290
        %292 = vmatpush.msra.mxu0 %v289
        %293 = vmatpush.msra.mxu0 %v288
        %294 = vmatpush.msra.mxu0 %v287
        %295 = vmatpush.msra.mxu0 %v286
        %296 = vmatpush.msra.mxu0 %v285
        %297 = vmatpush.msra.mxu0 %v284
        %298 = vmatpush.msra.mxu0 %v283
        %299 = vmatpush.msra.mxu0 %v282
        %300 = vmatpush.msra.mxu0 %v281
        %301 = vmatpush.msra.mxu0 %v280
        %302 = vmatpush.msra.mxu0 %v279
        %303 = vmatpush.msra.mxu0 %v278
        %304 = vmatpush.msra.mxu0 %v277
        %305 = vmatpush.msra.mxu0 %v276
        %306 = vmatpush.msra.mxu0 %v275
        %307 = vmatmul.f32.gmra.mxu0 %v257
        %v308 = vpop.f32.mrf.mxu0
        %v309 = vadd.f32 0.0, %v308
        %310 = vmatmul.f32.gmra.mxu0 %v258
        %v311 = vpop.f32.mrf.mxu0
        %v312 = vadd.f32 0.0, %v311
        %313 = vmatmul.f32.gmra.mxu0 %v259
        %v314 = vpop.f32.mrf.mxu0
        %v315 = vadd.f32 0.0, %v314
        %316 = vmatmul.f32.gmra.mxu0 %v260
        %v317 = vpop.f32.mrf.mxu0
        %v318 = vadd.f32 0.0, %v317
        %319 = vmatmul.f32.gmra.mxu0 %v261
        %v320 = vpop.f32.mrf.mxu0
        %v321 = vadd.f32 0.0, %v320
        %322 = vmatmul.f32.gmra.mxu0 %v262
        %v323 = vpop.f32.mrf.mxu0
        %v324 = vadd.f32 0.0, %v323
        %325 = vmatmul.f32.gmra.mxu0 %v263
        %v326 = vpop.f32.mrf.mxu0
        %v327 = vadd.f32 0.0, %v326
        %328 = vmatmul.f32.gmra.mxu0 %v264
        %v329 = vpop.f32.mrf.mxu0
        %v330 = vadd.f32 0.0, %v329
        %331 = vmatmul.f32.gmra.mxu0 %v265
        %v332 = vpop.f32.mrf.mxu0
        %v333 = vadd.f32 0.0, %v332
        %334 = vmatmul.f32.gmra.mxu0 %v266
        %v335 = vpop.f32.mrf.mxu0
        %v336 = vadd.f32 0.0, %v335
        %337 = vmatmul.f32.gmra.mxu0 %v267
        %v338 = vpop.f32.mrf.mxu0
        %v339 = vadd.f32 0.0, %v338
        %340 = vmatmul.f32.gmra.mxu0 %v268
        %v341 = vpop.f32.mrf.mxu0
        %v342 = vadd.f32 0.0, %v341
        %343 = vmatmul.f32.gmra.mxu0 %v269
        %v344 = vpop.f32.mrf.mxu0
        %v345 = vadd.f32 0.0, %v344
        %346 = vmatmul.f32.gmra.mxu0 %v270
        %v347 = vpop.f32.mrf.mxu0
        %v348 = vadd.f32 0.0, %v347
        %349 = vmatmul.f32.gmra.mxu0 %v271
        %v350 = vpop.f32.mrf.mxu0
        %v351 = vadd.f32 0.0, %v350
        %352 = vmatmul.f32.gmra.mxu0 %v272
        %v353 = vpop.f32.mrf.mxu0
        %v354 = vadd.f32 0.0, %v353
        %355 = vmatmul.f32.gmra.mxu0 %v273
        %v356 = vpop.f32.mrf.mxu0
        %v357 = vadd.f32 0.0, %v356
        %358 = vmatmul.f32.gmra.mxu0 %v274
        %v359 = vpop.f32.mrf.mxu0
        %v360 = vadd.f32 0.0, %v359
        %361 = vdwg.mxu0
        %v362 = vmul.f32 %v309, %v309
        %v363 = vmul.f32 %v312, %v312
        %v364 = vmul.f32 %v315, %v315
        %v365 = vmul.f32 %v318, %v318
        %v366 = vmul.f32 %v321, %v321
        %v367 = vmul.f32 %v324, %v324
        %v368 = vmul.f32 %v327, %v327
        %v369 = vmul.f32 %v330, %v330
        %v370 = vmul.f32 %v333, %v333
        %v371 = vmul.f32 %v336, %v336
        %v372 = vmul.f32 %v339, %v339
        %v373 = vmul.f32 %v342, %v342
        %v374 = vmul.f32 %v345, %v345
        %v375 = vmul.f32 %v348, %v348
        %v376 = vmul.f32 %v351, %v351
        %v377 = vmul.f32 %v354, %v354
        %v378 = vmul.f32 %v357, %v357
        %v379 = vmul.f32 %v360, %v360
        %v380 = vadd.f32 %v362, %v371
        %v381 = vadd.f32 %v363, %v372
        %v382 = vadd.f32 %v364, %v373
        %v383 = vadd.f32 %v365, %v374
        %v384 = vadd.f32 %v366, %v375
        %v385 = vadd.f32 %v367, %v376
        %v386 = vadd.f32 %v368, %v377
        %v387 = vadd.f32 %v369, %v378
        %v388 = vadd.f32 %v370, %v379
        %v389 = vrsqrt.pop %v380
        %v390 = vmul.f32 %v389, %v380
        %v391 = vmul.f32 %v390, %v389
        %v392 = vmul.f32 0.5, %v391
        %v393 = vsub.f32 1.5, %v392
        %v394 = vmul.f32 %v389, %v393
        %v395 = vmul.f32 %v380, %v394
        %vm396 = vcmp.eq.f32.partialorder %v380, inf
        %v397 = vsel %vm396, %v380, %v395
        %vm398 = vcmp.eq.f32.partialorder %v380, 0.0
        %v399 = vand.u32 %v380, 2147483648
        %v400 = vsel %vm398, %v399, %v397
        %v401 = vrsqrt.pop %v381
        %v402 = vmul.f32 %v401, %v381
        %v403 = vmul.f32 %v402, %v401
        %v404 = vmul.f32 0.5, %v403
        %v405 = vsub.f32 1.5, %v404
        %v406 = vmul.f32 %v401, %v405
        %v407 = vmul.f32 %v381, %v406
        %vm408 = vcmp.eq.f32.partialorder %v381, inf
        %v409 = vsel %vm408, %v381, %v407
        %vm410 = vcmp.eq.f32.partialorder %v381, 0.0
        %v411 = vand.u32 %v381, 2147483648
        %v412 = vsel %vm410, %v411, %v409
        %v413 = vrsqrt.pop %v382
        %v414 = vmul.f32 %v413, %v382
        %v415 = vmul.f32 %v414, %v413
        %v416 = vmul.f32 0.5, %v415
        %v417 = vsub.f32 1.5, %v416
        %v418 = vmul.f32 %v413, %v417
        %v419 = vmul.f32 %v382, %v418
        %vm420 = vcmp.eq.f32.partialorder %v382, inf
        %v421 = vsel %vm420, %v382, %v419
        %vm422 = vcmp.eq.f32.partialorder %v382, 0.0
        %v423 = vand.u32 %v382, 2147483648
        %v424 = vsel %vm422, %v423, %v421
        %v425 = vrsqrt.pop %v383
        %v426 = vmul.f32 %v425, %v383
        %v427 = vmul.f32 %v426, %v425
        %v428 = vmul.f32 0.5, %v427
        %v429 = vsub.f32 1.5, %v428
        %v430 = vmul.f32 %v425, %v429
        %v431 = vmul.f32 %v383, %v430
        %vm432 = vcmp.eq.f32.partialorder %v383, inf
        %v433 = vsel %vm432, %v383, %v431
        %vm434 = vcmp.eq.f32.partialorder %v383, 0.0
        %v435 = vand.u32 %v383, 2147483648
        %v436 = vsel %vm434, %v435, %v433
        %v437 = vrsqrt.pop %v384
        %v438 = vmul.f32 %v437, %v384
        %v439 = vmul.f32 %v438, %v437
        %v440 = vmul.f32 0.5, %v439
        %v441 = vsub.f32 1.5, %v440
        %v442 = vmul.f32 %v437, %v441
        %v443 = vmul.f32 %v384, %v442
        %vm444 = vcmp.eq.f32.partialorder %v384, inf
        %v445 = vsel %vm444, %v384, %v443
        %vm446 = vcmp.eq.f32.partialorder %v384, 0.0
        %v447 = vand.u32 %v384, 2147483648
        %v448 = vsel %vm446, %v447, %v445
        %v449 = vrsqrt.pop %v385
        %v450 = vmul.f32 %v449, %v385
        %v451 = vmul.f32 %v450, %v449
        %v452 = vmul.f32 0.5, %v451
        %v453 = vsub.f32 1.5, %v452
        %v454 = vmul.f32 %v449, %v453
        %v455 = vmul.f32 %v385, %v454
        %vm456 = vcmp.eq.f32.partialorder %v385, inf
        %v457 = vsel %vm456, %v385, %v455
        %vm458 = vcmp.eq.f32.partialorder %v385, 0.0
        %v459 = vand.u32 %v385, 2147483648
        %v460 = vsel %vm458, %v459, %v457
        %v461 = vrsqrt.pop %v386
        %v462 = vmul.f32 %v461, %v386
        %v463 = vmul.f32 %v462, %v461
        %v464 = vmul.f32 0.5, %v463
        %v465 = vsub.f32 1.5, %v464
        %v466 = vmul.f32 %v461, %v465
        %v467 = vmul.f32 %v386, %v466
        %vm468 = vcmp.eq.f32.partialorder %v386, inf
        %v469 = vsel %vm468, %v386, %v467
        %vm470 = vcmp.eq.f32.partialorder %v386, 0.0
        %v471 = vand.u32 %v386, 2147483648
        %v472 = vsel %vm470, %v471, %v469
        %v473 = vrsqrt.pop %v387
        %v474 = vmul.f32 %v473, %v387
        %v475 = vmul.f32 %v474, %v473
        %v476 = vmul.f32 0.5, %v475
        %v477 = vsub.f32 1.5, %v476
        %v478 = vmul.f32 %v473, %v477
        %v479 = vmul.f32 %v387, %v478
        %vm480 = vcmp.eq.f32.partialorder %v387, inf
        %v481 = vsel %vm480, %v387, %v479
        %vm482 = vcmp.eq.f32.partialorder %v387, 0.0
        %v483 = vand.u32 %v387, 2147483648
        %v484 = vsel %vm482, %v483, %v481
        %v485 = vrsqrt.pop %v388
        %v486 = vmul.f32 %v485, %v388
        %v487 = vmul.f32 %v486, %v485
        %v488 = vmul.f32 0.5, %v487
        %v489 = vsub.f32 1.5, %v488
        %v490 = vmul.f32 %v485, %v489
        %v491 = vmul.f32 %v388, %v490
        %vm492 = vcmp.eq.f32.partialorder %v388, inf
        %v493 = vsel %vm492, %v388, %v491
        %vm494 = vcmp.eq.f32.partialorder %v388, 0.0
        %v495 = vand.u32 %v388, 2147483648
        %v496 = vsel %vm494, %v495, %v493
        %497 = vst [vmem:[%s249] sm:$0xff] %v400
        %498 = vst [vmem:[%s249 + $0x8] sm:$0xff] %v412
        %499 = vst [vmem:[%s249 + $0x10] sm:$0xff] %v424
        %500 = vst [vmem:[%s249 + $0x18] sm:$0xff] %v436
        %501 = vst [vmem:[%s249 + $0x20] sm:$0xff] %v448
        %502 = vst [vmem:[%s249 + $0x28] sm:$0xff] %v460
        %503 = vst [vmem:[%s249 + $0x30] sm:$0xff] %v472
        %504 = vst [vmem:[%s249 + $0x38] sm:$0xff] %v484
        %505 = vst [vmem:[%s249 + $0x40] sm:$0xff] %v496
        %s506 = sand.u32 %s69, 1
        %s507 = sand.u32 %s69, 1
        %s508 = smul.addr %s507, 72
        %s509 = scalar_lea.vmem [#allocation5], %s508
        // Predicated region
        $region71: #{forward.7} parent=61 // pred_check
          %p510 = pneg %p79
        $region72: #{forward.7} parent=61 // pred_check_branch
          %512 = sbr.rel (%p510) target = $region74
        $region73: #{forward.7} parent=61 // pred_region
          %s513 = smul.addr %s14, 8
          %s514 = scalar_lea.vmem %s2, %s513
          // Predicated region
          $region75: #{forward.7} parent=73 // pred_check
            _
          $region76: #{forward.7} parent=73 // pred_check_branch
            %516 = sbr.rel (0) target = $region78
          $region77: #{forward.7} parent=73 // pred_region
            // Predicated region
            $region79: #{forward.7} parent=77 // pred_check
              _
            $region80: #{forward.7} parent=77 // pred_check_branch
              %518 = sbr.rel (0) target = $region82
            $region81: #{forward.7} parent=77 // pred_region
              // Predicated region
              $region94: #{forward.7} parent=81 // pred_check
                _
              $region95: #{forward.7} parent=81 // pred_check_branch
                %550 = sbr.rel (0) target = $region97
              $region96: #{forward.7} parent=81 // pred_region
                loop: start=0, step=1, limit=1
                $region98: #{forward.7} parent=96 // loop_pre_header
                  _
                $region99: #{forward.7} parent=96 // loop_header
                  %s552 = sphi 0, %s556
                  %p553 = scmp.ge.s32.totalorder %s552, 1
                  %s557 = sphi %s509, %s509
                  %s558 = sphi %s514, %s514
                $region100: #{forward.7} parent=96 // loop_header_branch
                  %555 = sbr.rel (%p553) target = $region104
                $region101: #{forward.7} parent=96 // loop_body
                  %v559 = vld [vmem:[%s557] sm:$0xff]
                  %560 = vst [vmem:[%s558] sm:$0xff] %v559
                  %v561 = vld [vmem:[%s557 + $0x8] sm:$0xff]
                  %562 = vst [vmem:[%s558 + $0x18] sm:$0xff] %v561
                  %v563 = vld [vmem:[%s557 + $0x10] sm:$0xff]
                  %564 = vst [vmem:[%s558 + $0x30] sm:$0xff] %v563
                  %v565 = vld [vmem:[%s557 + $0x18] sm:$0xff]
                  %566 = vst [vmem:[%s558 + $0x48] sm:$0xff] %v565
                  %v567 = vld [vmem:[%s557 + $0x20] sm:$0xff]
                  %568 = vst [vmem:[%s558 + $0x60] sm:$0xff] %v567
                  %v569 = vld [vmem:[%s557 + $0x28] sm:$0xff]
                  %570 = vst [vmem:[%s558 + $0x78] sm:$0xff] %v569
                  %v571 = vld [vmem:[%s557 + $0x30] sm:$0xff]
                  %572 = vst [vmem:[%s558 + $0x90] sm:$0xff] %v571
                  %v573 = vld [vmem:[%s557 + $0x38] sm:$0xff]
                  %574 = vst [vmem:[%s558 + $0xa8] sm:$0xff] %v573
                  %v575 = vld [vmem:[%s557 + $0x40] sm:$0xff]
                  %576 = vst [vmem:[%s558 + $0xc0] sm:$0xff] %v575
                $region102: #{forward.7} parent=96 // loop_footer
                  %s556 = sadd.s32 1, %s552
                $region103: #{forward.7} parent=96 // loop_footer_branch
                  %551 = sbr.rel target = $region99
                $region104: #{forward.7} parent=96 // loop_exit
                  _
              $region97: #{forward.7} parent=81 // pred_fallthru
                _
              // Predicated region
              $region105: #{forward.7} parent=81 // pred_check
                _
              $region106: #{forward.7} parent=81 // pred_check_branch
                %578 = sbr.rel target = $region108
              $region107: #{forward.7} parent=81 // pred_region
                _
              $region108: #{forward.7} parent=81 // pred_fallthru
                _
            $region82: #{forward.7} parent=77 // pred_fallthru
              _
            // Predicated region
            $region83: #{forward.7} parent=77 // pred_check
              _
            $region84: #{forward.7} parent=77 // pred_check_branch
              %520 = sbr.rel target = $region86
            $region85: #{forward.7} parent=77 // pred_region
              %s522 = ssub.s32 256, 1
              loop: start=0, step=1, limit=1
              $region87: #{forward.7} parent=85 // loop_pre_header
                _
              $region88: #{forward.7} parent=85 // loop_header
                %s524 = sphi 0, %s528
                %p525 = scmp.ge.s32.totalorder %s524, 1
                %s529 = sphi %s509, %s509
                %s530 = sphi %s514, %s514
              $region89: #{forward.7} parent=85 // loop_header_branch
                %527 = sbr.rel (%p525) target = $region93
              $region90: #{forward.7} parent=85 // loop_body
                %v531 = vld [vmem:[%s529] sm:%s522]
                %532 = vst [vmem:[%s530] sm:%s522] %v531
                %v533 = vld [vmem:[%s529 + $0x8] sm:%s522]
                %534 = vst [vmem:[%s530 + $0x18] sm:%s522] %v533
                %v535 = vld [vmem:[%s529 + $0x10] sm:%s522]
                %536 = vst [vmem:[%s530 + $0x30] sm:%s522] %v535
                %v537 = vld [vmem:[%s529 + $0x18] sm:%s522]
                %538 = vst [vmem:[%s530 + $0x48] sm:%s522] %v537
                %v539 = vld [vmem:[%s529 + $0x20] sm:%s522]
                %540 = vst [vmem:[%s530 + $0x60] sm:%s522] %v539
                %v541 = vld [vmem:[%s529 + $0x28] sm:%s522]
                %542 = vst [vmem:[%s530 + $0x78] sm:%s522] %v541
                %v543 = vld [vmem:[%s529 + $0x30] sm:%s522]
                %544 = vst [vmem:[%s530 + $0x90] sm:%s522] %v543
                %v545 = vld [vmem:[%s529 + $0x38] sm:%s522]
                %546 = vst [vmem:[%s530 + $0xa8] sm:%s522] %v545
                %v547 = vld [vmem:[%s529 + $0x40] sm:%s522]
                %548 = vst [vmem:[%s530 + $0xc0] sm:%s522] %v547
              $region91: #{forward.7} parent=85 // loop_footer
                %s528 = sadd.s32 1, %s524
              $region92: #{forward.7} parent=85 // loop_footer_branch
                %523 = sbr.rel target = $region88
              $region93: #{forward.7} parent=85 // loop_exit
                _
            $region86: #{forward.7} parent=77 // pred_fallthru
              _
          $region78: #{forward.7} parent=73 // pred_fallthru
            _
          %579 = vnop
        $region74: #{forward.7} parent=61 // pred_fallthru
          _
      $region62: #{forward.7} parent=5 // pred_fallthru
        _
      %p580 = scmp.le.s32.totalorder 2, %s9
      // Predicated region
      $region109: #{forward.7} parent=5 // pred_check
        %p581 = pneg %p580
      $region110: #{forward.7} parent=5 // pred_check_branch
        %583 = sbr.rel (%p581) target = $region112
      $region111: #{forward.7} parent=5 // pred_region
        %s584 = ssub.s32 %s9, 2
        // Predicated region
        $region113: #{forward.7} parent=111 // pred_check
          %p585 = pneg %p85
        $region114: #{forward.7} parent=111 // pred_check_branch
          %587 = sbr.rel (%p585) target = $region116
        $region115: #{forward.7} parent=111 // pred_region
          %s588 = sand.u32 %s70, 1
          %s589 = sand.u32 %s70, 1
          %s590 = smul.addr %s589, 72
          %s591 = scalar_lea.vmem [#allocation5], %s590
        $region116: #{forward.7} parent=111 // pred_fallthru
          _
      $region112: #{forward.7} parent=5 // pred_fallthru
        _
    $region6: #{forward.7} parent=1 // loop_footer
      %s13 = sadd.s32 1, %s9
    $region7: #{forward.7} parent=1 // loop_footer_branch
      %8 = sbr.rel target = $region3
    $region8: #{forward.7} parent=1 // loop_exit
      _
    %592 = vsyncpa [#allocation3], 1
    %s593 = scalar_lea.sflag [#allocation3], 1
    %594 = vsyncpa %s593, 1

// kernel: forward.8
$region0: #{forward.8}
  #allocation0 [shape = 'u32[]', space=smem, size = 0x4, offset = 0x4, fixed_abs, tag = 'smem constant byte address 0x4 - core index']
  #allocation1 [shape = 'u32[72,128]{1,0:T(1,128)}', space=vmem, size = 0x9000, scoped, tag = 'internal scratch']
  %s0 = inlined_call_operand.vmem [shape: f32[3,8,32], index: 0, kind: input, shape index: {}]
  %s1 = inlined_call_operand.vmem [shape: f32[3,8,1], index: 1, kind: input, shape index: {}]
  %s2 = inlined_call_operand.vmem [shape: bf16[32,4608], index: 2, kind: input, shape index: {}]
  %s3 = inlined_call_operand.vmem [shape: bf16[8,4608], index: 3, kind: output, shape index: {}]
  %s4 = sld [smem:[#allocation0]]
  $region68: #{forward.8} parent=0
    _
  %s6 = ssub.s32 1, %s4
  %s7 = scalar_select 0, %s6, %s4
  $region1: #{forward.8} parent=0
    #allocation2 [shape = 'u8[65536]{0}', space=vmem, size = 0x10000, scoped, tag = 'input window, operand 2']
    loop: start=0, step=1, limit=11
    $region2: #{forward.8} parent=1 // loop_pre_header
      _
    $region3: #{forward.8} parent=1 // loop_header
      %s9 = sphi 0, %s13
      %p10 = scmp.ge.s32.totalorder %s9, 11
      %s17 = sphi 0, %s17
      %s19 = sphi 0, %s17
      %s20 = sphi 0, %s19
      %s34 = sphi 0, %s20
      %s38 = sphi 0, %s38
      %s40 = sphi 0, %s38
      %s41 = sphi 0, %s40
      %s55 = sphi 0, %s41
      %s61 = sphi 0, %s63
      %s64 = sphi 0, %s61
      %s65 = sphi 0, %s64
      %s81 = sphi 0, %s65
      %s87 = sphi 0, %s89
      %s90 = sphi 0, %s87
      %s91 = sphi 0, %s90
      %s107 = sphi 0, %s91
    $region4: #{forward.8} parent=1 // loop_header_branch
      %12 = sbr.rel (%p10) target = $region8
    $region5: #{forward.8} parent=1 // loop_body
      %s14 = ssub.s32 %s9, 1
      %s15 = ssub.s32 %s9, 2
      %s16 = sadd.s32 %s9, 1
      %s18 = sadd.s32 %s17, 1
      %p21 = scmp.eq.s32.totalorder %s9, 8
      %p22 = scmp.ne.s32.totalorder %s17, %s19
      %p23 = scmp.eq.s32.totalorder %s9, 0
      %p24 = por %p22, %p23
      %p25 = scmp.ne.s32.totalorder %s17, %s19
      %p26 = scmp.eq.s32.totalorder %s14, 8
      %p27 = por %p25, %p26
      %p28 = scmp.ne.s32.totalorder %s19, %s20
      %p29 = scmp.eq.s32.totalorder %s14, 0
      %p30 = por %p28, %p29
      %p31 = scmp.ne.s32.totalorder %s19, %s20
      %p32 = scmp.eq.s32.totalorder %s15, 8
      %p33 = por %p31, %p32
      %p35 = scmp.ne.s32.totalorder %s20, %s34
      %p36 = scmp.eq.s32.totalorder %s15, 0
      %p37 = por %p35, %p36
      %s39 = sadd.s32 %s38, 1
      %p42 = scmp.eq.s32.totalorder %s9, 8
      %p43 = scmp.ne.s32.totalorder %s38, %s40
      %p44 = scmp.eq.s32.totalorder %s9, 0
      %p45 = por %p43, %p44
      %p46 = scmp.ne.s32.totalorder %s38, %s40
      %p47 = scmp.eq.s32.totalorder %s14, 8
      %p48 = por %p46, %p47
      %p49 = scmp.ne.s32.totalorder %s40, %s41
      %p50 = scmp.eq.s32.totalorder %s14, 0
      %p51 = por %p49, %p50
      %p52 = scmp.ne.s32.totalorder %s40, %s41
      %p53 = scmp.eq.s32.totalorder %s15, 8
      %p54 = por %p52, %p53
      %p56 = scmp.ne.s32.totalorder %s41, %s55
      %p57 = scmp.eq.s32.totalorder %s15, 0
      %p58 = por %p56, %p57
      %s59 = ssub.s32 %s9, %s16
      %p60 = scmp.eq.s32.totalorder %s59, 0
      %s62 = sadd.s32 %s61, 1
      %s63 = scalar_select %p60, %s61, %s62
      %p66 = pneg %p60
      %p67 = scmp.eq.s32.totalorder %s9, 8
      %p68 = por %p66, %p67
      %p69 = scmp.ne.s32.totalorder %s61, %s64
      %p70 = scmp.eq.s32.totalorder %s9, 0
      %p71 = por %p69, %p70
      %p72 = scmp.ne.s32.totalorder %s61, %s64
      %p73 = scmp.eq.s32.totalorder %s14, 8
      %p74 = por %p72, %p73
      %p75 = scmp.ne.s32.totalorder %s64, %s65
      %p76 = scmp.eq.s32.totalorder %s14, 0
      %p77 = por %p75, %p76
      %p78 = scmp.ne.s32.totalorder %s64, %s65
      %p79 = scmp.eq.s32.totalorder %s15, 8
      %p80 = por %p78, %p79
      %p82 = scmp.ne.s32.totalorder %s65, %s81
      %p83 = scmp.eq.s32.totalorder %s15, 0
      %p84 = por %p82, %p83
      %s85 = ssub.s32 %s9, %s16
      %p86 = scmp.eq.s32.totalorder %s85, 0
      %s88 = sadd.s32 %s87, 1
      %s89 = scalar_select %p86, %s87, %s88
      %p92 = pneg %p86
      %p93 = scmp.eq.s32.totalorder %s9, 8
      %p94 = por %p92, %p93
      %p95 = scmp.ne.s32.totalorder %s87, %s90
      %p96 = scmp.eq.s32.totalorder %s9, 0
      %p97 = por %p95, %p96
      %p98 = scmp.ne.s32.totalorder %s87, %s90
      %p99 = scmp.eq.s32.totalorder %s14, 8
      %p100 = por %p98, %p99
      %p101 = scmp.ne.s32.totalorder %s90, %s91
      %p102 = scmp.eq.s32.totalorder %s14, 0
      %p103 = por %p101, %p102
      %p104 = scmp.ne.s32.totalorder %s90, %s91
      %p105 = scmp.eq.s32.totalorder %s15, 8
      %p106 = por %p104, %p105
      %p108 = scmp.ne.s32.totalorder %s91, %s107
      %p109 = scmp.eq.s32.totalorder %s15, 0
      %p110 = por %p108, %p109
      %p111 = scmp.le.s32.totalorder 1, %s9
      %p112 = scmp.lt.s32.totalorder %s9, 10
      %p113 = pnand %p111, %p112
      %p114 = pneg %p113
      // Predicated region
      $region9: #{forward.8} parent=5 // pred_check
        _
      $region10: #{forward.8} parent=5 // pred_check_branch
        %116 = sbr.rel (%p113) target = $region12
      $region11: #{forward.8} parent=5 // pred_region
        %s117 = ssub.s32 %s9, 1
        // Predicated region
        $region13: #{forward.8} parent=11 // pred_check
          %p118 = pneg %p30
        $region14: #{forward.8} parent=11 // pred_check_branch
          %120 = sbr.rel (%p118) target = $region16
        $region15: #{forward.8} parent=11 // pred_region
          _
        $region16: #{forward.8} parent=11 // pred_fallthru
          _
        // Predicated region
        $region17: #{forward.8} parent=11 // pred_check
          %p121 = pneg %p51
        $region18: #{forward.8} parent=11 // pred_check_branch
          %123 = sbr.rel (%p121) target = $region20
        $region19: #{forward.8} parent=11 // pred_region
          _
        $region20: #{forward.8} parent=11 // pred_fallthru
          _
      $region12: #{forward.8} parent=5 // pred_fallthru
        _
      %p124 = scmp.lt.s32.totalorder %s9, 9
      // Predicated region
      $region21: #{forward.8} parent=5 // pred_check
        %p125 = pneg %p124
      $region22: #{forward.8} parent=5 // pred_check_branch
        %127 = sbr.rel (%p125) target = $region24
      $region23: #{forward.8} parent=5 // pred_region
        // Predicated region
        $region25: #{forward.8} parent=23 // pred_check
          %p128 = pneg %p71
        $region26: #{forward.8} parent=23 // pred_check_branch
          %130 = sbr.rel (%p128) target = $region28
        $region27: #{forward.8} parent=23 // pred_region
          %s131 = sand.u32 %s61, 1
          %s132 = sand.u32 %s61, 1
          %s133 = smul.addr %s132, 64
          %s134 = scalar_lea.vmem [#allocation2], %s133
          %s135 = smul.u32 4, %s9
          %s136 = smul.addr %s135, 4
          %s137 = scalar_lea.vmem %s2, %s136
          // Predicated region
          $region29: #{forward.8} parent=27 // pred_check
            _
          $region30: #{forward.8} parent=27 // pred_check_branch
            %139 = sbr.rel (0) target = $region32
          $region31: #{forward.8} parent=27 // pred_region
            // Predicated region
            $region33: #{forward.8} parent=31 // pred_check
              _
            $region34: #{forward.8} parent=31 // pred_check_branch
              %141 = sbr.rel (0) target = $region36
            $region35: #{forward.8} parent=31 // pred_region
              loop: start=0, step=1, limit=1
              $region37: #{forward.8} parent=35 // loop_pre_header
                _
              $region38: #{forward.8} parent=35 // loop_header
                %s143 = sphi 0, %s147
                %p144 = scmp.ge.s32.totalorder %s143, 1
                %s148 = sphi %s137, %s137
                %s149 = sphi %s134, %s134
              $region39: #{forward.8} parent=35 // loop_header_branch
                %146 = sbr.rel (%p144) target = $region43
              $region40: #{forward.8} parent=35 // loop_body
                %v150 = vld [vmem:[%s148] sm:$0xff]
                %151 = vst [vmem:[%s149] sm:$0xff] %v150
                %v152 = vld [vmem:[%s148 + $0x8] sm:$0xff]
                %153 = vst [vmem:[%s149 + $0x8] sm:$0xff] %v152
                %v154 = vld [vmem:[%s148 + $0x90] sm:$0xff]
                %155 = vst [vmem:[%s149 + $0x10] sm:$0xff] %v154
                %v156 = vld [vmem:[%s148 + $0x98] sm:$0xff]
                %157 = vst [vmem:[%s149 + $0x18] sm:$0xff] %v156
                %v158 = vld [vmem:[%s148 + $0x120] sm:$0xff]
                %159 = vst [vmem:[%s149 + $0x20] sm:$0xff] %v158
                %v160 = vld [vmem:[%s148 + $0x128] sm:$0xff]
                %161 = vst [vmem:[%s149 + $0x28] sm:$0xff] %v160
                %v162 = vld [vmem:[%s148 + $0x1b0] sm:$0xff]
                %163 = vst [vmem:[%s149 + $0x30] sm:$0xff] %v162
                %v164 = vld [vmem:[%s148 + $0x1b8] sm:$0xff]
                %165 = vst [vmem:[%s149 + $0x38] sm:$0xff] %v164
              $region41: #{forward.8} parent=35 // loop_footer
                %s147 = sadd.s32 1, %s143
              $region42: #{forward.8} parent=35 // loop_footer_branch
                %142 = sbr.rel target = $region38
              $region43: #{forward.8} parent=35 // loop_exit
                _
            $region36: #{forward.8} parent=31 // pred_fallthru
              _
            // Predicated region
            $region44: #{forward.8} parent=31 // pred_check
              _
            $region45: #{forward.8} parent=31 // pred_check_branch
              %167 = sbr.rel target = $region47
            $region46: #{forward.8} parent=31 // pred_region
              _
            $region47: #{forward.8} parent=31 // pred_fallthru
              _
          $region32: #{forward.8} parent=27 // pred_fallthru
            _
          %168 = vnop
        $region28: #{forward.8} parent=23 // pred_fallthru
          _
      $region24: #{forward.8} parent=5 // pred_fallthru
        _
      %p169 = scmp.le.s32.totalorder 1, %s9
      %p170 = scmp.lt.s32.totalorder %s9, 10
      %p171 = pnand %p169, %p170
      %p172 = pneg %p171
      // Predicated region
      $region48: #{forward.8} parent=5 // pred_check
        _
      $region49: #{forward.8} parent=5 // pred_check_branch
        %174 = sbr.rel (%p171) target = $region51
      $region50: #{forward.8} parent=5 // pred_region
        %s175 = ssub.s32 %s9, 1
        %s176 = sand.u32 %s64, 1
        %s177 = sand.u32 %s64, 1
        %s178 = smul.addr %s177, 64
        %s179 = scalar_lea.vmem [#allocation2], %s178
        // Predicated region
        $region52: #{forward.8} parent=50 // pred_check
          %p180 = pneg %p77
        $region53: #{forward.8} parent=50 // pred_check_branch
          %182 = sbr.rel (%p180) target = $region55
        $region54: #{forward.8} parent=50 // pred_region
          _
        $region55: #{forward.8} parent=50 // pred_fallthru
          _
        %p183 = pneg %p30
        %p184 = pneg %p27
        %p185 = pneg %p51
        %p186 = pneg %p48
        %s187 = sand.u32 %s64, 1
        %s188 = sand.u32 %s64, 1
        %s189 = smul.addr %s188, 64
        %s190 = scalar_lea.vmem [#allocation2], %s189
        %p191 = pneg %p77
        %p192 = pneg %p74
        %p193 = pneg %p103
        %p194 = pneg %p100
        %s195 = smul.u32 4, %s14
        %p196 = scmp.lt.s32.totalorder %s195, 35
        %s197 = scalar_select %p196, %s195, 35
        %s198 = smul.addr %s197, 4
        %s199 = scalar_lea.vmem %s3, %s198
        %s200 = smul.u32 4, %s14
        %s201 = smul.u32 4, %s14
        %p202 = scmp.lt.s32.totalorder %s201, 35
        %s203 = scalar_select %p202, %s201, 35
        %s204 = smul.addr %s203, 4
        %s205 = scalar_lea.vmem %s3, %s204
        %s206 = smul.u32 4, %s14
        %p207 = scmp.ge.s32.totalorder %s14, 3
        %s208 = scalar_select %p207, 1, 0
        %p209 = scmp.ge.s32.totalorder %s14, 6
        %s210 = scalar_select %p209, 1, 0
        %s211 = sadd.s32 %s208, %s210
        %s212 = smul.u32 %s211, 8
        %s213 = scalar_lea.vmem %s0, %s212
        %v214 = vld [vmem:[%s213] sm:$0xff]
        %v215 = vld [vmem:[%s179] sm:$0xff]
        %v216 = vld [vmem:[%s179 + $0x8] sm:$0xff]
        %v217 = vld [vmem:[%s179 + $0x10] sm:$0xff]
        %v218 = vld [vmem:[%s179 + $0x18] sm:$0xff]
        %v219 = vld [vmem:[%s179 + $0x20] sm:$0xff]
        %v220 = vld [vmem:[%s179 + $0x28] sm:$0xff]
        %v221 = vld [vmem:[%s179 + $0x30] sm:$0xff]
        %v222 = vld [vmem:[%s179 + $0x38] sm:$0xff]
        %v223 = vunpack.c.l.bf16 %v215
        %v224 = vunpack.c.h.bf16 %v215
        %v225 = vunpack.c.l.bf16 %v216
        %v226 = vunpack.c.h.bf16 %v216
        %v227 = vunpack.c.l.bf16 %v217
        %v228 = vunpack.c.h.bf16 %v217
        %v229 = vunpack.c.l.bf16 %v218
        %v230 = vunpack.c.h.bf16 %v218
        %v231 = vunpack.c.l.bf16 %v219
        %v232 = vunpack.c.h.bf16 %v219
        %v233 = vunpack.c.l.bf16 %v220
        %v234 = vunpack.c.h.bf16 %v220
        %v235 = vunpack.c.l.bf16 %v221
        %v236 = vunpack.c.h.bf16 %v221
        %v237 = vunpack.c.l.bf16 %v222
        %v238 = vunpack.c.h.bf16 %v222
        %s239 = scalar_lea.vmem %s1, %s212
        %v240 = vld [vmem:[%s239] sm:$0xff]
        %242 = vset.pattern.permute.xlu0 0
        %243 = vperm.xlu0 %242, %v240
        %v244 = vpop.permute.xlu0 %243
        %vm246 = vcmask 261120
        %v248 = vsel %vm246, %v214, 0
        %250 = vmatpush.msra.mxu0 0.0
        %251 = vmatpush.msra.mxu0 0.0
        %252 = vmatpush.msra.mxu0 0.0
        %253 = vmatpush.msra.mxu0 0.0
        %254 = vmatpush.msra.mxu0 0.0
        %255 = vmatpush.msra.mxu0 0.0
        %256 = vmatpush.msra.mxu0 0.0
        %257 = vmatpush.msra.mxu0 0.0
        %258 = vmatpush.msra.mxu0 0.0
        %259 = vmatpush.msra.mxu0 0.0
        %260 = vmatpush.msra.mxu0 0.0
        %261 = vmatpush.msra.mxu0 0.0
        %262 = vmatpush.msra.mxu0 %v235
        %263 = vmatpush.msra.mxu0 %v231
        %264 = vmatpush.msra.mxu0 %v227
        %265 = vmatpush.msra.mxu0 %v223
        %266 = vmatmul.f32.gmra.mxu0 %v248
        %v267 = vpop.f32.mrf.mxu0
        %v268 = vadd.f32 %v244, %v267
        %269 = vdwg.mxu0
        %270 = vmatpush.msra.mxu0 0.0
        %271 = vmatpush.msra.mxu0 0.0
        %272 = vmatpush.msra.mxu0 0.0
        %273 = vmatpush.msra.mxu0 0.0
        %274 = vmatpush.msra.mxu0 0.0
        %275 = vmatpush.msra.mxu0 0.0
        %276 = vmatpush.msra.mxu0 0.0
        %277 = vmatpush.msra.mxu0 0.0
        %278 = vmatpush.msra.mxu0 0.0
        %279 = vmatpush.msra.mxu0 0.0
        %280 = vmatpush.msra.mxu0 0.0
        %281 = vmatpush.msra.mxu0 0.0
        %282 = vmatpush.msra.mxu0 %v236
        %283 = vmatpush.msra.mxu0 %v232
        %284 = vmatpush.msra.mxu0 %v228
        %285 = vmatpush.msra.mxu0 %v224
        %286 = vmatmul.f32.gmra.mxu0 %v248
        %v287 = vpop.f32.mrf.mxu0
        %v288 = vadd.f32 %v244, %v287
        %289 = vdwg.mxu0
        %290 = vmatpush.msra.mxu0 0.0
        %291 = vmatpush.msra.mxu0 0.0
        %292 = vmatpush.msra.mxu0 0.0
        %293 = vmatpush.msra.mxu0 0.0
        %294 = vmatpush.msra.mxu0 0.0
        %295 = vmatpush.msra.mxu0 0.0
        %296 = vmatpush.msra.mxu0 0.0
        %297 = vmatpush.msra.mxu0 0.0
        %298 = vmatpush.msra.mxu0 0.0
        %299 = vmatpush.msra.mxu0 0.0
        %300 = vmatpush.msra.mxu0 0.0
        %301 = vmatpush.msra.mxu0 0.0
        %302 = vmatpush.msra.mxu0 %v237
        %303 = vmatpush.msra.mxu0 %v233
        %304 = vmatpush.msra.mxu0 %v229
        %305 = vmatpush.msra.mxu0 %v225
        %306 = vmatmul.f32.gmra.mxu0 %v248
        %v307 = vpop.f32.mrf.mxu0
        %v308 = vadd.f32 %v244, %v307
        %309 = vdwg.mxu0
        %310 = vmatpush.msra.mxu0 0.0
        %311 = vmatpush.msra.mxu0 0.0
        %312 = vmatpush.msra.mxu0 0.0
        %313 = vmatpush.msra.mxu0 0.0
        %314 = vmatpush.msra.mxu0 0.0
        %315 = vmatpush.msra.mxu0 0.0
        %316 = vmatpush.msra.mxu0 0.0
        %317 = vmatpush.msra.mxu0 0.0
        %318 = vmatpush.msra.mxu0 0.0
        %319 = vmatpush.msra.mxu0 0.0
        %320 = vmatpush.msra.mxu0 0.0
        %321 = vmatpush.msra.mxu0 0.0
        %322 = vmatpush.msra.mxu0 %v238
        %323 = vmatpush.msra.mxu0 %v234
        %324 = vmatpush.msra.mxu0 %v230
        %325 = vmatpush.msra.mxu0 %v226
        %326 = vmatmul.f32.gmra.mxu0 %v248
        %v327 = vpop.f32.mrf.mxu0
        %v328 = vadd.f32 %v244, %v327
        %329 = vdwg.mxu0
        %vm330 = vcmp.ge.f32.partialorder %v268, 0.0
        %vm331 = vcmp.ge.f32.partialorder %v288, 0.0
        %vm332 = vcmp.ge.f32.partialorder %v308, 0.0
        %vm333 = vcmp.ge.f32.partialorder %v328, 0.0
        %v334 = vmul.f32 %v268, 0.1
        %v335 = vmul.f32 %v288, 0.1
        %v336 = vmul.f32 %v308, 0.1
        %v337 = vmul.f32 %v328, 0.1
        %v338 = vsel %vm330, %v268, %v334
        %v339 = vsel %vm331, %v288, %v335
        %v340 = vsel %vm332, %v308, %v336
        %v341 = vsel %vm333, %v328, %v337
        %v342 = vpack.c.bf16 %v339, %v338
        %v343 = vpack.c.bf16 %v341, %v340
        %344 = vst [vmem:[%s205] sm:$0xff] %v342
        %345 = vst [vmem:[%s205 + $0x8] sm:$0xff] %v343
        %s346 = smul.u32 4, %s14
        %p347 = scmp.lt.s32.totalorder %s346, 35
        %s348 = scalar_select %p347, %s346, 35
        %s349 = smul.addr %s348, 4
        %s350 = scalar_lea.vmem %s3, %s349
        // Predicated region
        $region56: #{forward.8} parent=50 // pred_check
          %p351 = pneg %p100
        $region57: #{forward.8} parent=50 // pred_check_branch
          %353 = sbr.rel (%p351) target = $region59
        $region58: #{forward.8} parent=50 // pred_region
          %s354 = smul.u32 4, %s14
        $region59: #{forward.8} parent=50 // pred_fallthru
          _
      $region51: #{forward.8} parent=5 // pred_fallthru
        _
      %p355 = scmp.le.s32.totalorder 2, %s9
      // Predicated region
      $region60: #{forward.8} parent=5 // pred_check
        %p356 = pneg %p355
      $region61: #{forward.8} parent=5 // pred_check_branch
        %358 = sbr.rel (%p356) target = $region63
      $region62: #{forward.8} parent=5 // pred_region
        %s359 = ssub.s32 %s9, 2
        // Predicated region
        $region64: #{forward.8} parent=62 // pred_check
          %p360 = pneg %p106
        $region65: #{forward.8} parent=62 // pred_check_branch
          %362 = sbr.rel (%p360) target = $region67
        $region66: #{forward.8} parent=62 // pred_region
          %s363 = smul.u32 4, %s15
          %p364 = scmp.lt.s32.totalorder %s363, 35
          %s365 = scalar_select %p364, %s363, 35
          %s366 = smul.addr %s365, 4
          %s367 = scalar_lea.vmem %s3, %s366
        $region67: #{forward.8} parent=62 // pred_fallthru
          _
      $region63: #{forward.8} parent=5 // pred_fallthru
        _
    $region6: #{forward.8} parent=1 // loop_footer
      %s13 = sadd.s32 1, %s9
    $region7: #{forward.8} parent=1 // loop_footer_branch
      %8 = sbr.rel target = $region3
    $region8: #{forward.8} parent=1 // loop_exit
      _

// kernel: forward.9
$region0: #{forward.9}
  #allocation0 [shape = 'u32[]', space=smem, size = 0x4, offset = 0x4, fixed_abs, tag = 'smem constant byte address 0x4 - core index']
  #allocation1 [shape = 'u32[72,128]{1,0:T(1,128)}', space=vmem, size = 0x9000, scoped, tag = 'internal scratch']
  %s0 = inlined_call_operand.vmem [shape: f32[3,8,224], index: 0, kind: input, shape index: {}]
  %s1 = inlined_call_operand.vmem [shape: f32[3,8,1], index: 1, kind: input, shape index: {}]
  %s2 = inlined_call_operand.vmem [shape: bf16[224,3072], index: 2, kind: input, shape index: {}]
  %s3 = inlined_call_operand.vmem [shape: bf16[8,3072], index: 3, kind: output, shape index: {}]
  %s4 = sld [smem:[#allocation0]]
  $region68: #{forward.9} parent=0
    _
  %s6 = ssub.s32 1, %s4
  %s7 = scalar_select 0, %s6, %s4
  $region1: #{forward.9} parent=0
    #allocation2 [shape = 'u8[458752]{0}', space=vmem, size = 0x70000, scoped, tag = 'input window, operand 2']
    loop: start=0, step=1, limit=8
    $region2: #{forward.9} parent=1 // loop_pre_header
      _
    $region3: #{forward.9} parent=1 // loop_header
      %s9 = sphi 0, %s13
      %p10 = scmp.ge.s32.totalorder %s9, 8
      %s17 = sphi 0, %s17
      %s19 = sphi 0, %s17
      %s20 = sphi 0, %s19
      %s34 = sphi 0, %s20
      %s38 = sphi 0, %s38
      %s40 = sphi 0, %s38
      %s41 = sphi 0, %s40
      %s55 = sphi 0, %s41
      %s61 = sphi 0, %s63
      %s64 = sphi 0, %s61
      %s65 = sphi 0, %s64
      %s81 = sphi 0, %s65
      %s87 = sphi 0, %s89
      %s90 = sphi 0, %s87
      %s91 = sphi 0, %s90
      %s107 = sphi 0, %s91
    $region4: #{forward.9} parent=1 // loop_header_branch
      %12 = sbr.rel (%p10) target = $region8
    $region5: #{forward.9} parent=1 // loop_body
      %s14 = ssub.s32 %s9, 1
      %s15 = ssub.s32 %s9, 2
      %s16 = sadd.s32 %s9, 1
      %s18 = sadd.s32 %s17, 1
      %p21 = scmp.eq.s32.totalorder %s9, 5
      %p22 = scmp.ne.s32.totalorder %s17, %s19
      %p23 = scmp.eq.s32.totalorder %s9, 0
      %p24 = por %p22, %p23
      %p25 = scmp.ne.s32.totalorder %s17, %s19
      %p26 = scmp.eq.s32.totalorder %s14, 5
      %p27 = por %p25, %p26
      %p28 = scmp.ne.s32.totalorder %s19, %s20
      %p29 = scmp.eq.s32.totalorder %s14, 0
      %p30 = por %p28, %p29
      %p31 = scmp.ne.s32.totalorder %s19, %s20
      %p32 = scmp.eq.s32.totalorder %s15, 5
      %p33 = por %p31, %p32
      %p35 = scmp.ne.s32.totalorder %s20, %s34
      %p36 = scmp.eq.s32.totalorder %s15, 0
      %p37 = por %p35, %p36
      %s39 = sadd.s32 %s38, 1
      %p42 = scmp.eq.s32.totalorder %s9, 5
      %p43 = scmp.ne.s32.totalorder %s38, %s40
      %p44 = scmp.eq.s32.totalorder %s9, 0
      %p45 = por %p43, %p44
      %p46 = scmp.ne.s32.totalorder %s38, %s40
      %p47 = scmp.eq.s32.totalorder %s14, 5
      %p48 = por %p46, %p47
      %p49 = scmp.ne.s32.totalorder %s40, %s41
      %p50 = scmp.eq.s32.totalorder %s14, 0
      %p51 = por %p49, %p50
      %p52 = scmp.ne.s32.totalorder %s40, %s41
      %p53 = scmp.eq.s32.totalorder %s15, 5
      %p54 = por %p52, %p53
      %p56 = scmp.ne.s32.totalorder %s41, %s55
      %p57 = scmp.eq.s32.totalorder %s15, 0
      %p58 = por %p56, %p57
      %s59 = ssub.s32 %s9, %s16
      %p60 = scmp.eq.s32.totalorder %s59, 0
      %s62 = sadd.s32 %s61, 1
      %s63 = scalar_select %p60, %s61, %s62
      %p66 = pneg %p60
      %p67 = scmp.eq.s32.totalorder %s9, 5
      %p68 = por %p66, %p67
      %p69 = scmp.ne.s32.totalorder %s61, %s64
      %p70 = scmp.eq.s32.totalorder %s9, 0
      %p71 = por %p69, %p70
      %p72 = scmp.ne.s32.totalorder %s61, %s64
      %p73 = scmp.eq.s32.totalorder %s14, 5
      %p74 = por %p72, %p73
      %p75 = scmp.ne.s32.totalorder %s64, %s65
      %p76 = scmp.eq.s32.totalorder %s14, 0
      %p77 = por %p75, %p76
      %p78 = scmp.ne.s32.totalorder %s64, %s65
      %p79 = scmp.eq.s32.totalorder %s15, 5
      %p80 = por %p78, %p79
      %p82 = scmp.ne.s32.totalorder %s65, %s81
      %p83 = scmp.eq.s32.totalorder %s15, 0
      %p84 = por %p82, %p83
      %s85 = ssub.s32 %s9, %s16
      %p86 = scmp.eq.s32.totalorder %s85, 0
      %s88 = sadd.s32 %s87, 1
      %s89 = scalar_select %p86, %s87, %s88
      %p92 = pneg %p86
      %p93 = scmp.eq.s32.totalorder %s9, 5
      %p94 = por %p92, %p93
      %p95 = scmp.ne.s32.totalorder %s87, %s90
      %p96 = scmp.eq.s32.totalorder %s9, 0
      %p97 = por %p95, %p96
      %p98 = scmp.ne.s32.totalorder %s87, %s90
      %p99 = scmp.eq.s32.totalorder %s14, 5
      %p100 = por %p98, %p99
      %p101 = scmp.ne.s32.totalorder %s90, %s91
      %p102 = scmp.eq.s32.totalorder %s14, 0
      %p103 = por %p101, %p102
      %p104 = scmp.ne.s32.totalorder %s90, %s91
      %p105 = scmp.eq.s32.totalorder %s15, 5
      %p106 = por %p104, %p105
      %p108 = scmp.ne.s32.totalorder %s91, %s107
      %p109 = scmp.eq.s32.totalorder %s15, 0
      %p110 = por %p108, %p109
      %p111 = scmp.le.s32.totalorder 1, %s9
      %p112 = scmp.lt.s32.totalorder %s9, 7
      %p113 = pnand %p111, %p112
      %p114 = pneg %p113
      // Predicated region
      $region9: #{forward.9} parent=5 // pred_check
        _
      $region10: #{forward.9} parent=5 // pred_check_branch
        %116 = sbr.rel (%p113) target = $region12
      $region11: #{forward.9} parent=5 // pred_region
        %s117 = ssub.s32 %s9, 1
        // Predicated region
        $region13: #{forward.9} parent=11 // pred_check
          %p118 = pneg %p30
        $region14: #{forward.9} parent=11 // pred_check_branch
          %120 = sbr.rel (%p118) target = $region16
        $region15: #{forward.9} parent=11 // pred_region
          _
        $region16: #{forward.9} parent=11 // pred_fallthru
          _
        // Predicated region
        $region17: #{forward.9} parent=11 // pred_check
          %p121 = pneg %p51
        $region18: #{forward.9} parent=11 // pred_check_branch
          %123 = sbr.rel (%p121) target = $region20
        $region19: #{forward.9} parent=11 // pred_region
          _
        $region20: #{forward.9} parent=11 // pred_fallthru
          _
      $region12: #{forward.9} parent=5 // pred_fallthru
        _
      %p124 = scmp.lt.s32.totalorder %s9, 6
      // Predicated region
      $region21: #{forward.9} parent=5 // pred_check
        %p125 = pneg %p124
      $region22: #{forward.9} parent=5 // pred_check_branch
        %127 = sbr.rel (%p125) target = $region24
      $region23: #{forward.9} parent=5 // pred_region
        // Predicated region
        $region25: #{forward.9} parent=23 // pred_check
          %p128 = pneg %p71
        $region26: #{forward.9} parent=23 // pred_check_branch
          %130 = sbr.rel (%p128) target = $region28
        $region27: #{forward.9} parent=23 // pred_region
          %s131 = sand.u32 %s61, 1
          %s132 = sand.u32 %s61, 1
          %s133 = smul.addr %s132, 448
          %s134 = scalar_lea.vmem [#allocation2], %s133
          %s135 = smul.u32 4, %s9
          %s136 = smul.addr %s135, 4
          %s137 = scalar_lea.vmem %s2, %s136
          // Predicated region
          $region29: #{forward.9} parent=27 // pred_check
            _
          $region30: #{forward.9} parent=27 // pred_check_branch
            %139 = sbr.rel (0) target = $region32
          $region31: #{forward.9} parent=27 // pred_region
            // Predicated region
            $region33: #{forward.9} parent=31 // pred_check
              _
            $region34: #{forward.9} parent=31 // pred_check_branch
              %141 = sbr.rel (0) target = $region36
            $region35: #{forward.9} parent=31 // pred_region
              loop: start=0, step=1, limit=1
              $region37: #{forward.9} parent=35 // loop_pre_header
                _
              $region38: #{forward.9} parent=35 // loop_header
                %s143 = sphi 0, %s147
                %p144 = scmp.ge.s32.totalorder %s143, 1
                %s148 = sphi %s137, %s137
                %s149 = sphi %s134, %s134
              $region39: #{forward.9} parent=35 // loop_header_branch
                %146 = sbr.rel (%p144) target = $region43
              $region40: #{forward.9} parent=35 // loop_body
                %v150 = vld [vmem:[%s148] sm:$0xff]
                %151 = vst [vmem:[%s149] sm:$0xff] %v150
                %v152 = vld [vmem:[%s148 + $0x8] sm:$0xff]
                %153 = vst [vmem:[%s149 + $0x8] sm:$0xff] %v152
                %v154 = vld [vmem:[%s148 + $0x60] sm:$0xff]
                %155 = vst [vmem:[%s149 + $0x10] sm:$0xff] %v154
                %v156 = vld [vmem:[%s148 + $0x68] sm:$0xff]
                %157 = vst [vmem:[%s149 + $0x18] sm:$0xff] %v156
                %v158 = vld [vmem:[%s148 + $0xc0] sm:$0xff]
                %159 = vst [vmem:[%s149 + $0x20] sm:$0xff] %v158
                %v160 = vld [vmem:[%s148 + $0xc8] sm:$0xff]
                %161 = vst [vmem:[%s149 + $0x28] sm:$0xff] %v160
                %v162 = vld [vmem:[%s148 + $0x120] sm:$0xff]
                %163 = vst [vmem:[%s149 + $0x30] sm:$0xff] %v162
                %v164 = vld [vmem:[%s148 + $0x128] sm:$0xff]
                %165 = vst [vmem:[%s149 + $0x38] sm:$0xff] %v164
                %v166 = vld [vmem:[%s148 + $0x180] sm:$0xff]
                %167 = vst [vmem:[%s149 + $0x40] sm:$0xff] %v166
                %v168 = vld [vmem:[%s148 + $0x188] sm:$0xff]
                %169 = vst [vmem:[%s149 + $0x48] sm:$0xff] %v168
                %v170 = vld [vmem:[%s148 + $0x1e0] sm:$0xff]
                %171 = vst [vmem:[%s149 + $0x50] sm:$0xff] %v170
                %v172 = vld [vmem:[%s148 + $0x1e8] sm:$0xff]
                %173 = vst [vmem:[%s149 + $0x58] sm:$0xff] %v172
                %v174 = vld [vmem:[%s148 + $0x240] sm:$0xff]
                %175 = vst [vmem:[%s149 + $0x60] sm:$0xff] %v174
                %v176 = vld [vmem:[%s148 + $0x248] sm:$0xff]
                %177 = vst [vmem:[%s149 + $0x68] sm:$0xff] %v176
                %v178 = vld [vmem:[%s148 + $0x2a0] sm:$0xff]
                %179 = vst [vmem:[%s149 + $0x70] sm:$0xff] %v178
                %v180 = vld [vmem:[%s148 + $0x2a8] sm:$0xff]
                %181 = vst [vmem:[%s149 + $0x78] sm:$0xff] %v180
                %v182 = vld [vmem:[%s148 + $0x300] sm:$0xff]
                %183 = vst [vmem:[%s149 + $0x80] sm:$0xff] %v182
                %v184 = vld [vmem:[%s148 + $0x308] sm:$0xff]
                %185 = vst [vmem:[%s149 + $0x88] sm:$0xff] %v184
                %v186 = vld [vmem:[%s148 + $0x360] sm:$0xff]
                %187 = vst [vmem:[%s149 + $0x90] sm:$0xff] %v186
                %v188 = vld [vmem:[%s148 + $0x368] sm:$0xff]
                %189 = vst [vmem:[%s149 + $0x98] sm:$0xff] %v188
                %v190 = vld [vmem:[%s148 + $0x3c0] sm:$0xff]
                %191 = vst [vmem:[%s149 + $0xa0] sm:$0xff] %v190
                %v192 = vld [vmem:[%s148 + $0x3c8] sm:$0xff]
                %193 = vst [vmem:[%s149 + $0xa8] sm:$0xff] %v192
                %v194 = vld [vmem:[%s148 + $0x420] sm:$0xff]
                %195 = vst [vmem:[%s149 + $0xb0] sm:$0xff] %v194
                %v196 = vld [vmem:[%s148 + $0x428] sm:$0xff]
                %197 = vst [vmem:[%s149 + $0xb8] sm:$0xff] %v196
                %v198 = vld [vmem:[%s148 + $0x480] sm:$0xff]
                %199 = vst [vmem:[%s149 + $0xc0] sm:$0xff] %v198
                %v200 = vld [vmem:[%s148 + $0x488] sm:$0xff]
                %201 = vst [vmem:[%s149 + $0xc8] sm:$0xff] %v200
                %v202 = vld [vmem:[%s148 + $0x4e0] sm:$0xff]
                %203 = vst [vmem:[%s149 + $0xd0] sm:$0xff] %v202
                %v204 = vld [vmem:[%s148 + $0x4e8] sm:$0xff]
                %205 = vst [vmem:[%s149 + $0xd8] sm:$0xff] %v204
                %v206 = vld [vmem:[%s148 + $0x540] sm:$0xff]
                %207 = vst [vmem:[%s149 + $0xe0] sm:$0xff] %v206
                %v208 = vld [vmem:[%s148 + $0x548] sm:$0xff]
                %209 = vst [vmem:[%s149 + $0xe8] sm:$0xff] %v208
                %v210 = vld [vmem:[%s148 + $0x5a0] sm:$0xff]
                %211 = vst [vmem:[%s149 + $0xf0] sm:$0xff] %v210
                %v212 = vld [vmem:[%s148 + $0x5a8] sm:$0xff]
                %213 = vst [vmem:[%s149 + $0xf8] sm:$0xff] %v212
                %v214 = vld [vmem:[%s148 + $0x600] sm:$0xff]
                %215 = vst [vmem:[%s149 + $0x100] sm:$0xff] %v214
                %v216 = vld [vmem:[%s148 + $0x608] sm:$0xff]
                %217 = vst [vmem:[%s149 + $0x108] sm:$0xff] %v216
                %v218 = vld [vmem:[%s148 + $0x660] sm:$0xff]
                %219 = vst [vmem:[%s149 + $0x110] sm:$0xff] %v218
                %v220 = vld [vmem:[%s148 + $0x668] sm:$0xff]
                %221 = vst [vmem:[%s149 + $0x118] sm:$0xff] %v220
                %v222 = vld [vmem:[%s148 + $0x6c0] sm:$0xff]
                %223 = vst [vmem:[%s149 + $0x120] sm:$0xff] %v222
                %v224 = vld [vmem:[%s148 + $0x6c8] sm:$0xff]
                %225 = vst [vmem:[%s149 + $0x128] sm:$0xff] %v224
                %v226 = vld [vmem:[%s148 + $0x720] sm:$0xff]
                %227 = vst [vmem:[%s149 + $0x130] sm:$0xff] %v226
                %v228 = vld [vmem:[%s148 + $0x728] sm:$0xff]
                %229 = vst [vmem:[%s149 + $0x138] sm:$0xff] %v228
                %v230 = vld [vmem:[%s148 + $0x780] sm:$0xff]
                %231 = vst [vmem:[%s149 + $0x140] sm:$0xff] %v230
                %v232 = vld [vmem:[%s148 + $0x788] sm:$0xff]
                %233 = vst [vmem:[%s149 + $0x148] sm:$0xff] %v232
                %v234 = vld [vmem:[%s148 + $0x7e0] sm:$0xff]
                %235 = vst [vmem:[%s149 + $0x150] sm:$0xff] %v234
                %v236 = vld [vmem:[%s148 + $0x7e8] sm:$0xff]
                %237 = vst [vmem:[%s149 + $0x158] sm:$0xff] %v236
                %v238 = vld [vmem:[%s148 + $0x840] sm:$0xff]
                %239 = vst [vmem:[%s149 + $0x160] sm:$0xff] %v238
                %v240 = vld [vmem:[%s148 + $0x848] sm:$0xff]
                %241 = vst [vmem:[%s149 + $0x168] sm:$0xff] %v240
                %v242 = vld [vmem:[%s148 + $0x8a0] sm:$0xff]
                %243 = vst [vmem:[%s149 + $0x170] sm:$0xff] %v242
                %v244 = vld [vmem:[%s148 + $0x8a8] sm:$0xff]
                %245 = vst [vmem:[%s149 + $0x178] sm:$0xff] %v244
                %v246 = vld [vmem:[%s148 + $0x900] sm:$0xff]
                %247 = vst [vmem:[%s149 + $0x180] sm:$0xff] %v246
                %v248 = vld [vmem:[%s148 + $0x908] sm:$0xff]
                %249 = vst [vmem:[%s149 + $0x188] sm:$0xff] %v248
                %v250 = vld [vmem:[%s148 + $0x960] sm:$0xff]
                %251 = vst [vmem:[%s149 + $0x190] sm:$0xff] %v250
                %v252 = vld [vmem:[%s148 + $0x968] sm:$0xff]
                %253 = vst [vmem:[%s149 + $0x198] sm:$0xff] %v252
                %v254 = vld [vmem:[%s148 + $0x9c0] sm:$0xff]
                %255 = vst [vmem:[%s149 + $0x1a0] sm:$0xff] %v254
                %v256 = vld [vmem:[%s148 + $0x9c8] sm:$0xff]
                %257 = vst [vmem:[%s149 + $0x1a8] sm:$0xff] %v256
                %v258 = vld [vmem:[%s148 + $0xa20] sm:$0xff]
                %259 = vst [vmem:[%s149 + $0x1b0] sm:$0xff] %v258
                %v260 = vld [vmem:[%s148 + $0xa28] sm:$0xff]
                %261 = vst [vmem:[%s149 + $0x1b8] sm:$0xff] %v260
              $region41: #{forward.9} parent=35 // loop_footer
                %s147 = sadd.s32 1, %s143
              $region42: #{forward.9} parent=35 // loop_footer_branch
                %142 = sbr.rel target = $region38
              $region43: #{forward.9} parent=35 // loop_exit
                _
            $region36: #{forward.9} parent=31 // pred_fallthru
              _
            // Predicated region
            $region44: #{forward.9} parent=31 // pred_check
              _
            $region45: #{forward.9} parent=31 // pred_check_branch
              %263 = sbr.rel target = $region47
            $region46: #{forward.9} parent=31 // pred_region
              _
            $region47: #{forward.9} parent=31 // pred_fallthru
              _
          $region32: #{forward.9} parent=27 // pred_fallthru
            _
          %264 = vnop
        $region28: #{forward.9} parent=23 // pred_fallthru
          _
      $region24: #{forward.9} parent=5 // pred_fallthru
        _
      %p265 = scmp.le.s32.totalorder 1, %s9
      %p266 = scmp.lt.s32.totalorder %s9, 7
      %p267 = pnand %p265, %p266
      %p268 = pneg %p267
      // Predicated region
      $region48: #{forward.9} parent=5 // pred_check
        _
      $region49: #{forward.9} parent=5 // pred_check_branch
        %270 = sbr.rel (%p267) target = $region51
      $region50: #{forward.9} parent=5 // pred_region
        %s271 = ssub.s32 %s9, 1
        %s272 = sand.u32 %s64, 1
        %s273 = sand.u32 %s64, 1
        %s274 = smul.addr %s273, 448
        %s275 = scalar_lea.vmem [#allocation2], %s274
        // Predicated region
        $region52: #{forward.9} parent=50 // pred_check
          %p276 = pneg %p77
        $region53: #{forward.9} parent=50 // pred_check_branch
          %278 = sbr.rel (%p276) target = $region55
        $region54: #{forward.9} parent=50 // pred_region
          _
        $region55: #{forward.9} parent=50 // pred_fallthru
          _
        %p279 = pneg %p30
        %p280 = pneg %p27
        %p281 = pneg %p51
        %p282 = pneg %p48
        %s283 = sand.u32 %s64, 1
        %s284 = sand.u32 %s64, 1
        %s285 = smul.addr %s284, 448
        %s286 = scalar_lea.vmem [#allocation2], %s285
        %p287 = pneg %p77
        %p288 = pneg %p74
        %p289 = pneg %p103
        %p290 = pneg %p100
        %s291 = smul.u32 4, %s14
        %p292 = scmp.lt.s32.totalorder %s291, 23
        %s293 = scalar_select %p292, %s291, 23
        %s294 = smul.addr %s293, 4
        %s295 = scalar_lea.vmem %s3, %s294
        %s296 = smul.u32 4, %s14
        %s297 = smul.u32 4, %s14
        %p298 = scmp.lt.s32.totalorder %s297, 23
        %s299 = scalar_select %p298, %s297, 23
        %s300 = smul.addr %s299, 4
        %s301 = scalar_lea.vmem %s3, %s300
        %s302 = smul.u32 4, %s14
        %p303 = scmp.ge.s32.totalorder %s14, 2
        %s304 = scalar_select %p303, 1, 0
        %p305 = scmp.ge.s32.totalorder %s14, 4
        %s306 = scalar_select %p305, 1, 0
        %s307 = sadd.s32 %s304, %s306
        %s308 = smul.u32 %s307, 2
        %s309 = smul.addr %s308, 8
        %s310 = scalar_lea.vmem %s0, %s309
        %v311 = vld [vmem:[%s310] sm:$0xff]
        %v312 = vld [vmem:[%s310 + $0x8] sm:$0xff]
        %v313 = vld [vmem:[%s275] sm:$0xff]
        %v314 = vld [vmem:[%s275 + $0x8] sm:$0xff]
        %v315 = vld [vmem:[%s275 + $0x10] sm:$0xff]
        %v316 = vld [vmem:[%s275 + $0x18] sm:$0xff]
        %v317 = vld [vmem:[%s275 + $0x20] sm:$0xff]
        %v318 = vld [vmem:[%s275 + $0x28] sm:$0xff]
        %v319 = vld [vmem:[%s275 + $0x30] sm:$0xff]
        %v320 = vld [vmem:[%s275 + $0x38] sm:$0xff]
        %v321 = vld [vmem:[%s275 + $0x40] sm:$0xff]
        %v322 = vld [vmem:[%s275 + $0x48] sm:$0xff]
        %v323 = vld [vmem:[%s275 + $0x50] sm:$0xff]
        %v324 = vld [vmem:[%s275 + $0x58] sm:$0xff]
        %v325 = vld [vmem:[%s275 + $0x60] sm:$0xff]
        %v326 = vld [vmem:[%s275 + $0x68] sm:$0xff]
        %v327 = vld [vmem:[%s275 + $0x70] sm:$0xff]
        %v328 = vld [vmem:[%s275 + $0x78] sm:$0xff]
        %v329 = vld [vmem:[%s275 + $0x80] sm:$0xff]
        %v330 = vld [vmem:[%s275 + $0x88] sm:$0xff]
        %v331 = vld [vmem:[%s275 + $0x90] sm:$0xff]
        %v332 = vld [vmem:[%s275 + $0x98] sm:$0xff]
        %v333 = vld [vmem:[%s275 + $0xa0] sm:$0xff]
        %v334 = vld [vmem:[%s275 + $0xa8] sm:$0xff]
        %v335 = vld [vmem:[%s275 + $0xb0] sm:$0xff]
        %v336 = vld [vmem:[%s275 + $0xb8] sm:$0xff]
        %v337 = vld [vmem:[%s275 + $0xc0] sm:$0xff]
        %v338 = vld [vmem:[%s275 + $0xc8] sm:$0xff]
        %v339 = vld [vmem:[%s275 + $0xd0] sm:$0xff]
        %v340 = vld [vmem:[%s275 + $0xd8] sm:$0xff]
        %v341 = vld [vmem:[%s275 + $0xe0] sm:$0xff]
        %v342 = vld [vmem:[%s275 + $0xe8] sm:$0xff]
        %v343 = vld [vmem:[%s275 + $0xf0] sm:$0xff]
        %v344 = vld [vmem:[%s275 + $0xf8] sm:$0xff]
        %v345 = vld [vmem:[%s275 + $0x100] sm:$0xff]
        %v346 = vld [vmem:[%s275 + $0x108] sm:$0xff]
        %v347 = vld [vmem:[%s275 + $0x110] sm:$0xff]
        %v348 = vld [vmem:[%s275 + $0x118] sm:$0xff]
        %v349 = vld [vmem:[%s275 + $0x120] sm:$0xff]
        %v350 = vld [vmem:[%s275 + $0x128] sm:$0xff]
        %v351 = vld [vmem:[%s275 + $0x130] sm:$0xff]
        %v352 = vld [vmem:[%s275 + $0x138] sm:$0xff]
        %v353 = vld [vmem:[%s275 + $0x140] sm:$0xff]
        %v354 = vld [vmem:[%s275 + $0x148] sm:$0xff]
        %v355 = vld [vmem:[%s275 + $0x150] sm:$0xff]
        %v356 = vld [vmem:[%s275 + $0x158] sm:$0xff]
        %v357 = vld [vmem:[%s275 + $0x160] sm:$0xff]
        %v358 = vld [vmem:[%s275 + $0x168] sm:$0xff]
        %v359 = vld [vmem:[%s275 + $0x170] sm:$0xff]
        %v360 = vld [vmem:[%s275 + $0x178] sm:$0xff]
        %v361 = vld [vmem:[%s275 + $0x180] sm:$0xff]
        %v362 = vld [vmem:[%s275 + $0x188] sm:$0xff]
        %v363 = vld [vmem:[%s275 + $0x190] sm:$0xff]
        %v364 = vld [vmem:[%s275 + $0x198] sm:$0xff]
        %v365 = vld [vmem:[%s275 + $0x1a0] sm:$0xff]
        %v366 = vld [vmem:[%s275 + $0x1a8] sm:$0xff]
        %v367 = vld [vmem:[%s275 + $0x1b0] sm:$0xff]
        %v368 = vld [vmem:[%s275 + $0x1b8] sm:$0xff]
        %v369 = vunpack.c.l.bf16 %v313
        %v370 = vunpack.c.h.bf16 %v313
        %v371 = vunpack.c.l.bf16 %v314
        %v372 = vunpack.c.h.bf16 %v314
        %v373 = vunpack.c.l.bf16 %v315
        %v374 = vunpack.c.h.bf16 %v315
        %v375 = vunpack.c.l.bf16 %v316
        %v376 = vunpack.c.h.bf16 %v316
        %v377 = vunpack.c.l.bf16 %v317
        %v378 = vunpack.c.h.bf16 %v317
        %v379 = vunpack.c.l.bf16 %v318
        %v380 = vunpack.c.h.bf16 %v318
        %v381 = vunpack.c.l.bf16 %v319
        %v382 = vunpack.c.h.bf16 %v319
        %v383 = vunpack.c.l.bf16 %v320
        %v384 = vunpack.c.h.bf16 %v320
        %v385 = vunpack.c.l.bf16 %v321
        %v386 = vunpack.c.h.bf16 %v321
        %v387 = vunpack.c.l.bf16 %v322
        %v388 = vunpack.c.h.bf16 %v322
        %v389 = vunpack.c.l.bf16 %v323
        %v390 = vunpack.c.h.bf16 %v323
        %v391 = vunpack.c.l.bf16 %v324
        %v392 = vunpack.c.h.bf16 %v324
        %v393 = vunpack.c.l.bf16 %v325
        %v394 = vunpack.c.h.bf16 %v325
        %v395 = vunpack.c.l.bf16 %v326
        %v396 = vunpack.c.h.bf16 %v326
        %v397 = vunpack.c.l.bf16 %v327
        %v398 = vunpack.c.h.bf16 %v327
        %v399 = vunpack.c.l.bf16 %v328
        %v400 = vunpack.c.h.bf16 %v328
        %v401 = vunpack.c.l.bf16 %v329
        %v402 = vunpack.c.h.bf16 %v329
        %v403 = vunpack.c.l.bf16 %v330
        %v404 = vunpack.c.h.bf16 %v330
        %v405 = vunpack.c.l.bf16 %v331
        %v406 = vunpack.c.h.bf16 %v331
        %v407 = vunpack.c.l.bf16 %v332
        %v408 = vunpack.c.h.bf16 %v332
        %v409 = vunpack.c.l.bf16 %v333
        %v410 = vunpack.c.h.bf16 %v333
        %v411 = vunpack.c.l.bf16 %v334
        %v412 = vunpack.c.h.bf16 %v334
        %v413 = vunpack.c.l.bf16 %v335
        %v414 = vunpack.c.h.bf16 %v335
        %v415 = vunpack.c.l.bf16 %v336
        %v416 = vunpack.c.h.bf16 %v336
        %v417 = vunpack.c.l.bf16 %v337
        %v418 = vunpack.c.h.bf16 %v337
        %v419 = vunpack.c.l.bf16 %v338
        %v420 = vunpack.c.h.bf16 %v338
        %v421 = vunpack.c.l.bf16 %v339
        %v422 = vunpack.c.h.bf16 %v339
        %v423 = vunpack.c.l.bf16 %v340
        %v424 = vunpack.c.h.bf16 %v340
        %v425 = vunpack.c.l.bf16 %v341
        %v426 = vunpack.c.h.bf16 %v341
        %v427 = vunpack.c.l.bf16 %v342
        %v428 = vunpack.c.h.bf16 %v342
        %v429 = vunpack.c.l.bf16 %v343
        %v430 = vunpack.c.h.bf16 %v343
        %v431 = vunpack.c.l.bf16 %v344
        %v432 = vunpack.c.h.bf16 %v344
        %v433 = vunpack.c.l.bf16 %v345
        %v434 = vunpack.c.h.bf16 %v345
        %v435 = vunpack.c.l.bf16 %v346
        %v436 = vunpack.c.h.bf16 %v346
        %v437 = vunpack.c.l.bf16 %v347
        %v438 = vunpack.c.h.bf16 %v347
        %v439 = vunpack.c.l.bf16 %v348
        %v440 = vunpack.c.h.bf16 %v348
        %v441 = vunpack.c.l.bf16 %v349
        %v442 = vunpack.c.h.bf16 %v349
        %v443 = vunpack.c.l.bf16 %v350
        %v444 = vunpack.c.h.bf16 %v350
        %v445 = vunpack.c.l.bf16 %v351
        %v446 = vunpack.c.h.bf16 %v351
        %v447 = vunpack.c.l.bf16 %v352
        %v448 = vunpack.c.h.bf16 %v352
        %v449 = vunpack.c.l.bf16 %v353
        %v450 = vunpack.c.h.bf16 %v353
        %v451 = vunpack.c.l.bf16 %v354
        %v452 = vunpack.c.h.bf16 %v354
        %v453 = vunpack.c.l.bf16 %v355
        %v454 = vunpack.c.h.bf16 %v355
        %v455 = vunpack.c.l.bf16 %v356
        %v456 = vunpack.c.h.bf16 %v356
        %v457 = vunpack.c.l.bf16 %v357
        %v458 = vunpack.c.h.bf16 %v357
        %v459 = vunpack.c.l.bf16 %v358
        %v460 = vunpack.c.h.bf16 %v358
        %v461 = vunpack.c.l.bf16 %v359
        %v462 = vunpack.c.h.bf16 %v359
        %v463 = vunpack.c.l.bf16 %v360
        %v464 = vunpack.c.h.bf16 %v360
        %v465 = vunpack.c.l.bf16 %v361
        %v466 = vunpack.c.h.bf16 %v361
        %v467 = vunpack.c.l.bf16 %v362
        %v468 = vunpack.c.h.bf16 %v362
        %v469 = vunpack.c.l.bf16 %v363
        %v470 = vunpack.c.h.bf16 %v363
        %v471 = vunpack.c.l.bf16 %v364
        %v472 = vunpack.c.h.bf16 %v364
        %v473 = vunpack.c.l.bf16 %v365
        %v474 = vunpack.c.h.bf16 %v365
        %v475 = vunpack.c.l.bf16 %v366
        %v476 = vunpack.c.h.bf16 %v366
        %v477 = vunpack.c.l.bf16 %v367
        %v478 = vunpack.c.h.bf16 %v367
        %v479 = vunpack.c.l.bf16 %v368
        %v480 = vunpack.c.h.bf16 %v368
        %s481 = smul.u32 %s307, 8
        %s482 = scalar_lea.vmem %s1, %s481
        %v483 = vld [vmem:[%s482] sm:$0xff]
        %485 = vset.pattern.permute.xlu0 0
        %486 = vperm.xlu0 %485, %v483
        %v487 = vpop.permute.xlu0 %486
        %vm489 = vcmask 785408
        %v491 = vsel %vm489, %v312, 0
        %493 = vmatpush.msra.mxu0 %v429
        %494 = vmatpush.msra.mxu0 %v425
        %495 = vmatpush.msra.mxu0 %v421
        %496 = vmatpush.msra.mxu0 %v417
        %497 = vmatpush.msra.mxu0 %v413
        %498 = vmatpush.msra.mxu0 %v409
        %499 = vmatpush.msra.mxu0 %v405
        %500 = vmatpush.msra.mxu0 %v401
        %501 = vmatpush.msra.mxu0 %v397
        %502 = vmatpush.msra.mxu0 %v393
        %503 = vmatpush.msra.mxu0 %v389
        %504 = vmatpush.msra.mxu0 %v385
        %505 = vmatpush.msra.mxu0 %v381
        %506 = vmatpush.msra.mxu0 %v377
        %507 = vmatpush.msra.mxu0 %v373
        %508 = vmatpush.msra.mxu0 %v369
        %509 = vmatmul.f32.gmra.mxu0 %v311
        %v510 = vpop.f32.mrf.mxu0
        %v511 = vadd.f32 %v487, %v510
        %512 = vdwg.mxu0
        %513 = vmatpush.msra.mxu0 0.0
        %514 = vmatpush.msra.mxu0 0.0
        %515 = vmatpush.msra.mxu0 0.0
        %516 = vmatpush.msra.mxu0 0.0
        %517 = vmatpush.msra.mxu0 %v477
        %518 = vmatpush.msra.mxu0 %v473
        %519 = vmatpush.msra.mxu0 %v469
        %520 = vmatpush.msra.mxu0 %v465
        %521 = vmatpush.msra.mxu0 %v461
        %522 = vmatpush.msra.mxu0 %v457
        %523 = vmatpush.msra.mxu0 %v453
        %524 = vmatpush.msra.mxu0 %v449
        %525 = vmatpush.msra.mxu0 %v445
        %526 = vmatpush.msra.mxu0 %v441
        %527 = vmatpush.msra.mxu0 %v437
        %528 = vmatpush.msra.mxu0 %v433
        %529 = vmatmul.f32.gmra.mxu0 %v491
        %v530 = vpop.f32.mrf.mxu0
        %v531 = vadd.f32 %v511, %v530
        %532 = vdwg.mxu0
        %533 = vmatpush.msra.mxu0 %v430
        %534 = vmatpush.msra.mxu0 %v426
        %535 = vmatpush.msra.mxu0 %v422
        %536 = vmatpush.msra.mxu0 %v418
        %537 = vmatpush.msra.mxu0 %v414
        %538 = vmatpush.msra.mxu0 %v410
        %539 = vmatpush.msra.mxu0 %v406
        %540 = vmatpush.msra.mxu0 %v402
        %541 = vmatpush.msra.mxu0 %v398
        %542 = vmatpush.msra.mxu0 %v394
        %543 = vmatpush.msra.mxu0 %v390
        %544 = vmatpush.msra.mxu0 %v386
        %545 = vmatpush.msra.mxu0 %v382
        %546 = vmatpush.msra.mxu0 %v378
        %547 = vmatpush.msra.mxu0 %v374
        %548 = vmatpush.msra.mxu0 %v370
        %549 = vmatmul.f32.gmra.mxu0 %v311
        %v550 = vpop.f32.mrf.mxu0
        %v551 = vadd.f32 %v487, %v550
        %552 = vdwg.mxu0
        %553 = vmatpush.msra.mxu0 0.0
        %554 = vmatpush.msra.mxu0 0.0
        %555 = vmatpush.msra.mxu0 0.0
        %556 = vmatpush.msra.mxu0 0.0
        %557 = vmatpush.msra.mxu0 %v478
        %558 = vmatpush.msra.mxu0 %v474
        %559 = vmatpush.msra.mxu0 %v470
        %560 = vmatpush.msra.mxu0 %v466
        %561 = vmatpush.msra.mxu0 %v462
        %562 = vmatpush.msra.mxu0 %v458
        %563 = vmatpush.msra.mxu0 %v454
        %564 = vmatpush.msra.mxu0 %v450
        %565 = vmatpush.msra.mxu0 %v446
        %566 = vmatpush.msra.mxu0 %v442
        %567 = vmatpush.msra.mxu0 %v438
        %568 = vmatpush.msra.mxu0 %v434
        %569 = vmatmul.f32.gmra.mxu0 %v491
        %v570 = vpop.f32.mrf.mxu0
        %v571 = vadd.f32 %v551, %v570
        %572 = vdwg.mxu0
        %573 = vmatpush.msra.mxu0 %v431
        %574 = vmatpush.msra.mxu0 %v427
        %575 = vmatpush.msra.mxu0 %v423
        %576 = vmatpush.msra.mxu0 %v419
        %577 = vmatpush.msra.mxu0 %v415
        %578 = vmatpush.msra.mxu0 %v411
        %579 = vmatpush.msra.mxu0 %v407
        %580 = vmatpush.msra.mxu0 %v403
        %581 = vmatpush.msra.mxu0 %v399
        %582 = vmatpush.msra.mxu0 %v395
        %583 = vmatpush.msra.mxu0 %v391
        %584 = vmatpush.msra.mxu0 %v387
        %585 = vmatpush.msra.mxu0 %v383
        %586 = vmatpush.msra.mxu0 %v379
        %587 = vmatpush.msra.mxu0 %v375
        %588 = vmatpush.msra.mxu0 %v371
        %589 = vmatmul.f32.gmra.mxu0 %v311
        %v590 = vpop.f32.mrf.mxu0
        %v591 = vadd.f32 %v487, %v590
        %592 = vdwg.mxu0
        %593 = vmatpush.msra.mxu0 0.0
        %594 = vmatpush.msra.mxu0 0.0
        %595 = vmatpush.msra.mxu0 0.0
        %596 = vmatpush.msra.mxu0 0.0
        %597 = vmatpush.msra.mxu0 %v479
        %598 = vmatpush.msra.mxu0 %v475
        %599 = vmatpush.msra.mxu0 %v471
        %600 = vmatpush.msra.mxu0 %v467
        %601 = vmatpush.msra.mxu0 %v463
        %602 = vmatpush.msra.mxu0 %v459
        %603 = vmatpush.msra.mxu0 %v455
        %604 = vmatpush.msra.mxu0 %v451
        %605 = vmatpush.msra.mxu0 %v447
        %606 = vmatpush.msra.mxu0 %v443
        %607 = vmatpush.msra.mxu0 %v439
        %608 = vmatpush.msra.mxu0 %v435
        %609 = vmatmul.f32.gmra.mxu0 %v491
        %v610 = vpop.f32.mrf.mxu0
        %v611 = vadd.f32 %v591, %v610
        %612 = vdwg.mxu0
        %613 = vmatpush.msra.mxu0 %v432
        %614 = vmatpush.msra.mxu0 %v428
        %615 = vmatpush.msra.mxu0 %v424
        %616 = vmatpush.msra.mxu0 %v420
        %617 = vmatpush.msra.mxu0 %v416
        %618 = vmatpush.msra.mxu0 %v412
        %619 = vmatpush.msra.mxu0 %v408
        %620 = vmatpush.msra.mxu0 %v404
        %621 = vmatpush.msra.mxu0 %v400
        %622 = vmatpush.msra.mxu0 %v396
        %623 = vmatpush.msra.mxu0 %v392
        %624 = vmatpush.msra.mxu0 %v388
        %625 = vmatpush.msra.mxu0 %v384
        %626 = vmatpush.msra.mxu0 %v380
        %627 = vmatpush.msra.mxu0 %v376
        %628 = vmatpush.msra.mxu0 %v372
        %629 = vmatmul.f32.gmra.mxu0 %v311
        %v630 = vpop.f32.mrf.mxu0
        %v631 = vadd.f32 %v487, %v630
        %632 = vdwg.mxu0
        %633 = vmatpush.msra.mxu0 0.0
        %634 = vmatpush.msra.mxu0 0.0
        %635 = vmatpush.msra.mxu0 0.0
        %636 = vmatpush.msra.mxu0 0.0
        %637 = vmatpush.msra.mxu0 %v480
        %638 = vmatpush.msra.mxu0 %v476
        %639 = vmatpush.msra.mxu0 %v472
        %640 = vmatpush.msra.mxu0 %v468
        %641 = vmatpush.msra.mxu0 %v464
        %642 = vmatpush.msra.mxu0 %v460
        %643 = vmatpush.msra.mxu0 %v456
        %644 = vmatpush.msra.mxu0 %v452
        %645 = vmatpush.msra.mxu0 %v448
        %646 = vmatpush.msra.mxu0 %v444
        %647 = vmatpush.msra.mxu0 %v440
        %648 = vmatpush.msra.mxu0 %v436
        %649 = vmatmul.f32.gmra.mxu0 %v491
        %v650 = vpop.f32.mrf.mxu0
        %v651 = vadd.f32 %v631, %v650
        %652 = vdwg.mxu0
        %vm653 = vcmp.ge.f32.partialorder %v531, 0.0
        %vm654 = vcmp.ge.f32.partialorder %v571, 0.0
        %vm655 = vcmp.ge.f32.partialorder %v611, 0.0
        %vm656 = vcmp.ge.f32.partialorder %v651, 0.0
        %v657 = vmul.f32 %v531, 0.1
        %v658 = vmul.f32 %v571, 0.1
        %v659 = vmul.f32 %v611, 0.1
        %v660 = vmul.f32 %v651, 0.1
        %v661 = vsel %vm653, %v531, %v657
        %v662 = vsel %vm654, %v571, %v658
        %v663 = vsel %vm655, %v611, %v659
        %v664 = vsel %vm656, %v651, %v660
        %v665 = vpack.c.bf16 %v662, %v661
        %v666 = vpack.c.bf16 %v664, %v663
        %667 = vst [vmem:[%s301] sm:$0xff] %v665
        %668 = vst [vmem:[%s301 + $0x8] sm:$0xff] %v666
        %s669 = smul.u32 4, %s14
        %p670 = scmp.lt.s32.totalorder %s669, 23
        %s671 = scalar_select %p670, %s669, 23
        %s672 = smul.addr %s671, 4
        %s673 = scalar_lea.vmem %s3, %s672
        // Predicated region
        $region56: #{forward.9} parent=50 // pred_check
          %p674 = pneg %p100
        $region57: #{forward.9} parent=50 // pred_check_branch
          %676 = sbr.rel (%p674) target = $region59
        $region58: #{forward.9} parent=50 // pred_region
          %s677 = smul.u32 4, %s14
        $region59: #{forward.9} parent=50 // pred_fallthru
          _
      $region51: #{forward.9} parent=5 // pred_fallthru
        _
      %p678 = scmp.le.s32.totalorder 2, %s9
      // Predicated region
      $region60: #{forward.9} parent=5 // pred_check
        %p679 = pneg %p678
      $region61: #{forward.9} parent=5 // pred_check_branch
        %681 = sbr.rel (%p679) target = $region63
      $region62: #{forward.9} parent=5 // pred_region
        %s682 = ssub.s32 %s9, 2
        // Predicated region
        $region64: #{forward.9} parent=62 // pred_check
          %p683 = pneg %p106
        $region65: #{forward.9} parent=62 // pred_check_branch
          %685 = sbr.rel (%p683) target = $region67
        $region66: #{forward.9} parent=62 // pred_region
          %s686 = smul.u32 4, %s15
          %p687 = scmp.lt.s32.totalorder %s686, 23
          %s688 = scalar_select %p687, %s686, 23
          %s689 = smul.addr %s688, 4
          %s690 = scalar_lea.vmem %s3, %s689
        $region67: #{forward.9} parent=62 // pred_fallthru
          _
      $region63: #{forward.9} parent=5 // pred_fallthru
        _
    $region6: #{forward.9} parent=1 // loop_footer
      %s13 = sadd.s32 1, %s9
    $region7: #{forward.9} parent=1 // loop_footer_branch
      %8 = sbr.rel target = $region3
    $region8: #{forward.9} parent=1 // loop_exit
      _

// kernel: forward.10
$region0: #{forward.10}
  #allocation0 [shape = 'u32[]', space=smem, size = 0x4, offset = 0x4, fixed_abs, tag = 'smem constant byte address 0x4 - core index']
  #allocation1 [shape = 'u32[72,128]{1,0:T(1,128)}', space=vmem, size = 0x9000, scoped, tag = 'internal scratch']
  %s0 = inlined_call_operand.vmem [shape: f32[3,8,224], index: 0, kind: input, shape index: {}]
  %s1 = inlined_call_operand.vmem [shape: f32[3,8,1], index: 1, kind: input, shape index: {}]
  %s2 = inlined_call_operand.vmem [shape: bf16[224,1152], index: 2, kind: input, shape index: {}]
  %s3 = inlined_call_operand.vmem [shape: bf16[8,1152], index: 3, kind: output, shape index: {}]
  %s4 = sld [smem:[#allocation0]]
  $region71: #{forward.10} parent=0
    _
  %s6 = ssub.s32 1, %s4
  %s7 = scalar_select 0, %s6, %s4
  $region1: #{forward.10} parent=0
    #allocation2 [shape = 'u8[344064]{0}', space=vmem, size = 0x54000, scoped, tag = 'input window, operand 2']
    loop: start=0, step=1, limit=5
    $region2: #{forward.10} parent=1 // loop_pre_header
      _
    $region3: #{forward.10} parent=1 // loop_header
      %s9 = sphi 0, %s13
      %p10 = scmp.ge.s32.totalorder %s9, 5
      %s17 = sphi 0, %s17
      %s19 = sphi 0, %s17
      %s20 = sphi 0, %s19
      %s34 = sphi 0, %s20
      %s38 = sphi 0, %s38
      %s40 = sphi 0, %s38
      %s41 = sphi 0, %s40
      %s55 = sphi 0, %s41
      %s61 = sphi 0, %s63
      %s64 = sphi 0, %s61
      %s65 = sphi 0, %s64
      %s81 = sphi 0, %s65
      %s87 = sphi 0, %s89
      %s90 = sphi 0, %s87
      %s91 = sphi 0, %s90
      %s107 = sphi 0, %s91
    $region4: #{forward.10} parent=1 // loop_header_branch
      %12 = sbr.rel (%p10) target = $region8
    $region5: #{forward.10} parent=1 // loop_body
      %s14 = ssub.s32 %s9, 1
      %s15 = ssub.s32 %s9, 2
      %s16 = sadd.s32 %s9, 1
      %s18 = sadd.s32 %s17, 1
      %p21 = scmp.eq.s32.totalorder %s9, 2
      %p22 = scmp.ne.s32.totalorder %s17, %s19
      %p23 = scmp.eq.s32.totalorder %s9, 0
      %p24 = por %p22, %p23
      %p25 = scmp.ne.s32.totalorder %s17, %s19
      %p26 = scmp.eq.s32.totalorder %s14, 2
      %p27 = por %p25, %p26
      %p28 = scmp.ne.s32.totalorder %s19, %s20
      %p29 = scmp.eq.s32.totalorder %s14, 0
      %p30 = por %p28, %p29
      %p31 = scmp.ne.s32.totalorder %s19, %s20
      %p32 = scmp.eq.s32.totalorder %s15, 2
      %p33 = por %p31, %p32
      %p35 = scmp.ne.s32.totalorder %s20, %s34
      %p36 = scmp.eq.s32.totalorder %s15, 0
      %p37 = por %p35, %p36
      %s39 = sadd.s32 %s38, 1
      %p42 = scmp.eq.s32.totalorder %s9, 2
      %p43 = scmp.ne.s32.totalorder %s38, %s40
      %p44 = scmp.eq.s32.totalorder %s9, 0
      %p45 = por %p43, %p44
      %p46 = scmp.ne.s32.totalorder %s38, %s40
      %p47 = scmp.eq.s32.totalorder %s14, 2
      %p48 = por %p46, %p47
      %p49 = scmp.ne.s32.totalorder %s40, %s41
      %p50 = scmp.eq.s32.totalorder %s14, 0
      %p51 = por %p49, %p50
      %p52 = scmp.ne.s32.totalorder %s40, %s41
      %p53 = scmp.eq.s32.totalorder %s15, 2
      %p54 = por %p52, %p53
      %p56 = scmp.ne.s32.totalorder %s41, %s55
      %p57 = scmp.eq.s32.totalorder %s15, 0
      %p58 = por %p56, %p57
      %s59 = ssub.s32 %s9, %s16
      %p60 = scmp.eq.s32.totalorder %s59, 0
      %s62 = sadd.s32 %s61, 1
      %s63 = scalar_select %p60, %s61, %s62
      %p66 = pneg %p60
      %p67 = scmp.eq.s32.totalorder %s9, 2
      %p68 = por %p66, %p67
      %p69 = scmp.ne.s32.totalorder %s61, %s64
      %p70 = scmp.eq.s32.totalorder %s9, 0
      %p71 = por %p69, %p70
      %p72 = scmp.ne.s32.totalorder %s61, %s64
      %p73 = scmp.eq.s32.totalorder %s14, 2
      %p74 = por %p72, %p73
      %p75 = scmp.ne.s32.totalorder %s64, %s65
      %p76 = scmp.eq.s32.totalorder %s14, 0
      %p77 = por %p75, %p76
      %p78 = scmp.ne.s32.totalorder %s64, %s65
      %p79 = scmp.eq.s32.totalorder %s15, 2
      %p80 = por %p78, %p79
      %p82 = scmp.ne.s32.totalorder %s65, %s81
      %p83 = scmp.eq.s32.totalorder %s15, 0
      %p84 = por %p82, %p83
      %s85 = ssub.s32 %s9, %s16
      %p86 = scmp.eq.s32.totalorder %s85, 0
      %s88 = sadd.s32 %s87, 1
      %s89 = scalar_select %p86, %s87, %s88
      %p92 = pneg %p86
      %p93 = scmp.eq.s32.totalorder %s9, 2
      %p94 = por %p92, %p93
      %p95 = scmp.ne.s32.totalorder %s87, %s90
      %p96 = scmp.eq.s32.totalorder %s9, 0
      %p97 = por %p95, %p96
      %p98 = scmp.ne.s32.totalorder %s87, %s90
      %p99 = scmp.eq.s32.totalorder %s14, 2
      %p100 = por %p98, %p99
      %p101 = scmp.ne.s32.totalorder %s90, %s91
      %p102 = scmp.eq.s32.totalorder %s14, 0
      %p103 = por %p101, %p102
      %p104 = scmp.ne.s32.totalorder %s90, %s91
      %p105 = scmp.eq.s32.totalorder %s15, 2
      %p106 = por %p104, %p105
      %p108 = scmp.ne.s32.totalorder %s91, %s107
      %p109 = scmp.eq.s32.totalorder %s15, 0
      %p110 = por %p108, %p109
      %p111 = scmp.le.s32.totalorder 1, %s9
      %p112 = scmp.lt.s32.totalorder %s9, 4
      %p113 = pnand %p111, %p112
      %p114 = pneg %p113
      // Predicated region
      $region9: #{forward.10} parent=5 // pred_check
        _
      $region10: #{forward.10} parent=5 // pred_check_branch
        %116 = sbr.rel (%p113) target = $region12
      $region11: #{forward.10} parent=5 // pred_region
        %s117 = ssub.s32 %s9, 1
        // Predicated region
        $region13: #{forward.10} parent=11 // pred_check
          %p118 = pneg %p30
        $region14: #{forward.10} parent=11 // pred_check_branch
          %120 = sbr.rel (%p118) target = $region16
        $region15: #{forward.10} parent=11 // pred_region
          _
        $region16: #{forward.10} parent=11 // pred_fallthru
          _
        // Predicated region
        $region17: #{forward.10} parent=11 // pred_check
          %p121 = pneg %p51
        $region18: #{forward.10} parent=11 // pred_check_branch
          %123 = sbr.rel (%p121) target = $region20
        $region19: #{forward.10} parent=11 // pred_region
          _
        $region20: #{forward.10} parent=11 // pred_fallthru
          _
      $region12: #{forward.10} parent=5 // pred_fallthru
        _
      %p124 = scmp.lt.s32.totalorder %s9, 3
      // Predicated region
      $region21: #{forward.10} parent=5 // pred_check
        %p125 = pneg %p124
      $region22: #{forward.10} parent=5 // pred_check_branch
        %127 = sbr.rel (%p125) target = $region24
      $region23: #{forward.10} parent=5 // pred_region
        // Predicated region
        $region25: #{forward.10} parent=23 // pred_check
          %p128 = pneg %p71
        $region26: #{forward.10} parent=23 // pred_check_branch
          %130 = sbr.rel (%p128) target = $region28
        $region27: #{forward.10} parent=23 // pred_region
          %s131 = sand.u32 %s61, 1
          %s132 = sand.u32 %s61, 1
          %s133 = smul.addr %s132, 336
          %s134 = scalar_lea.vmem [#allocation2], %s133
          %s135 = smul.u32 3, %s9
          %s136 = smul.addr %s135, 4
          %s137 = scalar_lea.vmem %s2, %s136
          // Predicated region
          $region29: #{forward.10} parent=27 // pred_check
            _
          $region30: #{forward.10} parent=27 // pred_check_branch
            %139 = sbr.rel (0) target = $region32
          $region31: #{forward.10} parent=27 // pred_region
            // Predicated region
            $region33: #{forward.10} parent=31 // pred_check
              _
            $region34: #{forward.10} parent=31 // pred_check_branch
              %141 = sbr.rel (0) target = $region36
            $region35: #{forward.10} parent=31 // pred_region
              %s142 = scalar_lea.vmem %s137, 8
              %s143 = scalar_lea.vmem %s134, 8 [#allocation2]
              loop: start=0, step=1, limit=1
              $region37: #{forward.10} parent=35 // loop_pre_header
                _
              $region38: #{forward.10} parent=35 // loop_header
                %s145 = sphi 0, %s149
                %p146 = scmp.ge.s32.totalorder %s145, 1
                %s150 = sphi %s137, %s137
                %s151 = sphi %s134, %s134
              $region39: #{forward.10} parent=35 // loop_header_branch
                %148 = sbr.rel (%p146) target = $region43
              $region40: #{forward.10} parent=35 // loop_body
                %v152 = vld [vmem:[%s150] sm:$0xff]
                %153 = vst [vmem:[%s151] sm:$0xff] %v152
                %v154 = vld [vmem:[%s150 + $0x24] sm:$0xff]
                %155 = vst [vmem:[%s151 + $0xc] sm:$0xff] %v154
                %v156 = vld [vmem:[%s150 + $0x48] sm:$0xff]
                %157 = vst [vmem:[%s151 + $0x18] sm:$0xff] %v156
                %v158 = vld [vmem:[%s150 + $0x6c] sm:$0xff]
                %159 = vst [vmem:[%s151 + $0x24] sm:$0xff] %v158
                %v160 = vld [vmem:[%s150 + $0x90] sm:$0xff]
                %161 = vst [vmem:[%s151 + $0x30] sm:$0xff] %v160
                %v162 = vld [vmem:[%s150 + $0xb4] sm:$0xff]
                %163 = vst [vmem:[%s151 + $0x3c] sm:$0xff] %v162
                %v164 = vld [vmem:[%s150 + $0xd8] sm:$0xff]
                %165 = vst [vmem:[%s151 + $0x48] sm:$0xff] %v164
                %v166 = vld [vmem:[%s150 + $0xfc] sm:$0xff]
                %167 = vst [vmem:[%s151 + $0x54] sm:$0xff] %v166
                %v168 = vld [vmem:[%s150 + $0x120] sm:$0xff]
                %169 = vst [vmem:[%s151 + $0x60] sm:$0xff] %v168
                %v170 = vld [vmem:[%s150 + $0x144] sm:$0xff]
                %171 = vst [vmem:[%s151 + $0x6c] sm:$0xff] %v170
                %v172 = vld [vmem:[%s150 + $0x168] sm:$0xff]
                %173 = vst [vmem:[%s151 + $0x78] sm:$0xff] %v172
                %v174 = vld [vmem:[%s150 + $0x18c] sm:$0xff]
                %175 = vst [vmem:[%s151 + $0x84] sm:$0xff] %v174
                %v176 = vld [vmem:[%s150 + $0x1b0] sm:$0xff]
                %177 = vst [vmem:[%s151 + $0x90] sm:$0xff] %v176
                %v178 = vld [vmem:[%s150 + $0x1d4] sm:$0xff]
                %179 = vst [vmem:[%s151 + $0x9c] sm:$0xff] %v178
                %v180 = vld [vmem:[%s150 + $0x1f8] sm:$0xff]
                %181 = vst [vmem:[%s151 + $0xa8] sm:$0xff] %v180
                %v182 = vld [vmem:[%s150 + $0x21c] sm:$0xff]
                %183 = vst [vmem:[%s151 + $0xb4] sm:$0xff] %v182
                %v184 = vld [vmem:[%s150 + $0x240] sm:$0xff]
                %185 = vst [vmem:[%s151 + $0xc0] sm:$0xff] %v184
                %v186 = vld [vmem:[%s150 + $0x264] sm:$0xff]
                %187 = vst [vmem:[%s151 + $0xcc] sm:$0xff] %v186
                %v188 = vld [vmem:[%s150 + $0x288] sm:$0xff]
                %189 = vst [vmem:[%s151 + $0xd8] sm:$0xff] %v188
                %v190 = vld [vmem:[%s150 + $0x2ac] sm:$0xff]
                %191 = vst [vmem:[%s151 + $0xe4] sm:$0xff] %v190
                %v192 = vld [vmem:[%s150 + $0x2d0] sm:$0xff]
                %193 = vst [vmem:[%s151 + $0xf0] sm:$0xff] %v192
                %v194 = vld [vmem:[%s150 + $0x2f4] sm:$0xff]
                %195 = vst [vmem:[%s151 + $0xfc] sm:$0xff] %v194
                %v196 = vld [vmem:[%s150 + $0x318] sm:$0xff]
                %197 = vst [vmem:[%s151 + $0x108] sm:$0xff] %v196
                %v198 = vld [vmem:[%s150 + $0x33c] sm:$0xff]
                %199 = vst [vmem:[%s151 + $0x114] sm:$0xff] %v198
                %v200 = vld [vmem:[%s150 + $0x360] sm:$0xff]
                %201 = vst [vmem:[%s151 + $0x120] sm:$0xff] %v200
                %v202 = vld [vmem:[%s150 + $0x384] sm:$0xff]
                %203 = vst [vmem:[%s151 + $0x12c] sm:$0xff] %v202
                %v204 = vld [vmem:[%s150 + $0x3a8] sm:$0xff]
                %205 = vst [vmem:[%s151 + $0x138] sm:$0xff] %v204
                %v206 = vld [vmem:[%s150 + $0x3cc] sm:$0xff]
                %207 = vst [vmem:[%s151 + $0x144] sm:$0xff] %v206
              $region41: #{forward.10} parent=35 // loop_footer
                %s149 = sadd.s32 1, %s145
              $region42: #{forward.10} parent=35 // loop_footer_branch
                %144 = sbr.rel target = $region38
              $region43: #{forward.10} parent=35 // loop_exit
                _
              %s209 = ssub.s32 16, 1
              loop: start=0, step=1, limit=1
              $region44: #{forward.10} parent=35 // loop_pre_header
                _
              $region45: #{forward.10} parent=35 // loop_header
                %s211 = sphi 0, %s215
                %p212 = scmp.ge.s32.totalorder %s211, 1
                %s216 = sphi %s142, %s142
                %s217 = sphi %s143, %s143
              $region46: #{forward.10} parent=35 // loop_header_branch
                %214 = sbr.rel (%p212) target = $region50
              $region47: #{forward.10} parent=35 // loop_body
                %v218 = vld [vmem:[%s216] sm:%s209]
                %219 = vst [vmem:[%s217] sm:%s209] %v218
                %v220 = vld [vmem:[%s216 + $0x24] sm:%s209]
                %221 = vst [vmem:[%s217 + $0xc] sm:%s209] %v220
                %v222 = vld [vmem:[%s216 + $0x48] sm:%s209]
                %223 = vst [vmem:[%s217 + $0x18] sm:%s209] %v222
                %v224 = vld [vmem:[%s216 + $0x6c] sm:%s209]
                %225 = vst [vmem:[%s217 + $0x24] sm:%s209] %v224
                %v226 = vld [vmem:[%s216 + $0x90] sm:%s209]
                %227 = vst [vmem:[%s217 + $0x30] sm:%s209] %v226
                %v228 = vld [vmem:[%s216 + $0xb4] sm:%s209]
                %229 = vst [vmem:[%s217 + $0x3c] sm:%s209] %v228
                %v230 = vld [vmem:[%s216 + $0xd8] sm:%s209]
                %231 = vst [vmem:[%s217 + $0x48] sm:%s209] %v230
                %v232 = vld [vmem:[%s216 + $0xfc] sm:%s209]
                %233 = vst [vmem:[%s217 + $0x54] sm:%s209] %v232
                %v234 = vld [vmem:[%s216 + $0x120] sm:%s209]
                %235 = vst [vmem:[%s217 + $0x60] sm:%s209] %v234
                %v236 = vld [vmem:[%s216 + $0x144] sm:%s209]
                %237 = vst [vmem:[%s217 + $0x6c] sm:%s209] %v236
                %v238 = vld [vmem:[%s216 + $0x168] sm:%s209]
                %239 = vst [vmem:[%s217 + $0x78] sm:%s209] %v238
                %v240 = vld [vmem:[%s216 + $0x18c] sm:%s209]
                %241 = vst [vmem:[%s217 + $0x84] sm:%s209] %v240
                %v242 = vld [vmem:[%s216 + $0x1b0] sm:%s209]
                %243 = vst [vmem:[%s217 + $0x90] sm:%s209] %v242
                %v244 = vld [vmem:[%s216 + $0x1d4] sm:%s209]
                %245 = vst [vmem:[%s217 + $0x9c] sm:%s209] %v244
                %v246 = vld [vmem:[%s216 + $0x1f8] sm:%s209]
                %247 = vst [vmem:[%s217 + $0xa8] sm:%s209] %v246
                %v248 = vld [vmem:[%s216 + $0x21c] sm:%s209]
                %249 = vst [vmem:[%s217 + $0xb4] sm:%s209] %v248
                %v250 = vld [vmem:[%s216 + $0x240] sm:%s209]
                %251 = vst [vmem:[%s217 + $0xc0] sm:%s209] %v250
                %v252 = vld [vmem:[%s216 + $0x264] sm:%s209]
                %253 = vst [vmem:[%s217 + $0xcc] sm:%s209] %v252
                %v254 = vld [vmem:[%s216 + $0x288] sm:%s209]
                %255 = vst [vmem:[%s217 + $0xd8] sm:%s209] %v254
                %v256 = vld [vmem:[%s216 + $0x2ac] sm:%s209]
                %257 = vst [vmem:[%s217 + $0xe4] sm:%s209] %v256
                %v258 = vld [vmem:[%s216 + $0x2d0] sm:%s209]
                %259 = vst [vmem:[%s217 + $0xf0] sm:%s209] %v258
                %v260 = vld [vmem:[%s216 + $0x2f4] sm:%s209]
                %261 = vst [vmem:[%s217 + $0xfc] sm:%s209] %v260
                %v262 = vld [vmem:[%s216 + $0x318] sm:%s209]
                %263 = vst [vmem:[%s217 + $0x108] sm:%s209] %v262
                %v264 = vld [vmem:[%s216 + $0x33c] sm:%s209]
                %265 = vst [vmem:[%s217 + $0x114] sm:%s209] %v264
                %v266 = vld [vmem:[%s216 + $0x360] sm:%s209]
                %267 = vst [vmem:[%s217 + $0x120] sm:%s209] %v266
                %v268 = vld [vmem:[%s216 + $0x384] sm:%s209]
                %269 = vst [vmem:[%s217 + $0x12c] sm:%s209] %v268
                %v270 = vld [vmem:[%s216 + $0x3a8] sm:%s209]
                %271 = vst [vmem:[%s217 + $0x138] sm:%s209] %v270
                %v272 = vld [vmem:[%s216 + $0x3cc] sm:%s209]
                %273 = vst [vmem:[%s217 + $0x144] sm:%s209] %v272
              $region48: #{forward.10} parent=35 // loop_footer
                %s215 = sadd.s32 1, %s211
              $region49: #{forward.10} parent=35 // loop_footer_branch
                %210 = sbr.rel target = $region45
              $region50: #{forward.10} parent=35 // loop_exit
                _
            $region36: #{forward.10} parent=31 // pred_fallthru
              _
          $region32: #{forward.10} parent=27 // pred_fallthru
            _
          %274 = vnop
        $region28: #{forward.10} parent=23 // pred_fallthru
          _
      $region24: #{forward.10} parent=5 // pred_fallthru
        _
      %p275 = scmp.le.s32.totalorder 1, %s9
      %p276 = scmp.lt.s32.totalorder %s9, 4
      %p277 = pnand %p275, %p276
      %p278 = pneg %p277
      // Predicated region
      $region51: #{forward.10} parent=5 // pred_check
        _
      $region52: #{forward.10} parent=5 // pred_check_branch
        %280 = sbr.rel (%p277) target = $region54
      $region53: #{forward.10} parent=5 // pred_region
        %s281 = ssub.s32 %s9, 1
        %s282 = sand.u32 %s64, 1
        %s283 = sand.u32 %s64, 1
        %s284 = smul.addr %s283, 336
        %s285 = scalar_lea.vmem [#allocation2], %s284
        // Predicated region
        $region55: #{forward.10} parent=53 // pred_check
          %p286 = pneg %p77
        $region56: #{forward.10} parent=53 // pred_check_branch
          %288 = sbr.rel (%p286) target = $region58
        $region57: #{forward.10} parent=53 // pred_region
          _
        $region58: #{forward.10} parent=53 // pred_fallthru
          _
        %p289 = pneg %p30
        %p290 = pneg %p27
        %p291 = pneg %p51
        %p292 = pneg %p48
        %s293 = sand.u32 %s64, 1
        %s294 = sand.u32 %s64, 1
        %s295 = smul.addr %s294, 336
        %s296 = scalar_lea.vmem [#allocation2], %s295
        %p297 = pneg %p77
        %p298 = pneg %p74
        %p299 = pneg %p103
        %p300 = pneg %p100
        %s301 = smul.u32 3, %s14
        %p302 = scmp.lt.s32.totalorder %s301, 8
        %s303 = scalar_select %p302, %s301, 8
        %s304 = smul.addr %s303, 4
        %s305 = scalar_lea.vmem %s3, %s304
        %s306 = smul.u32 3, %s14
        %s307 = smul.u32 3, %s14
        %p308 = scmp.lt.s32.totalorder %s307, 8
        %s309 = scalar_select %p308, %s307, 8
        %s310 = smul.addr %s309, 4
        %s311 = scalar_lea.vmem %s3, %s310
        %s312 = smul.u32 3, %s14
        %p313 = scmp.ge.s32.totalorder %s14, 1
        %s314 = scalar_select %p313, 1, 0
        %p315 = scmp.ge.s32.totalorder %s14, 2
        %s316 = scalar_select %p315, 1, 0
        %s317 = sadd.s32 %s314, %s316
        %s318 = smul.u32 %s317, 2
        %s319 = smul.addr %s318, 8
        %s320 = scalar_lea.vmem %s0, %s319
        %v321 = vld [vmem:[%s320] sm:$0xff]
        %v322 = vld [vmem:[%s320 + $0x8] sm:$0xff]
        %v323 = vld [vmem:[%s285] sm:$0xff]
        %v324 = vld [vmem:[%s285 + $0x8] sm:$0xf]
        %v325 = vld [vmem:[%s285 + $0xc] sm:$0xff]
        %v326 = vld [vmem:[%s285 + $0x14] sm:$0xf]
        %v327 = vld [vmem:[%s285 + $0x18] sm:$0xff]
        %v328 = vld [vmem:[%s285 + $0x20] sm:$0xf]
        %v329 = vld [vmem:[%s285 + $0x24] sm:$0xff]
        %v330 = vld [vmem:[%s285 + $0x2c] sm:$0xf]
        %v331 = vld [vmem:[%s285 + $0x30] sm:$0xff]
        %v332 = vld [vmem:[%s285 + $0x38] sm:$0xf]
        %v333 = vld [vmem:[%s285 + $0x3c] sm:$0xff]
        %v334 = vld [vmem:[%s285 + $0x44] sm:$0xf]
        %v335 = vld [vmem:[%s285 + $0x48] sm:$0xff]
        %v336 = vld [vmem:[%s285 + $0x50] sm:$0xf]
        %v337 = vld [vmem:[%s285 + $0x54] sm:$0xff]
        %v338 = vld [vmem:[%s285 + $0x5c] sm:$0xf]
        %v339 = vld [vmem:[%s285 + $0x60] sm:$0xff]
        %v340 = vld [vmem:[%s285 + $0x68] sm:$0xf]
        %v341 = vld [vmem:[%s285 + $0x6c] sm:$0xff]
        %v342 = vld [vmem:[%s285 + $0x74] sm:$0xf]
        %v343 = vld [vmem:[%s285 + $0x78] sm:$0xff]
        %v344 = vld [vmem:[%s285 + $0x80] sm:$0xf]
        %v345 = vld [vmem:[%s285 + $0x84] sm:$0xff]
        %v346 = vld [vmem:[%s285 + $0x8c] sm:$0xf]
        %v347 = vld [vmem:[%s285 + $0x90] sm:$0xff]
        %v348 = vld [vmem:[%s285 + $0x98] sm:$0xf]
        %v349 = vld [vmem:[%s285 + $0x9c] sm:$0xff]
        %v350 = vld [vmem:[%s285 + $0xa4] sm:$0xf]
        %v351 = vld [vmem:[%s285 + $0xa8] sm:$0xff]
        %v352 = vld [vmem:[%s285 + $0xb0] sm:$0xf]
        %v353 = vld [vmem:[%s285 + $0xb4] sm:$0xff]
        %v354 = vld [vmem:[%s285 + $0xbc] sm:$0xf]
        %v355 = vld [vmem:[%s285 + $0xc0] sm:$0xff]
        %v356 = vld [vmem:[%s285 + $0xc8] sm:$0xf]
        %v357 = vld [vmem:[%s285 + $0xcc] sm:$0xff]
        %v358 = vld [vmem:[%s285 + $0xd4] sm:$0xf]
        %v359 = vld [vmem:[%s285 + $0xd8] sm:$0xff]
        %v360 = vld [vmem:[%s285 + $0xe0] sm:$0xf]
        %v361 = vld [vmem:[%s285 + $0xe4] sm:$0xff]
        %v362 = vld [vmem:[%s285 + $0xec] sm:$0xf]
        %v363 = vld [vmem:[%s285 + $0xf0] sm:$0xff]
        %v364 = vld [vmem:[%s285 + $0xf8] sm:$0xf]
        %v365 = vld [vmem:[%s285 + $0xfc] sm:$0xff]
        %v366 = vld [vmem:[%s285 + $0x104] sm:$0xf]
        %v367 = vld [vmem:[%s285 + $0x108] sm:$0xff]
        %v368 = vld [vmem:[%s285 + $0x110] sm:$0xf]
        %v369 = vld [vmem:[%s285 + $0x114] sm:$0xff]
        %v370 = vld [vmem:[%s285 + $0x11c] sm:$0xf]
        %v371 = vld [vmem:[%s285 + $0x120] sm:$0xff]
        %v372 = vld [vmem:[%s285 + $0x128] sm:$0xf]
        %v373 = vld [vmem:[%s285 + $0x12c] sm:$0xff]
        %v374 = vld [vmem:[%s285 + $0x134] sm:$0xf]
        %v375 = vld [vmem:[%s285 + $0x138] sm:$0xff]
        %v376 = vld [vmem:[%s285 + $0x140] sm:$0xf]
        %v377 = vld [vmem:[%s285 + $0x144] sm:$0xff]
        %v378 = vld [vmem:[%s285 + $0x14c] sm:$0xf]
        %v379 = vunpack.c.l.bf16 %v323
        %v380 = vunpack.c.h.bf16 %v323
        %v381 = vunpack.c.l.bf16 %v324
        %v382 = vunpack.c.l.bf16 %v325
        %v383 = vunpack.c.h.bf16 %v325
        %v384 = vunpack.c.l.bf16 %v326
        %v385 = vunpack.c.l.bf16 %v327
        %v386 = vunpack.c.h.bf16 %v327
        %v387 = vunpack.c.l.bf16 %v328
        %v388 = vunpack.c.l.bf16 %v329
        %v389 = vunpack.c.h.bf16 %v329
        %v390 = vunpack.c.l.bf16 %v330
        %v391 = vunpack.c.l.bf16 %v331
        %v392 = vunpack.c.h.bf16 %v331
        %v393 = vunpack.c.l.bf16 %v332
        %v394 = vunpack.c.l.bf16 %v333
        %v395 = vunpack.c.h.bf16 %v333
        %v396 = vunpack.c.l.bf16 %v334
        %v397 = vunpack.c.l.bf16 %v335
        %v398 = vunpack.c.h.bf16 %v335
        %v399 = vunpack.c.l.bf16 %v336
        %v400 = vunpack.c.l.bf16 %v337
        %v401 = vunpack.c.h.bf16 %v337
        %v402 = vunpack.c.l.bf16 %v338
        %v403 = vunpack.c.l.bf16 %v339
        %v404 = vunpack.c.h.bf16 %v339
        %v405 = vunpack.c.l.bf16 %v340
        %v406 = vunpack.c.l.bf16 %v341
        %v407 = vunpack.c.h.bf16 %v341
        %v408 = vunpack.c.l.bf16 %v342
        %v409 = vunpack.c.l.bf16 %v343
        %v410 = vunpack.c.h.bf16 %v343
        %v411 = vunpack.c.l.bf16 %v344
        %v412 = vunpack.c.l.bf16 %v345
        %v413 = vunpack.c.h.bf16 %v345
        %v414 = vunpack.c.l.bf16 %v346
        %v415 = vunpack.c.l.bf16 %v347
        %v416 = vunpack.c.h.bf16 %v347
        %v417 = vunpack.c.l.bf16 %v348
        %v418 = vunpack.c.l.bf16 %v349
        %v419 = vunpack.c.h.bf16 %v349
        %v420 = vunpack.c.l.bf16 %v350
        %v421 = vunpack.c.l.bf16 %v351
        %v422 = vunpack.c.h.bf16 %v351
        %v423 = vunpack.c.l.bf16 %v352
        %v424 = vunpack.c.l.bf16 %v353
        %v425 = vunpack.c.h.bf16 %v353
        %v426 = vunpack.c.l.bf16 %v354
        %v427 = vunpack.c.l.bf16 %v355
        %v428 = vunpack.c.h.bf16 %v355
        %v429 = vunpack.c.l.bf16 %v356
        %v430 = vunpack.c.l.bf16 %v357
        %v431 = vunpack.c.h.bf16 %v357
        %v432 = vunpack.c.l.bf16 %v358
        %v433 = vunpack.c.l.bf16 %v359
        %v434 = vunpack.c.h.bf16 %v359
        %v435 = vunpack.c.l.bf16 %v360
        %v436 = vunpack.c.l.bf16 %v361
        %v437 = vunpack.c.h.bf16 %v361
        %v438 = vunpack.c.l.bf16 %v362
        %v439 = vunpack.c.l.bf16 %v363
        %v440 = vunpack.c.h.bf16 %v363
        %v441 = vunpack.c.l.bf16 %v364
        %v442 = vunpack.c.l.bf16 %v365
        %v443 = vunpack.c.h.bf16 %v365
        %v444 = vunpack.c.l.bf16 %v366
        %v445 = vunpack.c.l.bf16 %v367
        %v446 = vunpack.c.h.bf16 %v367
        %v447 = vunpack.c.l.bf16 %v368
        %v448 = vunpack.c.l.bf16 %v369
        %v449 = vunpack.c.h.bf16 %v369
        %v450 = vunpack.c.l.bf16 %v370
        %v451 = vunpack.c.l.bf16 %v371
        %v452 = vunpack.c.h.bf16 %v371
        %v453 = vunpack.c.l.bf16 %v372
        %v454 = vunpack.c.l.bf16 %v373
        %v455 = vunpack.c.h.bf16 %v373
        %v456 = vunpack.c.l.bf16 %v374
        %v457 = vunpack.c.l.bf16 %v375
        %v458 = vunpack.c.h.bf16 %v375
        %v459 = vunpack.c.l.bf16 %v376
        %v460 = vunpack.c.l.bf16 %v377
        %v461 = vunpack.c.h.bf16 %v377
        %v462 = vunpack.c.l.bf16 %v378
        %s463 = smul.u32 %s317, 8
        %s464 = scalar_lea.vmem %s1, %s463
        %v465 = vld [vmem:[%s464] sm:$0xff]
        %467 = vset.pattern.permute.xlu0 0
        %468 = vperm.xlu0 %467, %v465
        %v469 = vpop.permute.xlu0 %468
        %vm471 = vcmask 785408
        %v473 = vsel %vm471, %v322, 0
        %475 = vmatpush.msra.mxu0 %v424
        %476 = vmatpush.msra.mxu0 %v421
        %477 = vmatpush.msra.mxu0 %v418
        %478 = vmatpush.msra.mxu0 %v415
        %479 = vmatpush.msra.mxu0 %v412
        %480 = vmatpush.msra.mxu0 %v409
        %481 = vmatpush.msra.mxu0 %v406
        %482 = vmatpush.msra.mxu0 %v403
        %483 = vmatpush.msra.mxu0 %v400
        %484 = vmatpush.msra.mxu0 %v397
        %485 = vmatpush.msra.mxu0 %v394
        %486 = vmatpush.msra.mxu0 %v391
        %487 = vmatpush.msra.mxu0 %v388
        %488 = vmatpush.msra.mxu0 %v385
        %489 = vmatpush.msra.mxu0 %v382
        %490 = vmatpush.msra.mxu0 %v379
        %491 = vmatmul.f32.gmra.mxu0 %v321
        %v492 = vpop.f32.mrf.mxu0
        %v493 = vadd.f32 %v469, %v492
        %494 = vdwg.mxu0
        %495 = vmatpush.msra.mxu0 0.0
        %496 = vmatpush.msra.mxu0 0.0
        %497 = vmatpush.msra.mxu0 0.0
        %498 = vmatpush.msra.mxu0 0.0
        %499 = vmatpush.msra.mxu0 %v460
        %500 = vmatpush.msra.mxu0 %v457
        %501 = vmatpush.msra.mxu0 %v454
        %502 = vmatpush.msra.mxu0 %v451
        %503 = vmatpush.msra.mxu0 %v448
        %504 = vmatpush.msra.mxu0 %v445
        %505 = vmatpush.msra.mxu0 %v442
        %506 = vmatpush.msra.mxu0 %v439
        %507 = vmatpush.msra.mxu0 %v436
        %508 = vmatpush.msra.mxu0 %v433
        %509 = vmatpush.msra.mxu0 %v430
        %510 = vmatpush.msra.mxu0 %v427
        %511 = vmatmul.f32.gmra.mxu0 %v473
        %v512 = vpop.f32.mrf.mxu0
        %v513 = vadd.f32 %v493, %v512
        %514 = vdwg.mxu0
        %515 = vmatpush.msra.mxu0 %v425
        %516 = vmatpush.msra.mxu0 %v422
        %517 = vmatpush.msra.mxu0 %v419
        %518 = vmatpush.msra.mxu0 %v416
        %519 = vmatpush.msra.mxu0 %v413
        %520 = vmatpush.msra.mxu0 %v410
        %521 = vmatpush.msra.mxu0 %v407
        %522 = vmatpush.msra.mxu0 %v404
        %523 = vmatpush.msra.mxu0 %v401
        %524 = vmatpush.msra.mxu0 %v398
        %525 = vmatpush.msra.mxu0 %v395
        %526 = vmatpush.msra.mxu0 %v392
        %527 = vmatpush.msra.mxu0 %v389
        %528 = vmatpush.msra.mxu0 %v386
        %529 = vmatpush.msra.mxu0 %v383
        %530 = vmatpush.msra.mxu0 %v380
        %531 = vmatmul.f32.gmra.mxu0 %v321
        %v532 = vpop.f32.mrf.mxu0
        %v533 = vadd.f32 %v469, %v532
        %534 = vdwg.mxu0
        %535 = vmatpush.msra.mxu0 0.0
        %536 = vmatpush.msra.mxu0 0.0
        %537 = vmatpush.msra.mxu0 0.0
        %538 = vmatpush.msra.mxu0 0.0
        %539 = vmatpush.msra.mxu0 %v461
        %540 = vmatpush.msra.mxu0 %v458
        %541 = vmatpush.msra.mxu0 %v455
        %542 = vmatpush.msra.mxu0 %v452
        %543 = vmatpush.msra.mxu0 %v449
        %544 = vmatpush.msra.mxu0 %v446
        %545 = vmatpush.msra.mxu0 %v443
        %546 = vmatpush.msra.mxu0 %v440
        %547 = vmatpush.msra.mxu0 %v437
        %548 = vmatpush.msra.mxu0 %v434
        %549 = vmatpush.msra.mxu0 %v431
        %550 = vmatpush.msra.mxu0 %v428
        %551 = vmatmul.f32.gmra.mxu0 %v473
        %v552 = vpop.f32.mrf.mxu0
        %v553 = vadd.f32 %v533, %v552
        %554 = vdwg.mxu0
        %555 = vmatpush.msra.mxu0 %v426
        %556 = vmatpush.msra.mxu0 %v423
        %557 = vmatpush.msra.mxu0 %v420
        %558 = vmatpush.msra.mxu0 %v417
        %559 = vmatpush.msra.mxu0 %v414
        %560 = vmatpush.msra.mxu0 %v411
        %561 = vmatpush.msra.mxu0 %v408
        %562 = vmatpush.msra.mxu0 %v405
        %563 = vmatpush.msra.mxu0 %v402
        %564 = vmatpush.msra.mxu0 %v399
        %565 = vmatpush.msra.mxu0 %v396
        %566 = vmatpush.msra.mxu0 %v393
        %567 = vmatpush.msra.mxu0 %v390
        %568 = vmatpush.msra.mxu0 %v387
        %569 = vmatpush.msra.mxu0 %v384
        %570 = vmatpush.msra.mxu0 %v381
        %571 = vmatmul.f32.gmra.mxu0 %v321
        %v572 = vpop.f32.mrf.mxu0
        %v573 = vadd.f32 %v469, %v572
        %574 = vdwg.mxu0
        %575 = vmatpush.msra.mxu0 0.0
        %576 = vmatpush.msra.mxu0 0.0
        %577 = vmatpush.msra.mxu0 0.0
        %578 = vmatpush.msra.mxu0 0.0
        %579 = vmatpush.msra.mxu0 %v462
        %580 = vmatpush.msra.mxu0 %v459
        %581 = vmatpush.msra.mxu0 %v456
        %582 = vmatpush.msra.mxu0 %v453
        %583 = vmatpush.msra.mxu0 %v450
        %584 = vmatpush.msra.mxu0 %v447
        %585 = vmatpush.msra.mxu0 %v444
        %586 = vmatpush.msra.mxu0 %v441
        %587 = vmatpush.msra.mxu0 %v438
        %588 = vmatpush.msra.mxu0 %v435
        %589 = vmatpush.msra.mxu0 %v432
        %590 = vmatpush.msra.mxu0 %v429
        %591 = vmatmul.f32.gmra.mxu0 %v473
        %v592 = vpop.f32.mrf.mxu0
        %v593 = vadd.f32 %v573, %v592
        %594 = vdwg.mxu0
        %vm595 = vcmp.ge.f32.partialorder %v513, 0.0
        %vm596 = vcmp.ge.f32.partialorder %v553, 0.0
        %vm597 = vcmp.ge.f32.partialorder %v593, 0.0
        %v598 = vmul.f32 %v513, 0.1
        %v599 = vmul.f32 %v553, 0.1
        %v600 = vmul.f32 %v593, 0.1
        %v601 = vsel %vm595, %v513, %v598
        %v602 = vsel %vm596, %v553, %v599
        %v603 = vsel %vm597, %v593, %v600
        %v604 = vpack.c.bf16 %v602, %v601
        %v605 = vpack.c.bf16 %v603, %v603
        %606 = vst [vmem:[%s311] sm:$0xff] %v604
        %607 = vst [vmem:[%s311 + $0x8] sm:$0xf] %v605
        %s608 = smul.u32 3, %s14
        %p609 = scmp.lt.s32.totalorder %s608, 8
        %s610 = scalar_select %p609, %s608, 8
        %s611 = smul.addr %s610, 4
        %s612 = scalar_lea.vmem %s3, %s611
        // Predicated region
        $region59: #{forward.10} parent=53 // pred_check
          %p613 = pneg %p100
        $region60: #{forward.10} parent=53 // pred_check_branch
          %615 = sbr.rel (%p613) target = $region62
        $region61: #{forward.10} parent=53 // pred_region
          %s616 = smul.u32 3, %s14
        $region62: #{forward.10} parent=53 // pred_fallthru
          _
      $region54: #{forward.10} parent=5 // pred_fallthru
        _
      %p617 = scmp.le.s32.totalorder 2, %s9
      // Predicated region
      $region63: #{forward.10} parent=5 // pred_check
        %p618 = pneg %p617
      $region64: #{forward.10} parent=5 // pred_check_branch
        %620 = sbr.rel (%p618) target = $region66
      $region65: #{forward.10} parent=5 // pred_region
        %s621 = ssub.s32 %s9, 2
        // Predicated region
        $region67: #{forward.10} parent=65 // pred_check
          %p622 = pneg %p106
        $region68: #{forward.10} parent=65 // pred_check_branch
          %624 = sbr.rel (%p622) target = $region70
        $region69: #{forward.10} parent=65 // pred_region
          %s625 = smul.u32 3, %s15
          %p626 = scmp.lt.s32.totalorder %s625, 8
          %s627 = scalar_select %p626, %s625, 8
          %s628 = smul.addr %s627, 4
          %s629 = scalar_lea.vmem %s3, %s628
        $region70: #{forward.10} parent=65 // pred_fallthru
          _
      $region66: #{forward.10} parent=5 // pred_fallthru
        _
    $region6: #{forward.10} parent=1 // loop_footer
      %s13 = sadd.s32 1, %s9
    $region7: #{forward.10} parent=1 // loop_footer_branch
      %8 = sbr.rel target = $region3
    $region8: #{forward.10} parent=1 // loop_exit
      _

// kernel: forward.12
$region0: #{forward.12}
  #allocation0 [shape = 'u32[]', space=smem, size = 0x4, offset = 0x4, fixed_abs, tag = 'smem constant byte address 0x4 - core index']
  #allocation1 [shape = 'u32[72,128]{1,0:T(1,128)}', space=vmem, size = 0x9000, scoped, tag = 'internal scratch']
  %s0 = inlined_call_operand.vmem [shape: f32[3,8,80], index: 0, kind: input, shape index: {}]
  %s1 = inlined_call_operand.vmem [shape: f32[3,8,1], index: 1, kind: input, shape index: {}]
  %s2 = inlined_call_operand.vmem [shape: bf16[80,1152], index: 2, kind: input, shape index: {}]
  %s3 = inlined_call_operand.vmem [shape: bf16[8,1152], index: 3, kind: output, shape index: {}]
  %s4 = sld [smem:[#allocation0]]
  $region71: #{forward.12} parent=0
    _
  %s6 = ssub.s32 1, %s4
  %s7 = scalar_select 0, %s6, %s4
  $region1: #{forward.12} parent=0
    #allocation2 [shape = 'u8[122880]{0}', space=vmem, size = 0x1e000, scoped, tag = 'input window, operand 2']
    loop: start=0, step=1, limit=5
    $region2: #{forward.12} parent=1 // loop_pre_header
      _
    $region3: #{forward.12} parent=1 // loop_header
      %s9 = sphi 0, %s13
      %p10 = scmp.ge.s32.totalorder %s9, 5
      %s17 = sphi 0, %s17
      %s19 = sphi 0, %s17
      %s20 = sphi 0, %s19
      %s34 = sphi 0, %s20
      %s38 = sphi 0, %s38
      %s40 = sphi 0, %s38
      %s41 = sphi 0, %s40
      %s55 = sphi 0, %s41
      %s61 = sphi 0, %s63
      %s64 = sphi 0, %s61
      %s65 = sphi 0, %s64
      %s81 = sphi 0, %s65
      %s87 = sphi 0, %s89
      %s90 = sphi 0, %s87
      %s91 = sphi 0, %s90
      %s107 = sphi 0, %s91
    $region4: #{forward.12} parent=1 // loop_header_branch
      %12 = sbr.rel (%p10) target = $region8
    $region5: #{forward.12} parent=1 // loop_body
      %s14 = ssub.s32 %s9, 1
      %s15 = ssub.s32 %s9, 2
      %s16 = sadd.s32 %s9, 1
      %s18 = sadd.s32 %s17, 1
      %p21 = scmp.eq.s32.totalorder %s9, 2
      %p22 = scmp.ne.s32.totalorder %s17, %s19
      %p23 = scmp.eq.s32.totalorder %s9, 0
      %p24 = por %p22, %p23
      %p25 = scmp.ne.s32.totalorder %s17, %s19
      %p26 = scmp.eq.s32.totalorder %s14, 2
      %p27 = por %p25, %p26
      %p28 = scmp.ne.s32.totalorder %s19, %s20
      %p29 = scmp.eq.s32.totalorder %s14, 0
      %p30 = por %p28, %p29
      %p31 = scmp.ne.s32.totalorder %s19, %s20
      %p32 = scmp.eq.s32.totalorder %s15, 2
      %p33 = por %p31, %p32
      %p35 = scmp.ne.s32.totalorder %s20, %s34
      %p36 = scmp.eq.s32.totalorder %s15, 0
      %p37 = por %p35, %p36
      %s39 = sadd.s32 %s38, 1
      %p42 = scmp.eq.s32.totalorder %s9, 2
      %p43 = scmp.ne.s32.totalorder %s38, %s40
      %p44 = scmp.eq.s32.totalorder %s9, 0
      %p45 = por %p43, %p44
      %p46 = scmp.ne.s32.totalorder %s38, %s40
      %p47 = scmp.eq.s32.totalorder %s14, 2
      %p48 = por %p46, %p47
      %p49 = scmp.ne.s32.totalorder %s40, %s41
      %p50 = scmp.eq.s32.totalorder %s14, 0
      %p51 = por %p49, %p50
      %p52 = scmp.ne.s32.totalorder %s40, %s41
      %p53 = scmp.eq.s32.totalorder %s15, 2
      %p54 = por %p52, %p53
      %p56 = scmp.ne.s32.totalorder %s41, %s55
      %p57 = scmp.eq.s32.totalorder %s15, 0
      %p58 = por %p56, %p57
      %s59 = ssub.s32 %s9, %s16
      %p60 = scmp.eq.s32.totalorder %s59, 0
      %s62 = sadd.s32 %s61, 1
      %s63 = scalar_select %p60, %s61, %s62
      %p66 = pneg %p60
      %p67 = scmp.eq.s32.totalorder %s9, 2
      %p68 = por %p66, %p67
      %p69 = scmp.ne.s32.totalorder %s61, %s64
      %p70 = scmp.eq.s32.totalorder %s9, 0
      %p71 = por %p69, %p70
      %p72 = scmp.ne.s32.totalorder %s61, %s64
      %p73 = scmp.eq.s32.totalorder %s14, 2
      %p74 = por %p72, %p73
      %p75 = scmp.ne.s32.totalorder %s64, %s65
      %p76 = scmp.eq.s32.totalorder %s14, 0
      %p77 = por %p75, %p76
      %p78 = scmp.ne.s32.totalorder %s64, %s65
      %p79 = scmp.eq.s32.totalorder %s15, 2
      %p80 = por %p78, %p79
      %p82 = scmp.ne.s32.totalorder %s65, %s81
      %p83 = scmp.eq.s32.totalorder %s15, 0
      %p84 = por %p82, %p83
      %s85 = ssub.s32 %s9, %s16
      %p86 = scmp.eq.s32.totalorder %s85, 0
      %s88 = sadd.s32 %s87, 1
      %s89 = scalar_select %p86, %s87, %s88
      %p92 = pneg %p86
      %p93 = scmp.eq.s32.totalorder %s9, 2
      %p94 = por %p92, %p93
      %p95 = scmp.ne.s32.totalorder %s87, %s90
      %p96 = scmp.eq.s32.totalorder %s9, 0
      %p97 = por %p95, %p96
      %p98 = scmp.ne.s32.totalorder %s87, %s90
      %p99 = scmp.eq.s32.totalorder %s14, 2
      %p100 = por %p98, %p99
      %p101 = scmp.ne.s32.totalorder %s90, %s91
      %p102 = scmp.eq.s32.totalorder %s14, 0
      %p103 = por %p101, %p102
      %p104 = scmp.ne.s32.totalorder %s90, %s91
      %p105 = scmp.eq.s32.totalorder %s15, 2
      %p106 = por %p104, %p105
      %p108 = scmp.ne.s32.totalorder %s91, %s107
      %p109 = scmp.eq.s32.totalorder %s15, 0
      %p110 = por %p108, %p109
      %p111 = scmp.le.s32.totalorder 1, %s9
      %p112 = scmp.lt.s32.totalorder %s9, 4
      %p113 = pnand %p111, %p112
      %p114 = pneg %p113
      // Predicated region
      $region9: #{forward.12} parent=5 // pred_check
        _
      $region10: #{forward.12} parent=5 // pred_check_branch
        %116 = sbr.rel (%p113) target = $region12
      $region11: #{forward.12} parent=5 // pred_region
        %s117 = ssub.s32 %s9, 1
        // Predicated region
        $region13: #{forward.12} parent=11 // pred_check
          %p118 = pneg %p30
        $region14: #{forward.12} parent=11 // pred_check_branch
          %120 = sbr.rel (%p118) target = $region16
        $region15: #{forward.12} parent=11 // pred_region
          _
        $region16: #{forward.12} parent=11 // pred_fallthru
          _
        // Predicated region
        $region17: #{forward.12} parent=11 // pred_check
          %p121 = pneg %p51
        $region18: #{forward.12} parent=11 // pred_check_branch
          %123 = sbr.rel (%p121) target = $region20
        $region19: #{forward.12} parent=11 // pred_region
          _
        $region20: #{forward.12} parent=11 // pred_fallthru
          _
      $region12: #{forward.12} parent=5 // pred_fallthru
        _
      %p124 = scmp.lt.s32.totalorder %s9, 3
      // Predicated region
      $region21: #{forward.12} parent=5 // pred_check
        %p125 = pneg %p124
      $region22: #{forward.12} parent=5 // pred_check_branch
        %127 = sbr.rel (%p125) target = $region24
      $region23: #{forward.12} parent=5 // pred_region
        // Predicated region
        $region25: #{forward.12} parent=23 // pred_check
          %p128 = pneg %p71
        $region26: #{forward.12} parent=23 // pred_check_branch
          %130 = sbr.rel (%p128) target = $region28
        $region27: #{forward.12} parent=23 // pred_region
          %s131 = sand.u32 %s61, 1
          %s132 = sand.u32 %s61, 1
          %s133 = smul.addr %s132, 120
          %s134 = scalar_lea.vmem [#allocation2], %s133
          %s135 = smul.u32 3, %s9
          %s136 = smul.addr %s135, 4
          %s137 = scalar_lea.vmem %s2, %s136
          // Predicated region
          $region29: #{forward.12} parent=27 // pred_check
            _
          $region30: #{forward.12} parent=27 // pred_check_branch
            %139 = sbr.rel (0) target = $region32
          $region31: #{forward.12} parent=27 // pred_region
            // Predicated region
            $region33: #{forward.12} parent=31 // pred_check
              _
            $region34: #{forward.12} parent=31 // pred_check_branch
              %141 = sbr.rel (0) target = $region36
            $region35: #{forward.12} parent=31 // pred_region
              %s142 = scalar_lea.vmem %s137, 8
              %s143 = scalar_lea.vmem %s134, 8 [#allocation2]
              loop: start=0, step=1, limit=1
              $region37: #{forward.12} parent=35 // loop_pre_header
                _
              $region38: #{forward.12} parent=35 // loop_header
                %s145 = sphi 0, %s149
                %p146 = scmp.ge.s32.totalorder %s145, 1
                %s150 = sphi %s137, %s137
                %s151 = sphi %s134, %s134
              $region39: #{forward.12} parent=35 // loop_header_branch
                %148 = sbr.rel (%p146) target = $region43
              $region40: #{forward.12} parent=35 // loop_body
                %v152 = vld [vmem:[%s150] sm:$0xff]
                %153 = vst [vmem:[%s151] sm:$0xff] %v152
                %v154 = vld [vmem:[%s150 + $0x24] sm:$0xff]
                %155 = vst [vmem:[%s151 + $0xc] sm:$0xff] %v154
                %v156 = vld [vmem:[%s150 + $0x48] sm:$0xff]
                %157 = vst [vmem:[%s151 + $0x18] sm:$0xff] %v156
                %v158 = vld [vmem:[%s150 + $0x6c] sm:$0xff]
                %159 = vst [vmem:[%s151 + $0x24] sm:$0xff] %v158
                %v160 = vld [vmem:[%s150 + $0x90] sm:$0xff]
                %161 = vst [vmem:[%s151 + $0x30] sm:$0xff] %v160
                %v162 = vld [vmem:[%s150 + $0xb4] sm:$0xff]
                %163 = vst [vmem:[%s151 + $0x3c] sm:$0xff] %v162
                %v164 = vld [vmem:[%s150 + $0xd8] sm:$0xff]
                %165 = vst [vmem:[%s151 + $0x48] sm:$0xff] %v164
                %v166 = vld [vmem:[%s150 + $0xfc] sm:$0xff]
                %167 = vst [vmem:[%s151 + $0x54] sm:$0xff] %v166
                %v168 = vld [vmem:[%s150 + $0x120] sm:$0xff]
                %169 = vst [vmem:[%s151 + $0x60] sm:$0xff] %v168
                %v170 = vld [vmem:[%s150 + $0x144] sm:$0xff]
                %171 = vst [vmem:[%s151 + $0x6c] sm:$0xff] %v170
              $region41: #{forward.12} parent=35 // loop_footer
                %s149 = sadd.s32 1, %s145
              $region42: #{forward.12} parent=35 // loop_footer_branch
                %144 = sbr.rel target = $region38
              $region43: #{forward.12} parent=35 // loop_exit
                _
              %s173 = ssub.s32 16, 1
              loop: start=0, step=1, limit=1
              $region44: #{forward.12} parent=35 // loop_pre_header
                _
              $region45: #{forward.12} parent=35 // loop_header
                %s175 = sphi 0, %s179
                %p176 = scmp.ge.s32.totalorder %s175, 1
                %s180 = sphi %s142, %s142
                %s181 = sphi %s143, %s143
              $region46: #{forward.12} parent=35 // loop_header_branch
                %178 = sbr.rel (%p176) target = $region50
              $region47: #{forward.12} parent=35 // loop_body
                %v182 = vld [vmem:[%s180] sm:%s173]
                %183 = vst [vmem:[%s181] sm:%s173] %v182
                %v184 = vld [vmem:[%s180 + $0x24] sm:%s173]
                %185 = vst [vmem:[%s181 + $0xc] sm:%s173] %v184
                %v186 = vld [vmem:[%s180 + $0x48] sm:%s173]
                %187 = vst [vmem:[%s181 + $0x18] sm:%s173] %v186
                %v188 = vld [vmem:[%s180 + $0x6c] sm:%s173]
                %189 = vst [vmem:[%s181 + $0x24] sm:%s173] %v188
                %v190 = vld [vmem:[%s180 + $0x90] sm:%s173]
                %191 = vst [vmem:[%s181 + $0x30] sm:%s173] %v190
                %v192 = vld [vmem:[%s180 + $0xb4] sm:%s173]
                %193 = vst [vmem:[%s181 + $0x3c] sm:%s173] %v192
                %v194 = vld [vmem:[%s180 + $0xd8] sm:%s173]
                %195 = vst [vmem:[%s181 + $0x48] sm:%s173] %v194
                %v196 = vld [vmem:[%s180 + $0xfc] sm:%s173]
                %197 = vst [vmem:[%s181 + $0x54] sm:%s173] %v196
                %v198 = vld [vmem:[%s180 + $0x120] sm:%s173]
                %199 = vst [vmem:[%s181 + $0x60] sm:%s173] %v198
                %v200 = vld [vmem:[%s180 + $0x144] sm:%s173]
                %201 = vst [vmem:[%s181 + $0x6c] sm:%s173] %v200
              $region48: #{forward.12} parent=35 // loop_footer
                %s179 = sadd.s32 1, %s175
              $region49: #{forward.12} parent=35 // loop_footer_branch
                %174 = sbr.rel target = $region45
              $region50: #{forward.12} parent=35 // loop_exit
                _
            $region36: #{forward.12} parent=31 // pred_fallthru
              _
          $region32: #{forward.12} parent=27 // pred_fallthru
            _
          %202 = vnop
        $region28: #{forward.12} parent=23 // pred_fallthru
          _
      $region24: #{forward.12} parent=5 // pred_fallthru
        _
      %p203 = scmp.le.s32.totalorder 1, %s9
      %p204 = scmp.lt.s32.totalorder %s9, 4
      %p205 = pnand %p203, %p204
      %p206 = pneg %p205
      // Predicated region
      $region51: #{forward.12} parent=5 // pred_check
        _
      $region52: #{forward.12} parent=5 // pred_check_branch
        %208 = sbr.rel (%p205) target = $region54
      $region53: #{forward.12} parent=5 // pred_region
        %s209 = ssub.s32 %s9, 1
        %s210 = sand.u32 %s64, 1
        %s211 = sand.u32 %s64, 1
        %s212 = smul.addr %s211, 120
        %s213 = scalar_lea.vmem [#allocation2], %s212
        // Predicated region
        $region55: #{forward.12} parent=53 // pred_check
          %p214 = pneg %p77
        $region56: #{forward.12} parent=53 // pred_check_branch
          %216 = sbr.rel (%p214) target = $region58
        $region57: #{forward.12} parent=53 // pred_region
          _
        $region58: #{forward.12} parent=53 // pred_fallthru
          _
        %p217 = pneg %p30
        %p218 = pneg %p27
        %p219 = pneg %p51
        %p220 = pneg %p48
        %s221 = sand.u32 %s64, 1
        %s222 = sand.u32 %s64, 1
        %s223 = smul.addr %s222, 120
        %s224 = scalar_lea.vmem [#allocation2], %s223
        %p225 = pneg %p77
        %p226 = pneg %p74
        %p227 = pneg %p103
        %p228 = pneg %p100
        %s229 = smul.u32 3, %s14
        %p230 = scmp.lt.s32.totalorder %s229, 8
        %s231 = scalar_select %p230, %s229, 8
        %s232 = smul.addr %s231, 4
        %s233 = scalar_lea.vmem %s3, %s232
        %s234 = smul.u32 3, %s14
        %s235 = smul.u32 3, %s14
        %p236 = scmp.lt.s32.totalorder %s235, 8
        %s237 = scalar_select %p236, %s235, 8
        %s238 = smul.addr %s237, 4
        %s239 = scalar_lea.vmem %s3, %s238
        %s240 = smul.u32 3, %s14
        %p241 = scmp.ge.s32.totalorder %s14, 1
        %s242 = scalar_select %p241, 1, 0
        %p243 = scmp.ge.s32.totalorder %s14, 2
        %s244 = scalar_select %p243, 1, 0
        %s245 = sadd.s32 %s242, %s244
        %s246 = smul.u32 %s245, 8
        %s247 = scalar_lea.vmem %s0, %s246
        %v248 = vld [vmem:[%s247] sm:$0xff]
        %v249 = vld [vmem:[%s213] sm:$0xff]
        %v250 = vld [vmem:[%s213 + $0x8] sm:$0xf]
        %v251 = vld [vmem:[%s213 + $0xc] sm:$0xff]
        %v252 = vld [vmem:[%s213 + $0x14] sm:$0xf]
        %v253 = vld [vmem:[%s213 + $0x18] sm:$0xff]
        %v254 = vld [vmem:[%s213 + $0x20] sm:$0xf]
        %v255 = vld [vmem:[%s213 + $0x24] sm:$0xff]
        %v256 = vld [vmem:[%s213 + $0x2c] sm:$0xf]
        %v257 = vld [vmem:[%s213 + $0x30] sm:$0xff]
        %v258 = vld [vmem:[%s213 + $0x38] sm:$0xf]
        %v259 = vld [vmem:[%s213 + $0x3c] sm:$0xff]
        %v260 = vld [vmem:[%s213 + $0x44] sm:$0xf]
        %v261 = vld [vmem:[%s213 + $0x48] sm:$0xff]
        %v262 = vld [vmem:[%s213 + $0x50] sm:$0xf]
        %v263 = vld [vmem:[%s213 + $0x54] sm:$0xff]
        %v264 = vld [vmem:[%s213 + $0x5c] sm:$0xf]
        %v265 = vld [vmem:[%s213 + $0x60] sm:$0xff]
        %v266 = vld [vmem:[%s213 + $0x68] sm:$0xf]
        %v267 = vld [vmem:[%s213 + $0x6c] sm:$0xff]
        %v268 = vld [vmem:[%s213 + $0x74] sm:$0xf]
        %v269 = vunpack.c.l.bf16 %v249
        %v270 = vunpack.c.h.bf16 %v249
        %v271 = vunpack.c.l.bf16 %v250
        %v272 = vunpack.c.l.bf16 %v251
        %v273 = vunpack.c.h.bf16 %v251
        %v274 = vunpack.c.l.bf16 %v252
        %v275 = vunpack.c.l.bf16 %v253
        %v276 = vunpack.c.h.bf16 %v253
        %v277 = vunpack.c.l.bf16 %v254
        %v278 = vunpack.c.l.bf16 %v255
        %v279 = vunpack.c.h.bf16 %v255
        %v280 = vunpack.c.l.bf16 %v256
        %v281 = vunpack.c.l.bf16 %v257
        %v282 = vunpack.c.h.bf16 %v257
        %v283 = vunpack.c.l.bf16 %v258
        %v284 = vunpack.c.l.bf16 %v259
        %v285 = vunpack.c.h.bf16 %v259
        %v286 = vunpack.c.l.bf16 %v260
        %v287 = vunpack.c.l.bf16 %v261
        %v288 = vunpack.c.h.bf16 %v261
        %v289 = vunpack.c.l.bf16 %v262
        %v290 = vunpack.c.l.bf16 %v263
        %v291 = vunpack.c.h.bf16 %v263
        %v292 = vunpack.c.l.bf16 %v264
        %v293 = vunpack.c.l.bf16 %v265
        %v294 = vunpack.c.h.bf16 %v265
        %v295 = vunpack.c.l.bf16 %v266
        %v296 = vunpack.c.l.bf16 %v267
        %v297 = vunpack.c.h.bf16 %v267
        %v298 = vunpack.c.l.bf16 %v268
        %s299 = scalar_lea.vmem %s1, %s246
        %v300 = vld [vmem:[%s299] sm:$0xff]
        %302 = vset.pattern.permute.xlu0 0
        %303 = vperm.xlu0 %302, %v300
        %v304 = vpop.permute.xlu0 %303
        %vm306 = vcmask 654336
        %v308 = vsel %vm306, %v248, 0
        %310 = vmatpush.msra.mxu0 0.0
        %311 = vmatpush.msra.mxu0 0.0
        %312 = vmatpush.msra.mxu0 0.0
        %313 = vmatpush.msra.mxu0 0.0
        %314 = vmatpush.msra.mxu0 0.0
        %315 = vmatpush.msra.mxu0 0.0
        %316 = vmatpush.msra.mxu0 %v296
        %317 = vmatpush.msra.mxu0 %v293
        %318 = vmatpush.msra.mxu0 %v290
        %319 = vmatpush.msra.mxu0 %v287
        %320 = vmatpush.msra.mxu0 %v284
        %321 = vmatpush.msra.mxu0 %v281
        %322 = vmatpush.msra.mxu0 %v278
        %323 = vmatpush.msra.mxu0 %v275
        %324 = vmatpush.msra.mxu0 %v272
        %325 = vmatpush.msra.mxu0 %v269
        %326 = vmatmul.f32.gmra.mxu0 %v308
        %v327 = vpop.f32.mrf.mxu0
        %v328 = vadd.f32 %v304, %v327
        %329 = vdwg.mxu0
        %330 = vmatpush.msra.mxu0 0.0
        %331 = vmatpush.msra.mxu0 0.0
        %332 = vmatpush.msra.mxu0 0.0
        %333 = vmatpush.msra.mxu0 0.0
        %334 = vmatpush.msra.mxu0 0.0
        %335 = vmatpush.msra.mxu0 0.0
        %336 = vmatpush.msra.mxu0 %v297
        %337 = vmatpush.msra.mxu0 %v294
        %338 = vmatpush.msra.mxu0 %v291
        %339 = vmatpush.msra.mxu0 %v288
        %340 = vmatpush.msra.mxu0 %v285
        %341 = vmatpush.msra.mxu0 %v282
        %342 = vmatpush.msra.mxu0 %v279
        %343 = vmatpush.msra.mxu0 %v276
        %344 = vmatpush.msra.mxu0 %v273
        %345 = vmatpush.msra.mxu0 %v270
        %346 = vmatmul.f32.gmra.mxu0 %v308
        %v347 = vpop.f32.mrf.mxu0
        %v348 = vadd.f32 %v304, %v347
        %349 = vdwg.mxu0
        %350 = vmatpush.msra.mxu0 0.0
        %351 = vmatpush.msra.mxu0 0.0
        %352 = vmatpush.msra.mxu0 0.0
        %353 = vmatpush.msra.mxu0 0.0
        %354 = vmatpush.msra.mxu0 0.0
        %355 = vmatpush.msra.mxu0 0.0
        %356 = vmatpush.msra.mxu0 %v298
        %357 = vmatpush.msra.mxu0 %v295
        %358 = vmatpush.msra.mxu0 %v292
        %359 = vmatpush.msra.mxu0 %v289
        %360 = vmatpush.msra.mxu0 %v286
        %361 = vmatpush.msra.mxu0 %v283
        %362 = vmatpush.msra.mxu0 %v280
        %363 = vmatpush.msra.mxu0 %v277
        %364 = vmatpush.msra.mxu0 %v274
        %365 = vmatpush.msra.mxu0 %v271
        %366 = vmatmul.f32.gmra.mxu0 %v308
        %v367 = vpop.f32.mrf.mxu0
        %v368 = vadd.f32 %v304, %v367
        %369 = vdwg.mxu0
        %vm370 = vcmp.ge.f32.partialorder %v328, 0.0
        %vm371 = vcmp.ge.f32.partialorder %v348, 0.0
        %vm372 = vcmp.ge.f32.partialorder %v368, 0.0
        %v373 = vmul.f32 %v328, 0.1
        %v374 = vmul.f32 %v348, 0.1
        %v375 = vmul.f32 %v368, 0.1
        %v376 = vsel %vm370, %v328, %v373
        %v377 = vsel %vm371, %v348, %v374
        %v378 = vsel %vm372, %v368, %v375
        %v379 = vpack.c.bf16 %v377, %v376
        %v380 = vpack.c.bf16 %v378, %v378
        %381 = vst [vmem:[%s239] sm:$0xff] %v379
        %382 = vst [vmem:[%s239 + $0x8] sm:$0xf] %v380
        %s383 = smul.u32 3, %s14
        %p384 = scmp.lt.s32.totalorder %s383, 8
        %s385 = scalar_select %p384, %s383, 8
        %s386 = smul.addr %s385, 4
        %s387 = scalar_lea.vmem %s3, %s386
        // Predicated region
        $region59: #{forward.12} parent=53 // pred_check
          %p388 = pneg %p100
        $region60: #{forward.12} parent=53 // pred_check_branch
          %390 = sbr.rel (%p388) target = $region62
        $region61: #{forward.12} parent=53 // pred_region
          %s391 = smul.u32 3, %s14
        $region62: #{forward.12} parent=53 // pred_fallthru
          _
      $region54: #{forward.12} parent=5 // pred_fallthru
        _
      %p392 = scmp.le.s32.totalorder 2, %s9
      // Predicated region
      $region63: #{forward.12} parent=5 // pred_check
        %p393 = pneg %p392
      $region64: #{forward.12} parent=5 // pred_check_branch
        %395 = sbr.rel (%p393) target = $region66
      $region65: #{forward.12} parent=5 // pred_region
        %s396 = ssub.s32 %s9, 2
        // Predicated region
        $region67: #{forward.12} parent=65 // pred_check
          %p397 = pneg %p106
        $region68: #{forward.12} parent=65 // pred_check_branch
          %399 = sbr.rel (%p397) target = $region70
        $region69: #{forward.12} parent=65 // pred_region
          %s400 = smul.u32 3, %s15
          %p401 = scmp.lt.s32.totalorder %s400, 8
          %s402 = scalar_select %p401, %s400, 8
          %s403 = smul.addr %s402, 4
          %s404 = scalar_lea.vmem %s3, %s403
        $region70: #{forward.12} parent=65 // pred_fallthru
          _
      $region66: #{forward.12} parent=5 // pred_fallthru
        _
    $region6: #{forward.12} parent=1 // loop_footer
      %s13 = sadd.s32 1, %s9
    $region7: #{forward.12} parent=1 // loop_footer_branch
      %8 = sbr.rel target = $region3
    $region8: #{forward.12} parent=1 // loop_exit
      _

// kernel: forward.13
$region0: #{forward.13}
  #allocation0 [shape = 'u32[]', space=smem, size = 0x4, offset = 0x4, fixed_abs, tag = 'smem constant byte address 0x4 - core index']
  #allocation1 [shape = 'u32[72,128]{1,0:T(1,128)}', space=vmem, size = 0x9000, scoped, tag = 'internal scratch']
  %s0 = inlined_call_operand.vmem [shape: f32[3,8,80], index: 0, kind: input, shape index: {}]
  %s1 = inlined_call_operand.vmem [shape: f32[3,8,1], index: 1, kind: input, shape index: {}]
  %s2 = inlined_call_operand.vmem [shape: bf16[80,1152], index: 2, kind: input, shape index: {}]
  %s3 = inlined_call_operand.vmem [shape: f32[8,1152], index: 3, kind: output, shape index: {}]
  %s4 = sld [smem:[#allocation0]]
  $region71: #{forward.13} parent=0
    _
  %s6 = ssub.s32 1, %s4
  %s7 = scalar_select 0, %s6, %s4
  $region1: #{forward.13} parent=0
    #allocation2 [shape = 'u8[122880]{0}', space=vmem, size = 0x1e000, scoped, tag = 'input window, operand 2']
    loop: start=0, step=1, limit=5
    $region2: #{forward.13} parent=1 // loop_pre_header
      _
    $region3: #{forward.13} parent=1 // loop_header
      %s9 = sphi 0, %s13
      %p10 = scmp.ge.s32.totalorder %s9, 5
      %s17 = sphi 0, %s17
      %s19 = sphi 0, %s17
      %s20 = sphi 0, %s19
      %s34 = sphi 0, %s20
      %s38 = sphi 0, %s38
      %s40 = sphi 0, %s38
      %s41 = sphi 0, %s40
      %s55 = sphi 0, %s41
      %s61 = sphi 0, %s63
      %s64 = sphi 0, %s61
      %s65 = sphi 0, %s64
      %s81 = sphi 0, %s65
      %s87 = sphi 0, %s89
      %s90 = sphi 0, %s87
      %s91 = sphi 0, %s90
      %s107 = sphi 0, %s91
    $region4: #{forward.13} parent=1 // loop_header_branch
      %12 = sbr.rel (%p10) target = $region8
    $region5: #{forward.13} parent=1 // loop_body
      %s14 = ssub.s32 %s9, 1
      %s15 = ssub.s32 %s9, 2
      %s16 = sadd.s32 %s9, 1
      %s18 = sadd.s32 %s17, 1
      %p21 = scmp.eq.s32.totalorder %s9, 2
      %p22 = scmp.ne.s32.totalorder %s17, %s19
      %p23 = scmp.eq.s32.totalorder %s9, 0
      %p24 = por %p22, %p23
      %p25 = scmp.ne.s32.totalorder %s17, %s19
      %p26 = scmp.eq.s32.totalorder %s14, 2
      %p27 = por %p25, %p26
      %p28 = scmp.ne.s32.totalorder %s19, %s20
      %p29 = scmp.eq.s32.totalorder %s14, 0
      %p30 = por %p28, %p29
      %p31 = scmp.ne.s32.totalorder %s19, %s20
      %p32 = scmp.eq.s32.totalorder %s15, 2
      %p33 = por %p31, %p32
      %p35 = scmp.ne.s32.totalorder %s20, %s34
      %p36 = scmp.eq.s32.totalorder %s15, 0
      %p37 = por %p35, %p36
      %s39 = sadd.s32 %s38, 1
      %p42 = scmp.eq.s32.totalorder %s9, 2
      %p43 = scmp.ne.s32.totalorder %s38, %s40
      %p44 = scmp.eq.s32.totalorder %s9, 0
      %p45 = por %p43, %p44
      %p46 = scmp.ne.s32.totalorder %s38, %s40
      %p47 = scmp.eq.s32.totalorder %s14, 2
      %p48 = por %p46, %p47
      %p49 = scmp.ne.s32.totalorder %s40, %s41
      %p50 = scmp.eq.s32.totalorder %s14, 0
      %p51 = por %p49, %p50
      %p52 = scmp.ne.s32.totalorder %s40, %s41
      %p53 = scmp.eq.s32.totalorder %s15, 2
      %p54 = por %p52, %p53
      %p56 = scmp.ne.s32.totalorder %s41, %s55
      %p57 = scmp.eq.s32.totalorder %s15, 0
      %p58 = por %p56, %p57
      %s59 = ssub.s32 %s9, %s16
      %p60 = scmp.eq.s32.totalorder %s59, 0
      %s62 = sadd.s32 %s61, 1
      %s63 = scalar_select %p60, %s61, %s62
      %p66 = pneg %p60
      %p67 = scmp.eq.s32.totalorder %s9, 2
      %p68 = por %p66, %p67
      %p69 = scmp.ne.s32.totalorder %s61, %s64
      %p70 = scmp.eq.s32.totalorder %s9, 0
      %p71 = por %p69, %p70
      %p72 = scmp.ne.s32.totalorder %s61, %s64
      %p73 = scmp.eq.s32.totalorder %s14, 2
      %p74 = por %p72, %p73
      %p75 = scmp.ne.s32.totalorder %s64, %s65
      %p76 = scmp.eq.s32.totalorder %s14, 0
      %p77 = por %p75, %p76
      %p78 = scmp.ne.s32.totalorder %s64, %s65
      %p79 = scmp.eq.s32.totalorder %s15, 2
      %p80 = por %p78, %p79
      %p82 = scmp.ne.s32.totalorder %s65, %s81
      %p83 = scmp.eq.s32.totalorder %s15, 0
      %p84 = por %p82, %p83
      %s85 = ssub.s32 %s9, %s16
      %p86 = scmp.eq.s32.totalorder %s85, 0
      %s88 = sadd.s32 %s87, 1
      %s89 = scalar_select %p86, %s87, %s88
      %p92 = pneg %p86
      %p93 = scmp.eq.s32.totalorder %s9, 2
      %p94 = por %p92, %p93
      %p95 = scmp.ne.s32.totalorder %s87, %s90
      %p96 = scmp.eq.s32.totalorder %s9, 0
      %p97 = por %p95, %p96
      %p98 = scmp.ne.s32.totalorder %s87, %s90
      %p99 = scmp.eq.s32.totalorder %s14, 2
      %p100 = por %p98, %p99
      %p101 = scmp.ne.s32.totalorder %s90, %s91
      %p102 = scmp.eq.s32.totalorder %s14, 0
      %p103 = por %p101, %p102
      %p104 = scmp.ne.s32.totalorder %s90, %s91
      %p105 = scmp.eq.s32.totalorder %s15, 2
      %p106 = por %p104, %p105
      %p108 = scmp.ne.s32.totalorder %s91, %s107
      %p109 = scmp.eq.s32.totalorder %s15, 0
      %p110 = por %p108, %p109
      %p111 = scmp.le.s32.totalorder 1, %s9
      %p112 = scmp.lt.s32.totalorder %s9, 4
      %p113 = pnand %p111, %p112
      %p114 = pneg %p113
      // Predicated region
      $region9: #{forward.13} parent=5 // pred_check
        _
      $region10: #{forward.13} parent=5 // pred_check_branch
        %116 = sbr.rel (%p113) target = $region12
      $region11: #{forward.13} parent=5 // pred_region
        %s117 = ssub.s32 %s9, 1
        // Predicated region
        $region13: #{forward.13} parent=11 // pred_check
          %p118 = pneg %p30
        $region14: #{forward.13} parent=11 // pred_check_branch
          %120 = sbr.rel (%p118) target = $region16
        $region15: #{forward.13} parent=11 // pred_region
          _
        $region16: #{forward.13} parent=11 // pred_fallthru
          _
        // Predicated region
        $region17: #{forward.13} parent=11 // pred_check
          %p121 = pneg %p51
        $region18: #{forward.13} parent=11 // pred_check_branch
          %123 = sbr.rel (%p121) target = $region20
        $region19: #{forward.13} parent=11 // pred_region
          _
        $region20: #{forward.13} parent=11 // pred_fallthru
          _
      $region12: #{forward.13} parent=5 // pred_fallthru
        _
      %p124 = scmp.lt.s32.totalorder %s9, 3
      // Predicated region
      $region21: #{forward.13} parent=5 // pred_check
        %p125 = pneg %p124
      $region22: #{forward.13} parent=5 // pred_check_branch
        %127 = sbr.rel (%p125) target = $region24
      $region23: #{forward.13} parent=5 // pred_region
        // Predicated region
        $region25: #{forward.13} parent=23 // pred_check
          %p128 = pneg %p71
        $region26: #{forward.13} parent=23 // pred_check_branch
          %130 = sbr.rel (%p128) target = $region28
        $region27: #{forward.13} parent=23 // pred_region
          %s131 = sand.u32 %s61, 1
          %s132 = sand.u32 %s61, 1
          %s133 = smul.addr %s132, 120
          %s134 = scalar_lea.vmem [#allocation2], %s133
          %s135 = smul.u32 3, %s9
          %s136 = smul.addr %s135, 4
          %s137 = scalar_lea.vmem %s2, %s136
          // Predicated region
          $region29: #{forward.13} parent=27 // pred_check
            _
          $region30: #{forward.13} parent=27 // pred_check_branch
            %139 = sbr.rel (0) target = $region32
          $region31: #{forward.13} parent=27 // pred_region
            // Predicated region
            $region33: #{forward.13} parent=31 // pred_check
              _
            $region34: #{forward.13} parent=31 // pred_check_branch
              %141 = sbr.rel (0) target = $region36
            $region35: #{forward.13} parent=31 // pred_region
              %s142 = scalar_lea.vmem %s137, 8
              %s143 = scalar_lea.vmem %s134, 8 [#allocation2]
              loop: start=0, step=1, limit=1
              $region37: #{forward.13} parent=35 // loop_pre_header
                _
              $region38: #{forward.13} parent=35 // loop_header
                %s145 = sphi 0, %s149
                %p146 = scmp.ge.s32.totalorder %s145, 1
                %s150 = sphi %s137, %s137
                %s151 = sphi %s134, %s134
              $region39: #{forward.13} parent=35 // loop_header_branch
                %148 = sbr.rel (%p146) target = $region43
              $region40: #{forward.13} parent=35 // loop_body
                %v152 = vld [vmem:[%s150] sm:$0xff]
                %153 = vst [vmem:[%s151] sm:$0xff] %v152
                %v154 = vld [vmem:[%s150 + $0x24] sm:$0xff]
                %155 = vst [vmem:[%s151 + $0xc] sm:$0xff] %v154
                %v156 = vld [vmem:[%s150 + $0x48] sm:$0xff]
                %157 = vst [vmem:[%s151 + $0x18] sm:$0xff] %v156
                %v158 = vld [vmem:[%s150 + $0x6c] sm:$0xff]
                %159 = vst [vmem:[%s151 + $0x24] sm:$0xff] %v158
                %v160 = vld [vmem:[%s150 + $0x90] sm:$0xff]
                %161 = vst [vmem:[%s151 + $0x30] sm:$0xff] %v160
                %v162 = vld [vmem:[%s150 + $0xb4] sm:$0xff]
                %163 = vst [vmem:[%s151 + $0x3c] sm:$0xff] %v162
                %v164 = vld [vmem:[%s150 + $0xd8] sm:$0xff]
                %165 = vst [vmem:[%s151 + $0x48] sm:$0xff] %v164
                %v166 = vld [vmem:[%s150 + $0xfc] sm:$0xff]
                %167 = vst [vmem:[%s151 + $0x54] sm:$0xff] %v166
                %v168 = vld [vmem:[%s150 + $0x120] sm:$0xff]
                %169 = vst [vmem:[%s151 + $0x60] sm:$0xff] %v168
                %v170 = vld [vmem:[%s150 + $0x144] sm:$0xff]
                %171 = vst [vmem:[%s151 + $0x6c] sm:$0xff] %v170
              $region41: #{forward.13} parent=35 // loop_footer
                %s149 = sadd.s32 1, %s145
              $region42: #{forward.13} parent=35 // loop_footer_branch
                %144 = sbr.rel target = $region38
              $region43: #{forward.13} parent=35 // loop_exit
                _
              %s173 = ssub.s32 16, 1
              loop: start=0, step=1, limit=1
              $region44: #{forward.13} parent=35 // loop_pre_header
                _
              $region45: #{forward.13} parent=35 // loop_header
                %s175 = sphi 0, %s179
                %p176 = scmp.ge.s32.totalorder %s175, 1
                %s180 = sphi %s142, %s142
                %s181 = sphi %s143, %s143
              $region46: #{forward.13} parent=35 // loop_header_branch
                %178 = sbr.rel (%p176) target = $region50
              $region47: #{forward.13} parent=35 // loop_body
                %v182 = vld [vmem:[%s180] sm:%s173]
                %183 = vst [vmem:[%s181] sm:%s173] %v182
                %v184 = vld [vmem:[%s180 + $0x24] sm:%s173]
                %185 = vst [vmem:[%s181 + $0xc] sm:%s173] %v184
                %v186 = vld [vmem:[%s180 + $0x48] sm:%s173]
                %187 = vst [vmem:[%s181 + $0x18] sm:%s173] %v186
                %v188 = vld [vmem:[%s180 + $0x6c] sm:%s173]
                %189 = vst [vmem:[%s181 + $0x24] sm:%s173] %v188
                %v190 = vld [vmem:[%s180 + $0x90] sm:%s173]
                %191 = vst [vmem:[%s181 + $0x30] sm:%s173] %v190
                %v192 = vld [vmem:[%s180 + $0xb4] sm:%s173]
                %193 = vst [vmem:[%s181 + $0x3c] sm:%s173] %v192
                %v194 = vld [vmem:[%s180 + $0xd8] sm:%s173]
                %195 = vst [vmem:[%s181 + $0x48] sm:%s173] %v194
                %v196 = vld [vmem:[%s180 + $0xfc] sm:%s173]
                %197 = vst [vmem:[%s181 + $0x54] sm:%s173] %v196
                %v198 = vld [vmem:[%s180 + $0x120] sm:%s173]
                %199 = vst [vmem:[%s181 + $0x60] sm:%s173] %v198
                %v200 = vld [vmem:[%s180 + $0x144] sm:%s173]
                %201 = vst [vmem:[%s181 + $0x6c] sm:%s173] %v200
              $region48: #{forward.13} parent=35 // loop_footer
                %s179 = sadd.s32 1, %s175
              $region49: #{forward.13} parent=35 // loop_footer_branch
                %174 = sbr.rel target = $region45
              $region50: #{forward.13} parent=35 // loop_exit
                _
            $region36: #{forward.13} parent=31 // pred_fallthru
              _
          $region32: #{forward.13} parent=27 // pred_fallthru
            _
          %202 = vnop
        $region28: #{forward.13} parent=23 // pred_fallthru
          _
      $region24: #{forward.13} parent=5 // pred_fallthru
        _
      %p203 = scmp.le.s32.totalorder 1, %s9
      %p204 = scmp.lt.s32.totalorder %s9, 4
      %p205 = pnand %p203, %p204
      %p206 = pneg %p205
      // Predicated region
      $region51: #{forward.13} parent=5 // pred_check
        _
      $region52: #{forward.13} parent=5 // pred_check_branch
        %208 = sbr.rel (%p205) target = $region54
      $region53: #{forward.13} parent=5 // pred_region
        %s209 = ssub.s32 %s9, 1
        %s210 = sand.u32 %s64, 1
        %s211 = sand.u32 %s64, 1
        %s212 = smul.addr %s211, 120
        %s213 = scalar_lea.vmem [#allocation2], %s212
        // Predicated region
        $region55: #{forward.13} parent=53 // pred_check
          %p214 = pneg %p77
        $region56: #{forward.13} parent=53 // pred_check_branch
          %216 = sbr.rel (%p214) target = $region58
        $region57: #{forward.13} parent=53 // pred_region
          _
        $region58: #{forward.13} parent=53 // pred_fallthru
          _
        %p217 = pneg %p30
        %p218 = pneg %p27
        %p219 = pneg %p51
        %p220 = pneg %p48
        %s221 = sand.u32 %s64, 1
        %s222 = sand.u32 %s64, 1
        %s223 = smul.addr %s222, 120
        %s224 = scalar_lea.vmem [#allocation2], %s223
        %p225 = pneg %p77
        %p226 = pneg %p74
        %p227 = pneg %p103
        %p228 = pneg %p100
        %s229 = smul.u32 3, %s14
        %p230 = scmp.lt.s32.totalorder %s229, 8
        %s231 = scalar_select %p230, %s229, 8
        %s232 = smul.addr %s231, 8
        %s233 = scalar_lea.vmem %s3, %s232
        %s234 = smul.u32 3, %s14
        %s235 = smul.u32 3, %s14
        %p236 = scmp.lt.s32.totalorder %s235, 8
        %s237 = scalar_select %p236, %s235, 8
        %s238 = smul.addr %s237, 8
        %s239 = scalar_lea.vmem %s3, %s238
        %s240 = smul.u32 3, %s14
        %p241 = scmp.ge.s32.totalorder %s14, 1
        %s242 = scalar_select %p241, 1, 0
        %p243 = scmp.ge.s32.totalorder %s14, 2
        %s244 = scalar_select %p243, 1, 0
        %s245 = sadd.s32 %s242, %s244
        %s246 = smul.u32 %s245, 8
        %s247 = scalar_lea.vmem %s0, %s246
        %v248 = vld [vmem:[%s247] sm:$0xff]
        %v249 = vld [vmem:[%s213] sm:$0xff]
        %v250 = vld [vmem:[%s213 + $0x8] sm:$0xf]
        %v251 = vld [vmem:[%s213 + $0xc] sm:$0xff]
        %v252 = vld [vmem:[%s213 + $0x14] sm:$0xf]
        %v253 = vld [vmem:[%s213 + $0x18] sm:$0xff]
        %v254 = vld [vmem:[%s213 + $0x20] sm:$0xf]
        %v255 = vld [vmem:[%s213 + $0x24] sm:$0xff]
        %v256 = vld [vmem:[%s213 + $0x2c] sm:$0xf]
        %v257 = vld [vmem:[%s213 + $0x30] sm:$0xff]
        %v258 = vld [vmem:[%s213 + $0x38] sm:$0xf]
        %v259 = vld [vmem:[%s213 + $0x3c] sm:$0xff]
        %v260 = vld [vmem:[%s213 + $0x44] sm:$0xf]
        %v261 = vld [vmem:[%s213 + $0x48] sm:$0xff]
        %v262 = vld [vmem:[%s213 + $0x50] sm:$0xf]
        %v263 = vld [vmem:[%s213 + $0x54] sm:$0xff]
        %v264 = vld [vmem:[%s213 + $0x5c] sm:$0xf]
        %v265 = vld [vmem:[%s213 + $0x60] sm:$0xff]
        %v266 = vld [vmem:[%s213 + $0x68] sm:$0xf]
        %v267 = vld [vmem:[%s213 + $0x6c] sm:$0xff]
        %v268 = vld [vmem:[%s213 + $0x74] sm:$0xf]
        %v269 = vunpack.c.l.bf16 %v249
        %v270 = vunpack.c.h.bf16 %v249
        %v271 = vunpack.c.l.bf16 %v250
        %v272 = vunpack.c.l.bf16 %v251
        %v273 = vunpack.c.h.bf16 %v251
        %v274 = vunpack.c.l.bf16 %v252
        %v275 = vunpack.c.l.bf16 %v253
        %v276 = vunpack.c.h.bf16 %v253
        %v277 = vunpack.c.l.bf16 %v254
        %v278 = vunpack.c.l.bf16 %v255
        %v279 = vunpack.c.h.bf16 %v255
        %v280 = vunpack.c.l.bf16 %v256
        %v281 = vunpack.c.l.bf16 %v257
        %v282 = vunpack.c.h.bf16 %v257
        %v283 = vunpack.c.l.bf16 %v258
        %v284 = vunpack.c.l.bf16 %v259
        %v285 = vunpack.c.h.bf16 %v259
        %v286 = vunpack.c.l.bf16 %v260
        %v287 = vunpack.c.l.bf16 %v261
        %v288 = vunpack.c.h.bf16 %v261
        %v289 = vunpack.c.l.bf16 %v262
        %v290 = vunpack.c.l.bf16 %v263
        %v291 = vunpack.c.h.bf16 %v263
        %v292 = vunpack.c.l.bf16 %v264
        %v293 = vunpack.c.l.bf16 %v265
        %v294 = vunpack.c.h.bf16 %v265
        %v295 = vunpack.c.l.bf16 %v266
        %v296 = vunpack.c.l.bf16 %v267
        %v297 = vunpack.c.h.bf16 %v267
        %v298 = vunpack.c.l.bf16 %v268
        %s299 = scalar_lea.vmem %s1, %s246
        %v300 = vld [vmem:[%s299] sm:$0xff]
        %302 = vset.pattern.permute.xlu0 0
        %303 = vperm.xlu0 %302, %v300
        %v304 = vpop.permute.xlu0 %303
        %vm306 = vcmask 654336
        %v308 = vsel %vm306, %v248, 0
        %310 = vmatpush.msra.mxu0 0.0
        %311 = vmatpush.msra.mxu0 0.0
        %312 = vmatpush.msra.mxu0 0.0
        %313 = vmatpush.msra.mxu0 0.0
        %314 = vmatpush.msra.mxu0 0.0
        %315 = vmatpush.msra.mxu0 0.0
        %316 = vmatpush.msra.mxu0 %v296
        %317 = vmatpush.msra.mxu0 %v293
        %318 = vmatpush.msra.mxu0 %v290
        %319 = vmatpush.msra.mxu0 %v287
        %320 = vmatpush.msra.mxu0 %v284
        %321 = vmatpush.msra.mxu0 %v281
        %322 = vmatpush.msra.mxu0 %v278
        %323 = vmatpush.msra.mxu0 %v275
        %324 = vmatpush.msra.mxu0 %v272
        %325 = vmatpush.msra.mxu0 %v269
        %326 = vmatmul.f32.gmra.mxu0 %v308
        %v327 = vpop.f32.mrf.mxu0
        %v328 = vadd.f32 %v304, %v327
        %329 = vdwg.mxu0
        %330 = vmatpush.msra.mxu0 0.0
        %331 = vmatpush.msra.mxu0 0.0
        %332 = vmatpush.msra.mxu0 0.0
        %333 = vmatpush.msra.mxu0 0.0
        %334 = vmatpush.msra.mxu0 0.0
        %335 = vmatpush.msra.mxu0 0.0
        %336 = vmatpush.msra.mxu0 %v297
        %337 = vmatpush.msra.mxu0 %v294
        %338 = vmatpush.msra.mxu0 %v291
        %339 = vmatpush.msra.mxu0 %v288
        %340 = vmatpush.msra.mxu0 %v285
        %341 = vmatpush.msra.mxu0 %v282
        %342 = vmatpush.msra.mxu0 %v279
        %343 = vmatpush.msra.mxu0 %v276
        %344 = vmatpush.msra.mxu0 %v273
        %345 = vmatpush.msra.mxu0 %v270
        %346 = vmatmul.f32.gmra.mxu0 %v308
        %v347 = vpop.f32.mrf.mxu0
        %v348 = vadd.f32 %v304, %v347
        %349 = vdwg.mxu0
        %350 = vmatpush.msra.mxu0 0.0
        %351 = vmatpush.msra.mxu0 0.0
        %352 = vmatpush.msra.mxu0 0.0
        %353 = vmatpush.msra.mxu0 0.0
        %354 = vmatpush.msra.mxu0 0.0
        %355 = vmatpush.msra.mxu0 0.0
        %356 = vmatpush.msra.mxu0 %v298
        %357 = vmatpush.msra.mxu0 %v295
        %358 = vmatpush.msra.mxu0 %v292
        %359 = vmatpush.msra.mxu0 %v289
        %360 = vmatpush.msra.mxu0 %v286
        %361 = vmatpush.msra.mxu0 %v283
        %362 = vmatpush.msra.mxu0 %v280
        %363 = vmatpush.msra.mxu0 %v277
        %364 = vmatpush.msra.mxu0 %v274
        %365 = vmatpush.msra.mxu0 %v271
        %366 = vmatmul.f32.gmra.mxu0 %v308
        %v367 = vpop.f32.mrf.mxu0
        %v368 = vadd.f32 %v304, %v367
        %369 = vdwg.mxu0
        %370 = vst [vmem:[%s239] sm:$0xff] %v328
        %371 = vst [vmem:[%s239 + $0x8] sm:$0xff] %v348
        %372 = vst [vmem:[%s239 + $0x10] sm:$0xff] %v368
        %s373 = smul.u32 3, %s14
        %p374 = scmp.lt.s32.totalorder %s373, 8
        %s375 = scalar_select %p374, %s373, 8
        %s376 = smul.addr %s375, 8
        %s377 = scalar_lea.vmem %s3, %s376
        // Predicated region
        $region59: #{forward.13} parent=53 // pred_check
          %p378 = pneg %p100
        $region60: #{forward.13} parent=53 // pred_check_branch
          %380 = sbr.rel (%p378) target = $region62
        $region61: #{forward.13} parent=53 // pred_region
          %s381 = smul.u32 3, %s14
        $region62: #{forward.13} parent=53 // pred_fallthru
          _
      $region54: #{forward.13} parent=5 // pred_fallthru
        _
      %p382 = scmp.le.s32.totalorder 2, %s9
      // Predicated region
      $region63: #{forward.13} parent=5 // pred_check
        %p383 = pneg %p382
      $region64: #{forward.13} parent=5 // pred_check_branch
        %385 = sbr.rel (%p383) target = $region66
      $region65: #{forward.13} parent=5 // pred_region
        %s386 = ssub.s32 %s9, 2
        // Predicated region
        $region67: #{forward.13} parent=65 // pred_check
          %p387 = pneg %p106
        $region68: #{forward.13} parent=65 // pred_check_branch
          %389 = sbr.rel (%p387) target = $region70
        $region69: #{forward.13} parent=65 // pred_region
          %s390 = smul.u32 3, %s15
          %p391 = scmp.lt.s32.totalorder %s390, 8
          %s392 = scalar_select %p391, %s390, 8
          %s393 = smul.addr %s392, 8
          %s394 = scalar_lea.vmem %s3, %s393
        $region70: #{forward.13} parent=65 // pred_fallthru
          _
      $region66: #{forward.13} parent=5 // pred_fallthru
        _
    $region6: #{forward.13} parent=1 // loop_footer
      %s13 = sadd.s32 1, %s9
    $region7: #{forward.13} parent=1 // loop_footer_branch
      %8 = sbr.rel target = $region3
    $region8: #{forward.13} parent=1 // loop_exit
      _

</llo_original>
